<compile_context>
chip_gen: v7x
topology: tpu7x:2x2x1
jax: 0.10.0
libtpu: 0.0.40
codegen_flags: <defaults>
</compile_context>

<pallas_src>
import math
from functools import partial

import jax
import jax.numpy as jnp
from jax import lax
from jax.experimental import pallas as pl
from jax.experimental.pallas import tpu as pltpu


# ---------------------------------------------------------------------------
# Fused per-batch kernel
#   one grid step == one batch element's (S, C) token slab, kept in VMEM for
#   the whole forward pass (initial linear + all transformer layers).
# ---------------------------------------------------------------------------
def _block_kernel(x_ref, lin_w_ref, lin_b_ref,
                  wqkv_ref, bqkv_ref, wout_ref, bout_ref, wffn_ref,
                  o_ref, *, num_heads, num_layers, scale):
    x = x_ref[0]                                    # (S, C)
    C = x.shape[-1]
    Dh = C // num_heads

    # p + self.linear(p)
    flat = x + jnp.dot(x, lin_w_ref[...],
                       preferred_element_type=jnp.float32) + lin_b_ref[...]

    for li in range(num_layers):                    # static unroll (num_layers small)
        # folded (q|k|v Linear -> MHA in_proj): single (S,C) @ (C,3C) matmul
        qkv = jnp.dot(flat, wqkv_ref[li],
                      preferred_element_type=jnp.float32) + bqkv_ref[li]
        q = qkv[:, 0 * C:1 * C]
        k = qkv[:, 1 * C:2 * C]
        v = qkv[:, 2 * C:3 * C]

        # per-head scaled-dot-product attention on column slices (no host
        # transposes); output re-assembled lane-dense as (S, C)
        heads = []
        for h in range(num_heads):
            qh = q[:, h * Dh:(h + 1) * Dh]
            kh = k[:, h * Dh:(h + 1) * Dh]
            vh = v[:, h * Dh:(h + 1) * Dh]
            s = lax.dot_general(qh, kh, (((1,), (1,)), ((), ())),
                                preferred_element_type=jnp.float32) * scale
            m = jnp.max(s, axis=-1, keepdims=True)
            p = jnp.exp(s - m)
            denom = jnp.sum(p, axis=-1, keepdims=True)
            p = p * pl.reciprocal(denom, approx=True)   # EUP, not VPU divide
            heads.append(jnp.dot(p, vh, preferred_element_type=jnp.float32))
        attn = jnp.concatenate(heads, axis=-1)      # (S, C)

        # out_proj + residual (residual fused: data already in vregs)
        attn = jnp.dot(attn, wout_ref[li],
                       preferred_element_type=jnp.float32) + bout_ref[li]
        flat = attn + flat

        # folded fc2(fc1(x)) + x
        flat = jnp.dot(flat, wffn_ref[li],
                       preferred_element_type=jnp.float32) + flat

    o_ref[0] = flat


# ---------------------------------------------------------------------------
# Parameter construction (deterministic, synthetic) — mirrors the torch module
# ---------------------------------------------------------------------------
def make_params(key, c, num_layers):
    scale = 0.05

    def nrm(k, shape):
        return jax.random.normal(k, shape, jnp.float32) * scale

    keys = jax.random.split(key, 2 + num_layers)
    params = {
        # nn.Linear(c2, c2): weight stored pre-transposed as (in, out)
        "lin_w": nrm(keys[0], (c, c)),
        "lin_b": nrm(keys[1], (1, c)),
        "layers": [],
    }
    for li in range(num_layers):
        lk = jax.random.split(keys[2 + li], 12)
        layer = {
            # q/k/v Linear(c, c, bias=False), stored (in, out)
            "wq": nrm(lk[0], (c, c)),
            "wk": nrm(lk[1], (c, c)),
            "wv": nrm(lk[2], (c, c)),
            # nn.MultiheadAttention in_proj (weights + biases) and out_proj
            "in_wq": nrm(lk[3], (c, c)),
            "in_wk": nrm(lk[4], (c, c)),
            "in_wv": nrm(lk[5], (c, c)),
            "in_bq": nrm(lk[6], (1, c)),
            "in_bk": nrm(lk[7], (1, c)),
            "in_bv": nrm(lk[8], (1, c)),
            "out_w": nrm(lk[9], (c, c)),
            "out_b": nrm(lk[10], (1, c)),
            # fc1 / fc2 Linear(c, c, bias=False)
            "fc1": nrm(lk[11], (c, c)),
            "fc2": nrm(jax.random.fold_in(lk[11], 1), (c, c)),
        }
        params["layers"].append(layer)
    return params


# ---------------------------------------------------------------------------
# Forward pass: fold weights (one-time, tiny), then one fused pallas_call
# ---------------------------------------------------------------------------
def transformer_block_forward(x, params, num_heads):
    b, c, w, h = x.shape
    S = w * h
    Dh = c // num_heads
    attn_scale = 1.0 / math.sqrt(Dh)
    L = len(params["layers"])

    # --- algebraic weight folding (exact; only fp rounding order changes) ---
    w_qkv = jnp.stack([jnp.concatenate([ly["wq"] @ ly["in_wq"],
                                        ly["wk"] @ ly["in_wk"],
                                        ly["wv"] @ ly["in_wv"]], axis=1)
                       for ly in params["layers"]])                    # (L, C, 3C)
    b_qkv = jnp.stack([jnp.concatenate([ly["in_bq"], ly["in_bk"], ly["in_bv"]],
                                       axis=1)
                       for ly in params["layers"]])                    # (L, 1, 3C)
    w_out = jnp.stack([ly["out_w"] for ly in params["layers"]])        # (L, C, C)
    b_out = jnp.stack([ly["out_b"] for ly in params["layers"]])        # (L, 1, C)
    w_ffn = jnp.stack([ly["fc1"] @ ly["fc2"] for ly in params["layers"]])  # (L, C, C)

    # x.flatten(2).permute(2,0,1) is (S, B, C); batch is an independent axis
    # everywhere, so we process per-batch (S, C) slabs: (B, C, W, H)->(B, S, C)
    p = x.reshape(b, c, S).transpose(0, 2, 1).astype(jnp.float32)

    out = pl.pallas_call(
        partial(_block_kernel, num_heads=num_heads, num_layers=L,
                scale=attn_scale),
        out_shape=jax.ShapeDtypeStruct((b, S, c), jnp.float32),
        grid=(b,),
        in_specs=[
            pl.BlockSpec((1, S, c), lambda i: (i, 0, 0)),        # tokens (per batch)
            pl.BlockSpec((c, c), lambda i: (0, 0)),              # lin_w
            pl.BlockSpec((1, c), lambda i: (0, 0)),              # lin_b
            pl.BlockSpec((L, c, 3 * c), lambda i: (0, 0, 0)),    # folded QKV weight
            pl.BlockSpec((L, 1, 3 * c), lambda i: (0, 0, 0)),    # folded QKV bias
            pl.BlockSpec((L, c, c), lambda i: (0, 0, 0)),        # out_proj weight
            pl.BlockSpec((L, 1, c), lambda i: (0, 0, 0)),        # out_proj bias
            pl.BlockSpec((L, c, c), lambda i: (0, 0, 0)),        # folded FFN weight
        ],
        out_specs=pl.BlockSpec((1, S, c), lambda i: (i, 0, 0)),
        compiler_params=pltpu.CompilerParams(
            dimension_semantics=("parallel",)),
    )(p, params["lin_w"], params["lin_b"], w_qkv, b_qkv, w_out, b_out, w_ffn)

    # (B, S, C) -> (B, C, S) -> (B, C, W, H)   (matches torch permute/reshape)
    return out.transpose(0, 2, 1).reshape(b, c, w, h)


# ---------------------------------------------------------------------------
# Pure-JAX reference (unfolded, mirrors the torch module op-for-op)
# ---------------------------------------------------------------------------
def reference_forward(x, params, num_heads):
    b, c, w, h = x.shape
    S = w * h
    Dh = c // num_heads
    scale = 1.0 / math.sqrt(Dh)
    p = x.reshape(b, c, S).transpose(2, 0, 1).astype(jnp.float32)   # (S, B, C)
    flat = p.reshape(S * b, c)
    flat = flat + flat @ params["lin_w"] + params["lin_b"]

    def to_heads(t):
        return t.reshape(S, b, num_heads, Dh).transpose(1, 2, 0, 3)  # (B, H, S, Dh)

    for ly in params["layers"]:
        q = flat @ ly["wq"]
        k = flat @ ly["wk"]
        v = flat @ ly["wv"]
        Q = q @ ly["in_wq"] + ly["in_bq"]
        K = k @ ly["in_wk"] + ly["in_bk"]
        V = v @ ly["in_wv"] + ly["in_bv"]
        Qh, Kh, Vh = to_heads(Q), to_heads(K), to_heads(V)
        s = jnp.einsum("bhqd,bhkd->bhqk", Qh, Kh) * scale
        pm = jax.nn.softmax(s, axis=-1)
        o = jnp.einsum("bhqk,bhkd->bhqd", pm, Vh)
        o = o.transpose(2, 0, 1, 3).reshape(S * b, c)
        attn = o @ ly["out_w"] + ly["out_b"]
        flat = attn + flat
        flat = (flat @ ly["fc1"]) @ ly["fc2"] + flat
    return flat.reshape(S, b, c).transpose(1, 2, 0).reshape(b, c, w, h)


# ---------------------------------------------------------------------------
if __name__ == "__main__":
    key = jax.random.PRNGKey(0)
    B, C1, C2, W, H = 2, 32, 32, 4, 4   # c1 == c2 -> no Conv branch
    NUM_HEADS, NUM_LAYERS = 4, 2

    kx, kp = jax.random.split(key)
    x = jax.random.normal(kx, (B, C1, W, H), jnp.float32)
    params = make_params(kp, C2, NUM_LAYERS)

    out = transformer_block_forward(x, params, NUM_HEADS)
    out = jax.block_until_ready(out)

    assert out.shape == (B, C2, W, H), out.shape
    assert jnp.isfinite(out).all()

    ref = reference_forward(x, params, NUM_HEADS)
    max_err = float(jnp.max(jnp.abs(out - ref)))
    assert jnp.allclose(out, ref, atol=2e-2, rtol=2e-2), max_err

    print("KERNEL_OK")
</pallas_src>

<mosaic_0001>
module attributes {stable_mosaic.version = 11 : i64} {
  func.func @_block_kernel(%arg0: i32, %arg1: memref<1x16x32xf32, #tpu.memory_space<vmem>>, %arg2: memref<32x32xf32, #tpu.memory_space<vmem>>, %arg3: memref<1x32xf32, #tpu.memory_space<vmem>>, %arg4: memref<2x32x96xf32, #tpu.memory_space<vmem>>, %arg5: memref<2x1x96xf32, #tpu.memory_space<vmem>>, %arg6: memref<2x32x32xf32, #tpu.memory_space<vmem>>, %arg7: memref<2x1x32xf32, #tpu.memory_space<vmem>>, %arg8: memref<2x32x32xf32, #tpu.memory_space<vmem>>, %arg9: memref<1x16x32xf32, #tpu.memory_space<vmem>>) attributes {dimension_semantics = [#tpu.dimension_semantics<parallel>], iteration_bounds = array<i64: 2>, scalar_prefetch = 0 : i64, scratch_operands = 0 : i64, tpu.core_type = #tpu.core_type<tc>, window_params = [{transform_indices = @transform_0, window_bounds = array<i64: 1, 16, 32>}, {pipeline_mode = #tpu.pipeline_mode<synchronous>, transform_indices = @transform_1, window_bounds = array<i64: 32, 32>}, {pipeline_mode = #tpu.pipeline_mode<synchronous>, transform_indices = @transform_2, window_bounds = array<i64: 1, 32>}, {pipeline_mode = #tpu.pipeline_mode<synchronous>, transform_indices = @transform_3, window_bounds = array<i64: 2, 32, 96>}, {pipeline_mode = #tpu.pipeline_mode<synchronous>, transform_indices = @transform_4, window_bounds = array<i64: 2, 1, 96>}, {pipeline_mode = #tpu.pipeline_mode<synchronous>, transform_indices = @transform_5, window_bounds = array<i64: 2, 32, 32>}, {pipeline_mode = #tpu.pipeline_mode<synchronous>, transform_indices = @transform_6, window_bounds = array<i64: 2, 1, 32>}, {pipeline_mode = #tpu.pipeline_mode<synchronous>, transform_indices = @transform_7, window_bounds = array<i64: 2, 32, 32>}, {transform_indices = @transform_8, window_bounds = array<i64: 1, 16, 32>}]} {
    %c0 = arith.constant 0 : index
    %c0_0 = arith.constant 0 : index
    %c0_1 = arith.constant 0 : index
    %0 = vector.load %arg1[%c0, %c0_0, %c0_1] : memref<1x16x32xf32, #tpu.memory_space<vmem>>, vector<1x16x32xf32>
    %1 = vector.shape_cast %0 : vector<1x16x32xf32> to vector<16x32xf32>
    %c0_2 = arith.constant 0 : index
    %c0_3 = arith.constant 0 : index
    %2 = vector.load %arg2[%c0_2, %c0_3] : memref<32x32xf32, #tpu.memory_space<vmem>>, vector<32x32xf32>
    %cst = arith.constant dense<0.000000e+00> : vector<16x32xf32>
    %3 = tpu.matmul %1, %2, %cst {dimension_numbers = #tpu.dot_dimension_numbers<[1], [0], [0], [1], [0, 0, 1, 1], [], []>} : vector<16x32xf32>, vector<32x32xf32>, vector<16x32xf32> -> vector<16x32xf32>
    %4 = arith.addf %1, %3 : vector<16x32xf32>
    %c0_4 = arith.constant 0 : index
    %c0_5 = arith.constant 0 : index
    %5 = vector.load %arg3[%c0_4, %c0_5] : memref<1x32xf32, #tpu.memory_space<vmem>>, vector<1x32xf32>
    %6 = vector.broadcast %5 : vector<1x32xf32> to vector<16x32xf32>
    %7 = arith.addf %4, %6 : vector<16x32xf32>
    %c0_6 = arith.constant 0 : index
    %c0_7 = arith.constant 0 : index
    %c0_8 = arith.constant 0 : index
    %8 = vector.load %arg4[%c0_6, %c0_7, %c0_8] : memref<2x32x96xf32, #tpu.memory_space<vmem>>, vector<1x32x96xf32>
    %9 = vector.shape_cast %8 : vector<1x32x96xf32> to vector<32x96xf32>
    %cst_9 = arith.constant dense<0.000000e+00> : vector<16x96xf32>
    %10 = tpu.matmul %7, %9, %cst_9 {dimension_numbers = #tpu.dot_dimension_numbers<[1], [0], [0], [1], [0, 0, 1, 1], [], []>} : vector<16x32xf32>, vector<32x96xf32>, vector<16x96xf32> -> vector<16x96xf32>
    %c0_10 = arith.constant 0 : index
    %c0_11 = arith.constant 0 : index
    %c0_12 = arith.constant 0 : index
    %11 = vector.load %arg5[%c0_10, %c0_11, %c0_12] : memref<2x1x96xf32, #tpu.memory_space<vmem>>, vector<1x1x96xf32>
    %12 = vector.shape_cast %11 : vector<1x1x96xf32> to vector<1x96xf32>
    %13 = vector.broadcast %12 : vector<1x96xf32> to vector<16x96xf32>
    %14 = arith.addf %10, %13 : vector<16x96xf32>
    %15 = vector.extract_strided_slice %14 {offsets = [0, 0], sizes = [16, 32], strides = [1, 1]} : vector<16x96xf32> to vector<16x32xf32>
    %16 = vector.extract_strided_slice %14 {offsets = [0, 32], sizes = [16, 32], strides = [1, 1]} : vector<16x96xf32> to vector<16x32xf32>
    %17 = vector.extract_strided_slice %14 {offsets = [0, 64], sizes = [16, 32], strides = [1, 1]} : vector<16x96xf32> to vector<16x32xf32>
    %18 = vector.extract_strided_slice %15 {offsets = [0, 0], sizes = [16, 8], strides = [1, 1]} : vector<16x32xf32> to vector<16x8xf32>
    %19 = vector.extract_strided_slice %16 {offsets = [0, 0], sizes = [16, 8], strides = [1, 1]} : vector<16x32xf32> to vector<16x8xf32>
    %20 = vector.extract_strided_slice %17 {offsets = [0, 0], sizes = [16, 8], strides = [1, 1]} : vector<16x32xf32> to vector<16x8xf32>
    %cst_13 = arith.constant dense<0.000000e+00> : vector<16x16xf32>
    %21 = tpu.matmul %18, %19, %cst_13 {dimension_numbers = #tpu.dot_dimension_numbers<[1], [1], [0], [0], [0, 0, 1, 0], [], []>} : vector<16x8xf32>, vector<16x8xf32>, vector<16x16xf32> -> vector<16x16xf32>
    %cst_14 = arith.constant 0.353553385 : f32
    %22 = vector.broadcast %cst_14 : f32 to vector<16x16xf32>
    %23 = arith.mulf %21, %22 : vector<16x16xf32>
    %cst_15 = arith.constant dense<0xFF800000> : vector<16xf32>
    %24 = vector.multi_reduction <maximumf>, %23, %cst_15 [1] : vector<16x16xf32> to vector<16xf32>
    %25 = vector.shape_cast %24 : vector<16xf32> to vector<16x1xf32>
    %26 = vector.broadcast %25 : vector<16x1xf32> to vector<16x16xf32>
    %27 = arith.subf %23, %26 : vector<16x16xf32>
    %28 = math.exp %27 : vector<16x16xf32>
    %cst_16 = arith.constant dense<0.000000e+00> : vector<16xf32>
    %29 = vector.multi_reduction <add>, %28, %cst_16 [1] : vector<16x16xf32> to vector<16xf32>
    %30 = vector.shape_cast %29 : vector<16xf32> to vector<16x1xf32>
    %31 = tpu.reciprocal %30 {approx = true} : vector<16x1xf32> -> vector<16x1xf32>
    %32 = vector.broadcast %31 : vector<16x1xf32> to vector<16x16xf32>
    %33 = arith.mulf %28, %32 : vector<16x16xf32>
    %cst_17 = arith.constant dense<0.000000e+00> : vector<16x8xf32>
    %34 = tpu.matmul %33, %20, %cst_17 {dimension_numbers = #tpu.dot_dimension_numbers<[1], [0], [0], [1], [0, 0, 1, 1], [], []>} : vector<16x16xf32>, vector<16x8xf32>, vector<16x8xf32> -> vector<16x8xf32>
    %35 = vector.extract_strided_slice %15 {offsets = [0, 8], sizes = [16, 8], strides = [1, 1]} : vector<16x32xf32> to vector<16x8xf32>
    %36 = vector.extract_strided_slice %16 {offsets = [0, 8], sizes = [16, 8], strides = [1, 1]} : vector<16x32xf32> to vector<16x8xf32>
    %37 = vector.extract_strided_slice %17 {offsets = [0, 8], sizes = [16, 8], strides = [1, 1]} : vector<16x32xf32> to vector<16x8xf32>
    %cst_18 = arith.constant dense<0.000000e+00> : vector<16x16xf32>
    %38 = tpu.matmul %35, %36, %cst_18 {dimension_numbers = #tpu.dot_dimension_numbers<[1], [1], [0], [0], [0, 0, 1, 0], [], []>} : vector<16x8xf32>, vector<16x8xf32>, vector<16x16xf32> -> vector<16x16xf32>
    %cst_19 = arith.constant 0.353553385 : f32
    %39 = vector.broadcast %cst_19 : f32 to vector<16x16xf32>
    %40 = arith.mulf %38, %39 : vector<16x16xf32>
    %cst_20 = arith.constant dense<0xFF800000> : vector<16xf32>
    %41 = vector.multi_reduction <maximumf>, %40, %cst_20 [1] : vector<16x16xf32> to vector<16xf32>
    %42 = vector.shape_cast %41 : vector<16xf32> to vector<16x1xf32>
    %43 = vector.broadcast %42 : vector<16x1xf32> to vector<16x16xf32>
    %44 = arith.subf %40, %43 : vector<16x16xf32>
    %45 = math.exp %44 : vector<16x16xf32>
    %cst_21 = arith.constant dense<0.000000e+00> : vector<16xf32>
    %46 = vector.multi_reduction <add>, %45, %cst_21 [1] : vector<16x16xf32> to vector<16xf32>
    %47 = vector.shape_cast %46 : vector<16xf32> to vector<16x1xf32>
    %48 = tpu.reciprocal %47 {approx = true} : vector<16x1xf32> -> vector<16x1xf32>
    %49 = vector.broadcast %48 : vector<16x1xf32> to vector<16x16xf32>
    %50 = arith.mulf %45, %49 : vector<16x16xf32>
    %cst_22 = arith.constant dense<0.000000e+00> : vector<16x8xf32>
    %51 = tpu.matmul %50, %37, %cst_22 {dimension_numbers = #tpu.dot_dimension_numbers<[1], [0], [0], [1], [0, 0, 1, 1], [], []>} : vector<16x16xf32>, vector<16x8xf32>, vector<16x8xf32> -> vector<16x8xf32>
    %52 = vector.extract_strided_slice %15 {offsets = [0, 16], sizes = [16, 8], strides = [1, 1]} : vector<16x32xf32> to vector<16x8xf32>
    %53 = vector.extract_strided_slice %16 {offsets = [0, 16], sizes = [16, 8], strides = [1, 1]} : vector<16x32xf32> to vector<16x8xf32>
    %54 = vector.extract_strided_slice %17 {offsets = [0, 16], sizes = [16, 8], strides = [1, 1]} : vector<16x32xf32> to vector<16x8xf32>
    %cst_23 = arith.constant dense<0.000000e+00> : vector<16x16xf32>
    %55 = tpu.matmul %52, %53, %cst_23 {dimension_numbers = #tpu.dot_dimension_numbers<[1], [1], [0], [0], [0, 0, 1, 0], [], []>} : vector<16x8xf32>, vector<16x8xf32>, vector<16x16xf32> -> vector<16x16xf32>
    %cst_24 = arith.constant 0.353553385 : f32
    %56 = vector.broadcast %cst_24 : f32 to vector<16x16xf32>
    %57 = arith.mulf %55, %56 : vector<16x16xf32>
    %cst_25 = arith.constant dense<0xFF800000> : vector<16xf32>
    %58 = vector.multi_reduction <maximumf>, %57, %cst_25 [1] : vector<16x16xf32> to vector<16xf32>
    %59 = vector.shape_cast %58 : vector<16xf32> to vector<16x1xf32>
    %60 = vector.broadcast %59 : vector<16x1xf32> to vector<16x16xf32>
    %61 = arith.subf %57, %60 : vector<16x16xf32>
    %62 = math.exp %61 : vector<16x16xf32>
    %cst_26 = arith.constant dense<0.000000e+00> : vector<16xf32>
    %63 = vector.multi_reduction <add>, %62, %cst_26 [1] : vector<16x16xf32> to vector<16xf32>
    %64 = vector.shape_cast %63 : vector<16xf32> to vector<16x1xf32>
    %65 = tpu.reciprocal %64 {approx = true} : vector<16x1xf32> -> vector<16x1xf32>
    %66 = vector.broadcast %65 : vector<16x1xf32> to vector<16x16xf32>
    %67 = arith.mulf %62, %66 : vector<16x16xf32>
    %cst_27 = arith.constant dense<0.000000e+00> : vector<16x8xf32>
    %68 = tpu.matmul %67, %54, %cst_27 {dimension_numbers = #tpu.dot_dimension_numbers<[1], [0], [0], [1], [0, 0, 1, 1], [], []>} : vector<16x16xf32>, vector<16x8xf32>, vector<16x8xf32> -> vector<16x8xf32>
    %69 = vector.extract_strided_slice %15 {offsets = [0, 24], sizes = [16, 8], strides = [1, 1]} : vector<16x32xf32> to vector<16x8xf32>
    %70 = vector.extract_strided_slice %16 {offsets = [0, 24], sizes = [16, 8], strides = [1, 1]} : vector<16x32xf32> to vector<16x8xf32>
    %71 = vector.extract_strided_slice %17 {offsets = [0, 24], sizes = [16, 8], strides = [1, 1]} : vector<16x32xf32> to vector<16x8xf32>
    %cst_28 = arith.constant dense<0.000000e+00> : vector<16x16xf32>
    %72 = tpu.matmul %69, %70, %cst_28 {dimension_numbers = #tpu.dot_dimension_numbers<[1], [1], [0], [0], [0, 0, 1, 0], [], []>} : vector<16x8xf32>, vector<16x8xf32>, vector<16x16xf32> -> vector<16x16xf32>
    %cst_29 = arith.constant 0.353553385 : f32
    %73 = vector.broadcast %cst_29 : f32 to vector<16x16xf32>
    %74 = arith.mulf %72, %73 : vector<16x16xf32>
    %cst_30 = arith.constant dense<0xFF800000> : vector<16xf32>
    %75 = vector.multi_reduction <maximumf>, %74, %cst_30 [1] : vector<16x16xf32> to vector<16xf32>
    %76 = vector.shape_cast %75 : vector<16xf32> to vector<16x1xf32>
    %77 = vector.broadcast %76 : vector<16x1xf32> to vector<16x16xf32>
    %78 = arith.subf %74, %77 : vector<16x16xf32>
    %79 = math.exp %78 : vector<16x16xf32>
    %cst_31 = arith.constant dense<0.000000e+00> : vector<16xf32>
    %80 = vector.multi_reduction <add>, %79, %cst_31 [1] : vector<16x16xf32> to vector<16xf32>
    %81 = vector.shape_cast %80 : vector<16xf32> to vector<16x1xf32>
    %82 = tpu.reciprocal %81 {approx = true} : vector<16x1xf32> -> vector<16x1xf32>
    %83 = vector.broadcast %82 : vector<16x1xf32> to vector<16x16xf32>
    %84 = arith.mulf %79, %83 : vector<16x16xf32>
    %cst_32 = arith.constant dense<0.000000e+00> : vector<16x8xf32>
    %85 = tpu.matmul %84, %71, %cst_32 {dimension_numbers = #tpu.dot_dimension_numbers<[1], [0], [0], [1], [0, 0, 1, 1], [], []>} : vector<16x16xf32>, vector<16x8xf32>, vector<16x8xf32> -> vector<16x8xf32>
    %86 = tpu.concatenate %34, %51, %68, %85 in 1 : vector<16x8xf32>, vector<16x8xf32>, vector<16x8xf32>, vector<16x8xf32> -> vector<16x32xf32>
    %c0_33 = arith.constant 0 : index
    %c0_34 = arith.constant 0 : index
    %c0_35 = arith.constant 0 : index
    %87 = vector.load %arg6[%c0_33, %c0_34, %c0_35] : memref<2x32x32xf32, #tpu.memory_space<vmem>>, vector<1x32x32xf32>
    %88 = vector.shape_cast %87 : vector<1x32x32xf32> to vector<32x32xf32>
    %cst_36 = arith.constant dense<0.000000e+00> : vector<16x32xf32>
    %89 = tpu.matmul %86, %88, %cst_36 {dimension_numbers = #tpu.dot_dimension_numbers<[1], [0], [0], [1], [0, 0, 1, 1], [], []>} : vector<16x32xf32>, vector<32x32xf32>, vector<16x32xf32> -> vector<16x32xf32>
    %c0_37 = arith.constant 0 : index
    %c0_38 = arith.constant 0 : index
    %c0_39 = arith.constant 0 : index
    %90 = vector.load %arg7[%c0_37, %c0_38, %c0_39] : memref<2x1x32xf32, #tpu.memory_space<vmem>>, vector<1x1x32xf32>
    %91 = vector.shape_cast %90 : vector<1x1x32xf32> to vector<1x32xf32>
    %92 = vector.broadcast %91 : vector<1x32xf32> to vector<16x32xf32>
    %93 = arith.addf %89, %92 : vector<16x32xf32>
    %94 = arith.addf %93, %7 : vector<16x32xf32>
    %c0_40 = arith.constant 0 : index
    %c0_41 = arith.constant 0 : index
    %c0_42 = arith.constant 0 : index
    %95 = vector.load %arg8[%c0_40, %c0_41, %c0_42] : memref<2x32x32xf32, #tpu.memory_space<vmem>>, vector<1x32x32xf32>
    %96 = vector.shape_cast %95 : vector<1x32x32xf32> to vector<32x32xf32>
    %cst_43 = arith.constant dense<0.000000e+00> : vector<16x32xf32>
    %97 = tpu.matmul %94, %96, %cst_43 {dimension_numbers = #tpu.dot_dimension_numbers<[1], [0], [0], [1], [0, 0, 1, 1], [], []>} : vector<16x32xf32>, vector<32x32xf32>, vector<16x32xf32> -> vector<16x32xf32>
    %98 = arith.addf %97, %94 : vector<16x32xf32>
    %c1 = arith.constant 1 : index
    %c0_44 = arith.constant 0 : index
    %c0_45 = arith.constant 0 : index
    %99 = vector.load %arg4[%c1, %c0_44, %c0_45] : memref<2x32x96xf32, #tpu.memory_space<vmem>>, vector<1x32x96xf32>
    %100 = vector.shape_cast %99 : vector<1x32x96xf32> to vector<32x96xf32>
    %cst_46 = arith.constant dense<0.000000e+00> : vector<16x96xf32>
    %101 = tpu.matmul %98, %100, %cst_46 {dimension_numbers = #tpu.dot_dimension_numbers<[1], [0], [0], [1], [0, 0, 1, 1], [], []>} : vector<16x32xf32>, vector<32x96xf32>, vector<16x96xf32> -> vector<16x96xf32>
    %c1_47 = arith.constant 1 : index
    %c0_48 = arith.constant 0 : index
    %c0_49 = arith.constant 0 : index
    %102 = vector.load %arg5[%c1_47, %c0_48, %c0_49] : memref<2x1x96xf32, #tpu.memory_space<vmem>>, vector<1x1x96xf32>
    %103 = vector.shape_cast %102 : vector<1x1x96xf32> to vector<1x96xf32>
    %104 = vector.broadcast %103 : vector<1x96xf32> to vector<16x96xf32>
    %105 = arith.addf %101, %104 : vector<16x96xf32>
    %106 = vector.extract_strided_slice %105 {offsets = [0, 0], sizes = [16, 32], strides = [1, 1]} : vector<16x96xf32> to vector<16x32xf32>
    %107 = vector.extract_strided_slice %105 {offsets = [0, 32], sizes = [16, 32], strides = [1, 1]} : vector<16x96xf32> to vector<16x32xf32>
    %108 = vector.extract_strided_slice %105 {offsets = [0, 64], sizes = [16, 32], strides = [1, 1]} : vector<16x96xf32> to vector<16x32xf32>
    %109 = vector.extract_strided_slice %106 {offsets = [0, 0], sizes = [16, 8], strides = [1, 1]} : vector<16x32xf32> to vector<16x8xf32>
    %110 = vector.extract_strided_slice %107 {offsets = [0, 0], sizes = [16, 8], strides = [1, 1]} : vector<16x32xf32> to vector<16x8xf32>
    %111 = vector.extract_strided_slice %108 {offsets = [0, 0], sizes = [16, 8], strides = [1, 1]} : vector<16x32xf32> to vector<16x8xf32>
    %cst_50 = arith.constant dense<0.000000e+00> : vector<16x16xf32>
    %112 = tpu.matmul %109, %110, %cst_50 {dimension_numbers = #tpu.dot_dimension_numbers<[1], [1], [0], [0], [0, 0, 1, 0], [], []>} : vector<16x8xf32>, vector<16x8xf32>, vector<16x16xf32> -> vector<16x16xf32>
    %cst_51 = arith.constant 0.353553385 : f32
    %113 = vector.broadcast %cst_51 : f32 to vector<16x16xf32>
    %114 = arith.mulf %112, %113 : vector<16x16xf32>
    %cst_52 = arith.constant dense<0xFF800000> : vector<16xf32>
    %115 = vector.multi_reduction <maximumf>, %114, %cst_52 [1] : vector<16x16xf32> to vector<16xf32>
    %116 = vector.shape_cast %115 : vector<16xf32> to vector<16x1xf32>
    %117 = vector.broadcast %116 : vector<16x1xf32> to vector<16x16xf32>
    %118 = arith.subf %114, %117 : vector<16x16xf32>
    %119 = math.exp %118 : vector<16x16xf32>
    %cst_53 = arith.constant dense<0.000000e+00> : vector<16xf32>
    %120 = vector.multi_reduction <add>, %119, %cst_53 [1] : vector<16x16xf32> to vector<16xf32>
    %121 = vector.shape_cast %120 : vector<16xf32> to vector<16x1xf32>
    %122 = tpu.reciprocal %121 {approx = true} : vector<16x1xf32> -> vector<16x1xf32>
    %123 = vector.broadcast %122 : vector<16x1xf32> to vector<16x16xf32>
    %124 = arith.mulf %119, %123 : vector<16x16xf32>
    %cst_54 = arith.constant dense<0.000000e+00> : vector<16x8xf32>
    %125 = tpu.matmul %124, %111, %cst_54 {dimension_numbers = #tpu.dot_dimension_numbers<[1], [0], [0], [1], [0, 0, 1, 1], [], []>} : vector<16x16xf32>, vector<16x8xf32>, vector<16x8xf32> -> vector<16x8xf32>
    %126 = vector.extract_strided_slice %106 {offsets = [0, 8], sizes = [16, 8], strides = [1, 1]} : vector<16x32xf32> to vector<16x8xf32>
    %127 = vector.extract_strided_slice %107 {offsets = [0, 8], sizes = [16, 8], strides = [1, 1]} : vector<16x32xf32> to vector<16x8xf32>
    %128 = vector.extract_strided_slice %108 {offsets = [0, 8], sizes = [16, 8], strides = [1, 1]} : vector<16x32xf32> to vector<16x8xf32>
    %cst_55 = arith.constant dense<0.000000e+00> : vector<16x16xf32>
    %129 = tpu.matmul %126, %127, %cst_55 {dimension_numbers = #tpu.dot_dimension_numbers<[1], [1], [0], [0], [0, 0, 1, 0], [], []>} : vector<16x8xf32>, vector<16x8xf32>, vector<16x16xf32> -> vector<16x16xf32>
    %cst_56 = arith.constant 0.353553385 : f32
    %130 = vector.broadcast %cst_56 : f32 to vector<16x16xf32>
    %131 = arith.mulf %129, %130 : vector<16x16xf32>
    %cst_57 = arith.constant dense<0xFF800000> : vector<16xf32>
    %132 = vector.multi_reduction <maximumf>, %131, %cst_57 [1] : vector<16x16xf32> to vector<16xf32>
    %133 = vector.shape_cast %132 : vector<16xf32> to vector<16x1xf32>
    %134 = vector.broadcast %133 : vector<16x1xf32> to vector<16x16xf32>
    %135 = arith.subf %131, %134 : vector<16x16xf32>
    %136 = math.exp %135 : vector<16x16xf32>
    %cst_58 = arith.constant dense<0.000000e+00> : vector<16xf32>
    %137 = vector.multi_reduction <add>, %136, %cst_58 [1] : vector<16x16xf32> to vector<16xf32>
    %138 = vector.shape_cast %137 : vector<16xf32> to vector<16x1xf32>
    %139 = tpu.reciprocal %138 {approx = true} : vector<16x1xf32> -> vector<16x1xf32>
    %140 = vector.broadcast %139 : vector<16x1xf32> to vector<16x16xf32>
    %141 = arith.mulf %136, %140 : vector<16x16xf32>
    %cst_59 = arith.constant dense<0.000000e+00> : vector<16x8xf32>
    %142 = tpu.matmul %141, %128, %cst_59 {dimension_numbers = #tpu.dot_dimension_numbers<[1], [0], [0], [1], [0, 0, 1, 1], [], []>} : vector<16x16xf32>, vector<16x8xf32>, vector<16x8xf32> -> vector<16x8xf32>
    %143 = vector.extract_strided_slice %106 {offsets = [0, 16], sizes = [16, 8], strides = [1, 1]} : vector<16x32xf32> to vector<16x8xf32>
    %144 = vector.extract_strided_slice %107 {offsets = [0, 16], sizes = [16, 8], strides = [1, 1]} : vector<16x32xf32> to vector<16x8xf32>
    %145 = vector.extract_strided_slice %108 {offsets = [0, 16], sizes = [16, 8], strides = [1, 1]} : vector<16x32xf32> to vector<16x8xf32>
    %cst_60 = arith.constant dense<0.000000e+00> : vector<16x16xf32>
    %146 = tpu.matmul %143, %144, %cst_60 {dimension_numbers = #tpu.dot_dimension_numbers<[1], [1], [0], [0], [0, 0, 1, 0], [], []>} : vector<16x8xf32>, vector<16x8xf32>, vector<16x16xf32> -> vector<16x16xf32>
    %cst_61 = arith.constant 0.353553385 : f32
    %147 = vector.broadcast %cst_61 : f32 to vector<16x16xf32>
    %148 = arith.mulf %146, %147 : vector<16x16xf32>
    %cst_62 = arith.constant dense<0xFF800000> : vector<16xf32>
    %149 = vector.multi_reduction <maximumf>, %148, %cst_62 [1] : vector<16x16xf32> to vector<16xf32>
    %150 = vector.shape_cast %149 : vector<16xf32> to vector<16x1xf32>
    %151 = vector.broadcast %150 : vector<16x1xf32> to vector<16x16xf32>
    %152 = arith.subf %148, %151 : vector<16x16xf32>
    %153 = math.exp %152 : vector<16x16xf32>
    %cst_63 = arith.constant dense<0.000000e+00> : vector<16xf32>
    %154 = vector.multi_reduction <add>, %153, %cst_63 [1] : vector<16x16xf32> to vector<16xf32>
    %155 = vector.shape_cast %154 : vector<16xf32> to vector<16x1xf32>
    %156 = tpu.reciprocal %155 {approx = true} : vector<16x1xf32> -> vector<16x1xf32>
    %157 = vector.broadcast %156 : vector<16x1xf32> to vector<16x16xf32>
    %158 = arith.mulf %153, %157 : vector<16x16xf32>
    %cst_64 = arith.constant dense<0.000000e+00> : vector<16x8xf32>
    %159 = tpu.matmul %158, %145, %cst_64 {dimension_numbers = #tpu.dot_dimension_numbers<[1], [0], [0], [1], [0, 0, 1, 1], [], []>} : vector<16x16xf32>, vector<16x8xf32>, vector<16x8xf32> -> vector<16x8xf32>
    %160 = vector.extract_strided_slice %106 {offsets = [0, 24], sizes = [16, 8], strides = [1, 1]} : vector<16x32xf32> to vector<16x8xf32>
    %161 = vector.extract_strided_slice %107 {offsets = [0, 24], sizes = [16, 8], strides = [1, 1]} : vector<16x32xf32> to vector<16x8xf32>
    %162 = vector.extract_strided_slice %108 {offsets = [0, 24], sizes = [16, 8], strides = [1, 1]} : vector<16x32xf32> to vector<16x8xf32>
    %cst_65 = arith.constant dense<0.000000e+00> : vector<16x16xf32>
    %163 = tpu.matmul %160, %161, %cst_65 {dimension_numbers = #tpu.dot_dimension_numbers<[1], [1], [0], [0], [0, 0, 1, 0], [], []>} : vector<16x8xf32>, vector<16x8xf32>, vector<16x16xf32> -> vector<16x16xf32>
    %cst_66 = arith.constant 0.353553385 : f32
    %164 = vector.broadcast %cst_66 : f32 to vector<16x16xf32>
    %165 = arith.mulf %163, %164 : vector<16x16xf32>
    %cst_67 = arith.constant dense<0xFF800000> : vector<16xf32>
    %166 = vector.multi_reduction <maximumf>, %165, %cst_67 [1] : vector<16x16xf32> to vector<16xf32>
    %167 = vector.shape_cast %166 : vector<16xf32> to vector<16x1xf32>
    %168 = vector.broadcast %167 : vector<16x1xf32> to vector<16x16xf32>
    %169 = arith.subf %165, %168 : vector<16x16xf32>
    %170 = math.exp %169 : vector<16x16xf32>
    %cst_68 = arith.constant dense<0.000000e+00> : vector<16xf32>
    %171 = vector.multi_reduction <add>, %170, %cst_68 [1] : vector<16x16xf32> to vector<16xf32>
    %172 = vector.shape_cast %171 : vector<16xf32> to vector<16x1xf32>
    %173 = tpu.reciprocal %172 {approx = true} : vector<16x1xf32> -> vector<16x1xf32>
    %174 = vector.broadcast %173 : vector<16x1xf32> to vector<16x16xf32>
    %175 = arith.mulf %170, %174 : vector<16x16xf32>
    %cst_69 = arith.constant dense<0.000000e+00> : vector<16x8xf32>
    %176 = tpu.matmul %175, %162, %cst_69 {dimension_numbers = #tpu.dot_dimension_numbers<[1], [0], [0], [1], [0, 0, 1, 1], [], []>} : vector<16x16xf32>, vector<16x8xf32>, vector<16x8xf32> -> vector<16x8xf32>
    %177 = tpu.concatenate %125, %142, %159, %176 in 1 : vector<16x8xf32>, vector<16x8xf32>, vector<16x8xf32>, vector<16x8xf32> -> vector<16x32xf32>
    %c1_70 = arith.constant 1 : index
    %c0_71 = arith.constant 0 : index
    %c0_72 = arith.constant 0 : index
    %178 = vector.load %arg6[%c1_70, %c0_71, %c0_72] : memref<2x32x32xf32, #tpu.memory_space<vmem>>, vector<1x32x32xf32>
    %179 = vector.shape_cast %178 : vector<1x32x32xf32> to vector<32x32xf32>
    %cst_73 = arith.constant dense<0.000000e+00> : vector<16x32xf32>
    %180 = tpu.matmul %177, %179, %cst_73 {dimension_numbers = #tpu.dot_dimension_numbers<[1], [0], [0], [1], [0, 0, 1, 1], [], []>} : vector<16x32xf32>, vector<32x32xf32>, vector<16x32xf32> -> vector<16x32xf32>
    %c1_74 = arith.constant 1 : index
    %c0_75 = arith.constant 0 : index
    %c0_76 = arith.constant 0 : index
    %181 = vector.load %arg7[%c1_74, %c0_75, %c0_76] : memref<2x1x32xf32, #tpu.memory_space<vmem>>, vector<1x1x32xf32>
    %182 = vector.shape_cast %181 : vector<1x1x32xf32> to vector<1x32xf32>
    %183 = vector.broadcast %182 : vector<1x32xf32> to vector<16x32xf32>
    %184 = arith.addf %180, %183 : vector<16x32xf32>
    %185 = arith.addf %184, %98 : vector<16x32xf32>
    %c1_77 = arith.constant 1 : index
    %c0_78 = arith.constant 0 : index
    %c0_79 = arith.constant 0 : index
    %186 = vector.load %arg8[%c1_77, %c0_78, %c0_79] : memref<2x32x32xf32, #tpu.memory_space<vmem>>, vector<1x32x32xf32>
    %187 = vector.shape_cast %186 : vector<1x32x32xf32> to vector<32x32xf32>
    %cst_80 = arith.constant dense<0.000000e+00> : vector<16x32xf32>
    %188 = tpu.matmul %185, %187, %cst_80 {dimension_numbers = #tpu.dot_dimension_numbers<[1], [0], [0], [1], [0, 0, 1, 1], [], []>} : vector<16x32xf32>, vector<32x32xf32>, vector<16x32xf32> -> vector<16x32xf32>
    %189 = arith.addf %188, %185 : vector<16x32xf32>
    %c0_81 = arith.constant 0 : index
    %c0_82 = arith.constant 0 : index
    %c0_83 = arith.constant 0 : index
    %190 = vector.load %arg9[%c0_81, %c0_82, %c0_83] : memref<1x16x32xf32, #tpu.memory_space<vmem>>, vector<1x16x32xf32>
    %191 = vector.shape_cast %190 : vector<1x16x32xf32> to vector<16x32xf32>
    %192 = vector.shape_cast %189 : vector<16x32xf32> to vector<1x16x32xf32>
    tpu.vector_store %arg9[%c0_81, %c0_82, %c0_83], %192 {strides = array<i32>} : memref<1x16x32xf32, #tpu.memory_space<vmem>>, vector<1x16x32xf32>,
    return
  }
  func.func @transform_0(%arg0: i32) -> (i32, i32, i32) {
    %c0_i32 = arith.constant 0 : i32
    %c0_i32_0 = arith.constant 0 : i32
    %c0_i32_1 = arith.constant 0 : i32
    return %arg0, %c0_i32, %c0_i32_0 : i32, i32, i32
  }
  func.func @transform_1(%arg0: i32) -> (i32, i32) {
    %c0_i32 = arith.constant 0 : i32
    %c0_i32_0 = arith.constant 0 : i32
    %c0_i32_1 = arith.constant 0 : i32
    return %c0_i32, %c0_i32_0 : i32, i32
  }
  func.func @transform_2(%arg0: i32) -> (i32, i32) {
    %c0_i32 = arith.constant 0 : i32
    %c0_i32_0 = arith.constant 0 : i32
    %c0_i32_1 = arith.constant 0 : i32
    return %c0_i32, %c0_i32_0 : i32, i32
  }
  func.func @transform_3(%arg0: i32) -> (i32, i32, i32) {
    %c0_i32 = arith.constant 0 : i32
    %c0_i32_0 = arith.constant 0 : i32
    %c0_i32_1 = arith.constant 0 : i32
    %c0_i32_2 = arith.constant 0 : i32
    return %c0_i32, %c0_i32_0, %c0_i32_1 : i32, i32, i32
  }
  func.func @transform_4(%arg0: i32) -> (i32, i32, i32) {
    %c0_i32 = arith.constant 0 : i32
    %c0_i32_0 = arith.constant 0 : i32
    %c0_i32_1 = arith.constant 0 : i32
    %c0_i32_2 = arith.constant 0 : i32
    return %c0_i32, %c0_i32_0, %c0_i32_1 : i32, i32, i32
  }
  func.func @transform_5(%arg0: i32) -> (i32, i32, i32) {
    %c0_i32 = arith.constant 0 : i32
    %c0_i32_0 = arith.constant 0 : i32
    %c0_i32_1 = arith.constant 0 : i32
    %c0_i32_2 = arith.constant 0 : i32
    return %c0_i32, %c0_i32_0, %c0_i32_1 : i32, i32, i32
  }
  func.func @transform_6(%arg0: i32) -> (i32, i32, i32) {
    %c0_i32 = arith.constant 0 : i32
    %c0_i32_0 = arith.constant 0 : i32
    %c0_i32_1 = arith.constant 0 : i32
    %c0_i32_2 = arith.constant 0 : i32
    return %c0_i32, %c0_i32_0, %c0_i32_1 : i32, i32, i32
  }
  func.func @transform_7(%arg0: i32) -> (i32, i32, i32) {
    %c0_i32 = arith.constant 0 : i32
    %c0_i32_0 = arith.constant 0 : i32
    %c0_i32_1 = arith.constant 0 : i32
    %c0_i32_2 = arith.constant 0 : i32
    return %c0_i32, %c0_i32_0, %c0_i32_1 : i32, i32, i32
  }
  func.func @transform_8(%arg0: i32) -> (i32, i32, i32) {
    %c0_i32 = arith.constant 0 : i32
    %c0_i32_0 = arith.constant 0 : i32
    %c0_i32_1 = arith.constant 0 : i32
    return %arg0, %c0_i32, %c0_i32_0 : i32, i32, i32
  }
}

</mosaic_0001>

<llo_original>
// kernel: tpu_custom_call.1
$region0: #{tpu_custom_call.1}
  #allocation0 [shape = 'u32[]', space=smem, size = 0x4, offset = 0x4, fixed_abs, tag = 'smem constant byte address 0x4 - core index']
  #allocation1 [shape = 'u32[144,128]{1,0:T(1,128)}', space=vmem, size = 0x12000, scoped, tag = 'internal scratch']
  %s0 = inlined_call_operand.hbm [shape: f32[2,16,32], index: 0, kind: input, shape index: {}]
  %s1 = inlined_call_operand.hbm [shape: f32[32,32], index: 1, kind: input, shape index: {}]
  %s2 = inlined_call_operand.vmem [shape: f32[1,32], index: 2, kind: input, shape index: {}]
  %s3 = inlined_call_operand.hbm [shape: f32[2,32,96], index: 3, kind: input, shape index: {}]
  %s4 = inlined_call_operand.vmem [shape: f32[2,1,96], index: 4, kind: input, shape index: {}]
  %s5 = inlined_call_operand.hbm [shape: f32[2,32,32], index: 5, kind: input, shape index: {}]
  %s6 = inlined_call_operand.vmem [shape: f32[2,1,32], index: 6, kind: input, shape index: {}]
  %s7 = inlined_call_operand.hbm [shape: f32[2,32,32], index: 7, kind: input, shape index: {}]
  %s8 = inlined_call_operand.hbm [shape: f32[2,16,32], index: 8, kind: output, shape index: {}]
  %s9 = sld [smem:[#allocation0]]
  $region85: #{tpu_custom_call.1} parent=0
    _
  %s11 = ssub.s32 1, %s9
  %s12 = scalar_select 0, %s11, %s9
  $region1: #{tpu_custom_call.1} parent=0
    #allocation2 [shape = 'u8[16384]{0}', space=vmem, size = 0x4000, scoped, tag = 'input window, operand 0']
    #allocation3 [shape = 's32[2]{0}', space=sflag, size = 0x8, scoped, tag = 'scoped memory for tpu_custom_call.1']
    #allocation4 [shape = 's32[2]{0}', space=sflag, size = 0x8, scoped, tag = 'scoped memory for tpu_custom_call.1']
    #allocation5 [shape = 'u8[16384]{0}', space=vmem, size = 0x4000, scoped, tag = 'input window, operand 1, single buffered']
    #allocation6 [shape = 's32[1]{0}', space=sflag, size = 0x4, scoped, tag = 'scoped memory for tpu_custom_call.1']
    #allocation7 [shape = 'u8[32768]{0}', space=vmem, size = 0x8000, scoped, tag = 'input window, operand 3, single buffered']
    #allocation8 [shape = 'u8[32768]{0}', space=vmem, size = 0x8000, scoped, tag = 'input window, operand 5, single buffered']
    #allocation9 [shape = 's32[1]{0}', space=sflag, size = 0x4, scoped, tag = 'scoped memory for tpu_custom_call.1']
    #allocation10 [shape = 'u8[32768]{0}', space=vmem, size = 0x8000, scoped, tag = 'input window, operand 7, single buffered']
    #allocation11 [shape = 'u8[16384]{0}', space=vmem, size = 0x4000, scoped, tag = 'output window, operand 0']
    %13 = vsyncpa [#allocation3], 0
    %s14 = scalar_lea.sflag [#allocation3], 1
    %15 = vsyncpa %s14, 0
    %16 = vsyncpa [#allocation6], 0
    %17 = vsyncpa [#allocation9], 0
    %18 = vsyncpa [#allocation4], 0
    %s19 = scalar_lea.sflag [#allocation4], 1
    %20 = vsyncpa %s19, 0
    loop: start=0, step=1, limit=4
    $region2: #{tpu_custom_call.1} parent=1 // loop_pre_header
      _
    $region3: #{tpu_custom_call.1} parent=1 // loop_header
      %s22 = sphi 0, %s26
      %p23 = scmp.ge.s32.totalorder %s22, 4
      %s32 = sphi 0, %s34
      %s35 = sphi 0, %s32
      %s36 = sphi 0, %s35
      %s52 = sphi 0, %s36
      %s56 = sphi 0, %s56
      %s58 = sphi 0, %s56
      %s59 = sphi 0, %s58
      %s73 = sphi 0, %s59
      %s77 = sphi 0, %s77
      %s79 = sphi 0, %s77
      %s80 = sphi 0, %s79
      %s94 = sphi 0, %s80
      %s98 = sphi 0, %s98
      %s100 = sphi 0, %s98
      %s101 = sphi 0, %s100
      %s115 = sphi 0, %s101
      %s119 = sphi 0, %s119
      %s121 = sphi 0, %s119
      %s122 = sphi 0, %s121
      %s136 = sphi 0, %s122
      %s140 = sphi 0, %s140
      %s142 = sphi 0, %s140
      %s143 = sphi 0, %s142
      %s157 = sphi 0, %s143
      %s161 = sphi 0, %s161
      %s163 = sphi 0, %s161
      %s164 = sphi 0, %s163
      %s178 = sphi 0, %s164
      %s182 = sphi 0, %s182
      %s184 = sphi 0, %s182
      %s185 = sphi 0, %s184
      %s199 = sphi 0, %s185
      %s205 = sphi 0, %s207
      %s208 = sphi 0, %s205
      %s209 = sphi 0, %s208
      %s225 = sphi 0, %s209
    $region4: #{tpu_custom_call.1} parent=1 // loop_header_branch
      %25 = sbr.rel (%p23) target = $region8
    $region5: #{tpu_custom_call.1} parent=1 // loop_body
      %s27 = ssub.s32 %s22, 1
      %s28 = ssub.s32 %s22, 2
      %s29 = sadd.s32 %s22, 1
      %s30 = ssub.s32 %s22, %s29
      %p31 = scmp.eq.s32.totalorder %s30, 0
      %s33 = sadd.s32 %s32, 1
      %s34 = scalar_select %p31, %s32, %s33
      %p37 = pneg %p31
      %p38 = scmp.eq.s32.totalorder %s22, 1
      %p39 = por %p37, %p38
      %p40 = scmp.ne.s32.totalorder %s32, %s35
      %p41 = scmp.eq.s32.totalorder %s22, 0
      %p42 = por %p40, %p41
      %p43 = scmp.ne.s32.totalorder %s32, %s35
      %p44 = scmp.eq.s32.totalorder %s27, 1
      %p45 = por %p43, %p44
      %p46 = scmp.ne.s32.totalorder %s35, %s36
      %p47 = scmp.eq.s32.totalorder %s27, 0
      %p48 = por %p46, %p47
      %p49 = scmp.ne.s32.totalorder %s35, %s36
      %p50 = scmp.eq.s32.totalorder %s28, 1
      %p51 = por %p49, %p50
      %p53 = scmp.ne.s32.totalorder %s36, %s52
      %p54 = scmp.eq.s32.totalorder %s28, 0
      %p55 = por %p53, %p54
      %s57 = sadd.s32 %s56, 1
      %p60 = scmp.eq.s32.totalorder %s22, 1
      %p61 = scmp.ne.s32.totalorder %s56, %s58
      %p62 = scmp.eq.s32.totalorder %s22, 0
      %p63 = por %p61, %p62
      %p64 = scmp.ne.s32.totalorder %s56, %s58
      %p65 = scmp.eq.s32.totalorder %s27, 1
      %p66 = por %p64, %p65
      %p67 = scmp.ne.s32.totalorder %s58, %s59
      %p68 = scmp.eq.s32.totalorder %s27, 0
      %p69 = por %p67, %p68
      %p70 = scmp.ne.s32.totalorder %s58, %s59
      %p71 = scmp.eq.s32.totalorder %s28, 1
      %p72 = por %p70, %p71
      %p74 = scmp.ne.s32.totalorder %s59, %s73
      %p75 = scmp.eq.s32.totalorder %s28, 0
      %p76 = por %p74, %p75
      %s78 = sadd.s32 %s77, 1
      %p81 = scmp.eq.s32.totalorder %s22, 1
      %p82 = scmp.ne.s32.totalorder %s77, %s79
      %p83 = scmp.eq.s32.totalorder %s22, 0
      %p84 = por %p82, %p83
      %p85 = scmp.ne.s32.totalorder %s77, %s79
      %p86 = scmp.eq.s32.totalorder %s27, 1
      %p87 = por %p85, %p86
      %p88 = scmp.ne.s32.totalorder %s79, %s80
      %p89 = scmp.eq.s32.totalorder %s27, 0
      %p90 = por %p88, %p89
      %p91 = scmp.ne.s32.totalorder %s79, %s80
      %p92 = scmp.eq.s32.totalorder %s28, 1
      %p93 = por %p91, %p92
      %p95 = scmp.ne.s32.totalorder %s80, %s94
      %p96 = scmp.eq.s32.totalorder %s28, 0
      %p97 = por %p95, %p96
      %s99 = sadd.s32 %s98, 1
      %p102 = scmp.eq.s32.totalorder %s22, 1
      %p103 = scmp.ne.s32.totalorder %s98, %s100
      %p104 = scmp.eq.s32.totalorder %s22, 0
      %p105 = por %p103, %p104
      %p106 = scmp.ne.s32.totalorder %s98, %s100
      %p107 = scmp.eq.s32.totalorder %s27, 1
      %p108 = por %p106, %p107
      %p109 = scmp.ne.s32.totalorder %s100, %s101
      %p110 = scmp.eq.s32.totalorder %s27, 0
      %p111 = por %p109, %p110
      %p112 = scmp.ne.s32.totalorder %s100, %s101
      %p113 = scmp.eq.s32.totalorder %s28, 1
      %p114 = por %p112, %p113
      %p116 = scmp.ne.s32.totalorder %s101, %s115
      %p117 = scmp.eq.s32.totalorder %s28, 0
      %p118 = por %p116, %p117
      %s120 = sadd.s32 %s119, 1
      %p123 = scmp.eq.s32.totalorder %s22, 1
      %p124 = scmp.ne.s32.totalorder %s119, %s121
      %p125 = scmp.eq.s32.totalorder %s22, 0
      %p126 = por %p124, %p125
      %p127 = scmp.ne.s32.totalorder %s119, %s121
      %p128 = scmp.eq.s32.totalorder %s27, 1
      %p129 = por %p127, %p128
      %p130 = scmp.ne.s32.totalorder %s121, %s122
      %p131 = scmp.eq.s32.totalorder %s27, 0
      %p132 = por %p130, %p131
      %p133 = scmp.ne.s32.totalorder %s121, %s122
      %p134 = scmp.eq.s32.totalorder %s28, 1
      %p135 = por %p133, %p134
      %p137 = scmp.ne.s32.totalorder %s122, %s136
      %p138 = scmp.eq.s32.totalorder %s28, 0
      %p139 = por %p137, %p138
      %s141 = sadd.s32 %s140, 1
      %p144 = scmp.eq.s32.totalorder %s22, 1
      %p145 = scmp.ne.s32.totalorder %s140, %s142
      %p146 = scmp.eq.s32.totalorder %s22, 0
      %p147 = por %p145, %p146
      %p148 = scmp.ne.s32.totalorder %s140, %s142
      %p149 = scmp.eq.s32.totalorder %s27, 1
      %p150 = por %p148, %p149
      %p151 = scmp.ne.s32.totalorder %s142, %s143
      %p152 = scmp.eq.s32.totalorder %s27, 0
      %p153 = por %p151, %p152
      %p154 = scmp.ne.s32.totalorder %s142, %s143
      %p155 = scmp.eq.s32.totalorder %s28, 1
      %p156 = por %p154, %p155
      %p158 = scmp.ne.s32.totalorder %s143, %s157
      %p159 = scmp.eq.s32.totalorder %s28, 0
      %p160 = por %p158, %p159
      %s162 = sadd.s32 %s161, 1
      %p165 = scmp.eq.s32.totalorder %s22, 1
      %p166 = scmp.ne.s32.totalorder %s161, %s163
      %p167 = scmp.eq.s32.totalorder %s22, 0
      %p168 = por %p166, %p167
      %p169 = scmp.ne.s32.totalorder %s161, %s163
      %p170 = scmp.eq.s32.totalorder %s27, 1
      %p171 = por %p169, %p170
      %p172 = scmp.ne.s32.totalorder %s163, %s164
      %p173 = scmp.eq.s32.totalorder %s27, 0
      %p174 = por %p172, %p173
      %p175 = scmp.ne.s32.totalorder %s163, %s164
      %p176 = scmp.eq.s32.totalorder %s28, 1
      %p177 = por %p175, %p176
      %p179 = scmp.ne.s32.totalorder %s164, %s178
      %p180 = scmp.eq.s32.totalorder %s28, 0
      %p181 = por %p179, %p180
      %s183 = sadd.s32 %s182, 1
      %p186 = scmp.eq.s32.totalorder %s22, 1
      %p187 = scmp.ne.s32.totalorder %s182, %s184
      %p188 = scmp.eq.s32.totalorder %s22, 0
      %p189 = por %p187, %p188
      %p190 = scmp.ne.s32.totalorder %s182, %s184
      %p191 = scmp.eq.s32.totalorder %s27, 1
      %p192 = por %p190, %p191
      %p193 = scmp.ne.s32.totalorder %s184, %s185
      %p194 = scmp.eq.s32.totalorder %s27, 0
      %p195 = por %p193, %p194
      %p196 = scmp.ne.s32.totalorder %s184, %s185
      %p197 = scmp.eq.s32.totalorder %s28, 1
      %p198 = por %p196, %p197
      %p200 = scmp.ne.s32.totalorder %s185, %s199
      %p201 = scmp.eq.s32.totalorder %s28, 0
      %p202 = por %p200, %p201
      %s203 = ssub.s32 %s22, %s29
      %p204 = scmp.eq.s32.totalorder %s203, 0
      %s206 = sadd.s32 %s205, 1
      %s207 = scalar_select %p204, %s205, %s206
      %p210 = pneg %p204
      %p211 = scmp.eq.s32.totalorder %s22, 1
      %p212 = por %p210, %p211
      %p213 = scmp.ne.s32.totalorder %s205, %s208
      %p214 = scmp.eq.s32.totalorder %s22, 0
      %p215 = por %p213, %p214
      %p216 = scmp.ne.s32.totalorder %s205, %s208
      %p217 = scmp.eq.s32.totalorder %s27, 1
      %p218 = por %p216, %p217
      %p219 = scmp.ne.s32.totalorder %s208, %s209
      %p220 = scmp.eq.s32.totalorder %s27, 0
      %p221 = por %p219, %p220
      %p222 = scmp.ne.s32.totalorder %s208, %s209
      %p223 = scmp.eq.s32.totalorder %s28, 1
      %p224 = por %p222, %p223
      %p226 = scmp.ne.s32.totalorder %s209, %s225
      %p227 = scmp.eq.s32.totalorder %s28, 0
      %p228 = por %p226, %p227
      %p229 = scmp.le.s32.totalorder 1, %s22
      %p230 = scmp.lt.s32.totalorder %s22, 3
      %p231 = pnand %p229, %p230
      %p232 = pneg %p231
      // Predicated region
      $region9: #{tpu_custom_call.1} parent=5 // pred_check
        _
      $region10: #{tpu_custom_call.1} parent=5 // pred_check_branch
        %234 = sbr.rel (%p231) target = $region12
      $region11: #{tpu_custom_call.1} parent=5 // pred_region
        %s235 = ssub.s32 %s22, 1
        // Predicated region
        $region13: #{tpu_custom_call.1} parent=11 // pred_check
          %p236 = pneg %p69
        $region14: #{tpu_custom_call.1} parent=11 // pred_check_branch
          %238 = sbr.rel (%p236) target = $region16
        $region15: #{tpu_custom_call.1} parent=11 // pred_region
          %s240 = ssub.s32 512, 512
          %241 = vsyncadd [#allocation6], %s240
          %s242 = sshll.u32 [#allocation5], 4
          %s243 = int_to_ptr.vmem [resolvable:$true] %s242
          %248 = dma.hbm_to_vmem [thread:$0]  %s1, 512, %s243, [#allocation6], 128, 128, 8
        $region16: #{tpu_custom_call.1} parent=11 // pred_fallthru
          _
        // Predicated region
        $region17: #{tpu_custom_call.1} parent=11 // pred_check
          %p249 = pneg %p90
        $region18: #{tpu_custom_call.1} parent=11 // pred_check_branch
          %251 = sbr.rel (%p249) target = $region20
        $region19: #{tpu_custom_call.1} parent=11 // pred_region
          _
        $region20: #{tpu_custom_call.1} parent=11 // pred_fallthru
          _
        // Predicated region
        $region21: #{tpu_custom_call.1} parent=11 // pred_check
          %p252 = pneg %p111
        $region22: #{tpu_custom_call.1} parent=11 // pred_check_branch
          %254 = sbr.rel (%p252) target = $region24
        $region23: #{tpu_custom_call.1} parent=11 // pred_region
          %s256 = ssub.s32 1024, 1024
          %257 = vsyncadd [#allocation6], %s256
          %s258 = sshll.u32 [#allocation7], 4
          %s259 = int_to_ptr.vmem [resolvable:$true] %s258
          %264 = dma.hbm_to_vmem [thread:$0]  %s3, 1024, %s259, [#allocation6], 128, 128, 8
        $region24: #{tpu_custom_call.1} parent=11 // pred_fallthru
          _
        // Predicated region
        $region25: #{tpu_custom_call.1} parent=11 // pred_check
          %p265 = pneg %p132
        $region26: #{tpu_custom_call.1} parent=11 // pred_check_branch
          %267 = sbr.rel (%p265) target = $region28
        $region27: #{tpu_custom_call.1} parent=11 // pred_region
          _
        $region28: #{tpu_custom_call.1} parent=11 // pred_fallthru
          _
        // Predicated region
        $region29: #{tpu_custom_call.1} parent=11 // pred_check
          %p268 = pneg %p153
        $region30: #{tpu_custom_call.1} parent=11 // pred_check_branch
          %270 = sbr.rel (%p268) target = $region32
        $region31: #{tpu_custom_call.1} parent=11 // pred_region
          %s272 = ssub.s32 1024, 1024
          %273 = vsyncadd [#allocation9], %s272
          %s274 = sshll.u32 [#allocation8], 4
          %s275 = int_to_ptr.vmem [resolvable:$true] %s274
          %280 = dma.hbm_to_vmem [thread:$0]  %s5, 1024, %s275, [#allocation9], 128, 128, 8
        $region32: #{tpu_custom_call.1} parent=11 // pred_fallthru
          _
        // Predicated region
        $region33: #{tpu_custom_call.1} parent=11 // pred_check
          %p281 = pneg %p174
        $region34: #{tpu_custom_call.1} parent=11 // pred_check_branch
          %283 = sbr.rel (%p281) target = $region36
        $region35: #{tpu_custom_call.1} parent=11 // pred_region
          _
        $region36: #{tpu_custom_call.1} parent=11 // pred_fallthru
          _
        // Predicated region
        $region37: #{tpu_custom_call.1} parent=11 // pred_check
          %p284 = pneg %p195
        $region38: #{tpu_custom_call.1} parent=11 // pred_check_branch
          %286 = sbr.rel (%p284) target = $region40
        $region39: #{tpu_custom_call.1} parent=11 // pred_region
          %s288 = ssub.s32 1024, 1024
          %289 = vsyncadd [#allocation9], %s288
          %s290 = sshll.u32 [#allocation10], 4
          %s291 = int_to_ptr.vmem [resolvable:$true] %s290
          %296 = dma.hbm_to_vmem [thread:$0]  %s7, 1024, %s291, [#allocation9], 128, 128, 8
        $region40: #{tpu_custom_call.1} parent=11 // pred_fallthru
          _
      $region12: #{tpu_custom_call.1} parent=5 // pred_fallthru
        _
      %p297 = scmp.lt.s32.totalorder %s22, 2
      // Predicated region
      $region41: #{tpu_custom_call.1} parent=5 // pred_check
        %p298 = pneg %p297
      $region42: #{tpu_custom_call.1} parent=5 // pred_check_branch
        %300 = sbr.rel (%p298) target = $region44
      $region43: #{tpu_custom_call.1} parent=5 // pred_region
        // Predicated region
        $region45: #{tpu_custom_call.1} parent=43 // pred_check
          %p301 = pneg %p42
        $region46: #{tpu_custom_call.1} parent=43 // pred_check_branch
          %303 = sbr.rel (%p301) target = $region48
        $region47: #{tpu_custom_call.1} parent=43 // pred_region
          %s304 = sand.u32 %s32, 1
          %s305 = scalar_lea.sflag [#allocation3], %s304
          %s306 = sand.u32 %s32, 1
          %s307 = smul.addr %s306, 16
          %s308 = scalar_lea.vmem [#allocation2], %s307
          %s310 = ssub.s32 256, 256
          %311 = vsyncadd %s305, %s310
          %s312 = smul.addr %s22, 2
          %s313 = smul.addr %s312, 128
          %s314 = scalar_lea.hbm %s0, %s313
          %s315 = sshll.u32 %s308, 4
          %s316 = int_to_ptr.vmem [resolvable:$true] %s315
          %321 = dma.hbm_to_vmem [thread:$0]  %s314, 256, %s316, %s305, 128, 128, 8
        $region48: #{tpu_custom_call.1} parent=43 // pred_fallthru
          _
      $region44: #{tpu_custom_call.1} parent=5 // pred_fallthru
        _
      %p322 = scmp.le.s32.totalorder 1, %s22
      %p323 = scmp.lt.s32.totalorder %s22, 3
      %p324 = pnand %p322, %p323
      %p325 = pneg %p324
      // Predicated region
      $region49: #{tpu_custom_call.1} parent=5 // pred_check
        _
      $region50: #{tpu_custom_call.1} parent=5 // pred_check_branch
        %327 = sbr.rel (%p324) target = $region52
      $region51: #{tpu_custom_call.1} parent=5 // pred_region
        %s328 = ssub.s32 %s22, 1
        %s329 = sand.u32 %s35, 1
        %s330 = scalar_lea.sflag [#allocation3], %s329
        %s331 = sand.u32 %s35, 1
        %s332 = smul.addr %s331, 16
        %s333 = scalar_lea.vmem [#allocation2], %s332
        // Predicated region
        $region53: #{tpu_custom_call.1} parent=51 // pred_check
          %p334 = pneg %p48
        $region54: #{tpu_custom_call.1} parent=51 // pred_check_branch
          %336 = sbr.rel (%p334) target = $region56
        $region55: #{tpu_custom_call.1} parent=51 // pred_region
          %337 = dma.done %s330, 256
        $region56: #{tpu_custom_call.1} parent=51 // pred_fallthru
          _
        // Predicated region
        $region57: #{tpu_custom_call.1} parent=51 // pred_check
          %p338 = pneg %p69
        $region58: #{tpu_custom_call.1} parent=51 // pred_check_branch
          %340 = sbr.rel (%p338) target = $region60
        $region59: #{tpu_custom_call.1} parent=51 // pred_region
          %341 = dma.done [#allocation6], 512
        $region60: #{tpu_custom_call.1} parent=51 // pred_fallthru
          _
        // Predicated region
        $region61: #{tpu_custom_call.1} parent=51 // pred_check
          %p342 = pneg %p111
        $region62: #{tpu_custom_call.1} parent=51 // pred_check_branch
          %344 = sbr.rel (%p342) target = $region64
        $region63: #{tpu_custom_call.1} parent=51 // pred_region
          %345 = dma.done [#allocation6], 1024
        $region64: #{tpu_custom_call.1} parent=51 // pred_fallthru
          _
        // Predicated region
        $region65: #{tpu_custom_call.1} parent=51 // pred_check
          %p346 = pneg %p153
        $region66: #{tpu_custom_call.1} parent=51 // pred_check_branch
          %348 = sbr.rel (%p346) target = $region68
        $region67: #{tpu_custom_call.1} parent=51 // pred_region
          %349 = dma.done [#allocation9], 1024
        $region68: #{tpu_custom_call.1} parent=51 // pred_fallthru
          _
        // Predicated region
        $region69: #{tpu_custom_call.1} parent=51 // pred_check
          %p350 = pneg %p195
        $region70: #{tpu_custom_call.1} parent=51 // pred_check_branch
          %352 = sbr.rel (%p350) target = $region72
        $region71: #{tpu_custom_call.1} parent=51 // pred_region
          %353 = dma.done [#allocation9], 1024
        $region72: #{tpu_custom_call.1} parent=51 // pred_fallthru
          _
        %s354 = sand.u32 %s35, 1
        %s355 = scalar_lea.sflag [#allocation3], %s354
        %s356 = sand.u32 %s35, 1
        %s357 = smul.addr %s356, 16
        %s358 = scalar_lea.vmem [#allocation2], %s357
        %p359 = pneg %p48
        %p360 = pneg %p45
        %p361 = pneg %p69
        %p362 = pneg %p66
        %p363 = pneg %p90
        %p364 = pneg %p87
        %p365 = pneg %p111
        %p366 = pneg %p108
        %p367 = pneg %p132
        %p368 = pneg %p129
        %p369 = pneg %p153
        %p370 = pneg %p150
        %p371 = pneg %p174
        %p372 = pneg %p171
        %p373 = pneg %p195
        %p374 = pneg %p192
        %p375 = pneg %p221
        %p376 = pneg %p218
        %s377 = sand.u32 %s208, 1
        %s378 = scalar_lea.sflag [#allocation4], %s377
        %s379 = sand.u32 %s208, 1
        %s380 = smul.addr %s379, 16
        %s381 = scalar_lea.vmem [#allocation11], %s380
        %v382 = vld [vmem:[%s333] sm:$0xff]
        %v383 = vld [vmem:[%s333 + $0x8] sm:$0xff]
        %v384 = vld [vmem:[#allocation5] sm:$0xff]
        %v385 = vld [vmem:[#allocation5 + $0x8] sm:$0xff]
        %v386 = vld [vmem:[#allocation5 + $0x10] sm:$0xff]
        %v387 = vld [vmem:[#allocation5 + $0x18] sm:$0xff]
        %vm388 = vcmask 261120
        %v390 = vsel %vm388, %v382, 0
        %v393 = vsel %vm388, %v383, 0
        %395 = vmatprep.subr.mxu0 0.0
        %396 = vmatpush1.msra.mxu0 %v384
        %397 = vmatprep.subr.mxu0 0.0
        %398 = vmatpush1.msra.mxu0 %v385
        %399 = vmatprep.subr.mxu0 0.0
        %400 = vmatpush1.msra.mxu0 %v386
        %401 = vmatprep.subr.mxu0 0.0
        %402 = vmatpush1.msra.mxu0 %v387
        %403 = vmatprep.subr.mxu0 0.0
        %404 = vmatpush1.msra.mxu0 0.0
        %405 = vmatprep.subr.mxu0 0.0
        %406 = vmatpush1.msra.mxu0 0.0
        %407 = vmatprep.subr.mxu0 0.0
        %408 = vmatpush1.msra.mxu0 0.0
        %409 = vmatprep.subr.mxu0 0.0
        %410 = vmatpush1.msra.mxu0 0.0
        %411 = vmatprep.subr.mxu0 0.0
        %412 = vmatpush1.msra.mxu0 0.0
        %413 = vmatprep.subr.mxu0 0.0
        %414 = vmatpush1.msra.mxu0 0.0
        %415 = vmatprep.subr.mxu0 0.0
        %416 = vmatpush1.msra.mxu0 0.0
        %417 = vmatprep.subr.mxu0 0.0
        %418 = vmatpush1.msra.mxu0 0.0
        %419 = vmatprep.subr.mxu0 0.0
        %420 = vmatpush1.msra.mxu0 0.0
        %421 = vmatprep.subr.mxu0 0.0
        %422 = vmatpush1.msra.mxu0 0.0
        %423 = vmatprep.subr.mxu0 0.0
        %424 = vmatpush1.msra.mxu0 0.0
        %425 = vmatprep.subr.mxu0 0.0
        %426 = vmatpush1.msra.mxu0 0.0
        %427 = vmatprep.subr.mxu0 0.0
        %428 = vmatpush1.msra.mxu0 0.0
        %429 = vmatprep.subr.mxu0 0.0
        %430 = vmatpush1.msra.mxu0 0.0
        %431 = vmatprep.subr.mxu0 0.0
        %432 = vmatpush1.msra.mxu0 0.0
        %433 = vmatprep.subr.mxu0 0.0
        %434 = vmatpush1.msra.mxu0 0.0
        %435 = vmatprep.subr.mxu0 0.0
        %436 = vmatpush1.msra.mxu0 0.0
        %437 = vmatprep.subr.mxu0 0.0
        %438 = vmatpush1.msra.mxu0 0.0
        %439 = vmatprep.subr.mxu0 0.0
        %440 = vmatpush1.msra.mxu0 0.0
        %441 = vmatprep.subr.mxu0 0.0
        %442 = vmatpush1.msra.mxu0 0.0
        %443 = vmatprep.subr.mxu0 0.0
        %444 = vmatpush1.msra.mxu0 0.0
        %445 = vmatprep.subr.mxu0 0.0
        %446 = vmatpush1.msra.mxu0 0.0
        %447 = vmatprep.subr.mxu0 0.0
        %448 = vmatpush1.msra.mxu0 0.0
        %449 = vmatprep.subr.mxu0 0.0
        %450 = vmatpush1.msra.mxu0 0.0
        %451 = vmatprep.subr.mxu0 0.0
        %452 = vmatpush1.msra.mxu0 0.0
        %453 = vmatprep.subr.mxu0 0.0
        %454 = vmatpush1.msra.mxu0 0.0
        %455 = vmatprep.subr.mxu0 0.0
        %456 = vmatpush1.msra.mxu0 0.0
        %457 = vmatprep.subr.mxu0 0.0
        %458 = vmatpush1.msra.mxu0 0.0
        %459 = vmatprep.mubr.f32.mxu0 0.0
        %460 = vmatmul.mubr.f32.gmra.mrb[0].mxu0 %v390
        %v461 = vpop.f32.mrb[0].mxu0
        %v462 = vadd.f32 0.0, %v461
        %v463 = vpop.f32.mrb[0].mxu0
        %464 = vmatprep.mubr.f32.mxu0 0.0
        %465 = vmatmul.mubr.f32.gmra.mrb[0].mxu0 %v393
        %v466 = vpop.f32.mrb[0].mxu0
        %v467 = vadd.f32 0.0, %v466
        %v468 = vpop.f32.mrb[0].mxu0
        %469 = vdwg.mxu0
        %v470 = vadd.f32 %v382, %v462
        %v471 = vadd.f32 %v383, %v467
        %v472 = vld [vmem:[%s2] sm:$0x1]
        %v474 = vlaneseq
        %v475 = vshrl.u32 %v474, 7
        %v476 = vsub.s32 0, %v475
        %v477 = vrot.slane %v472, %v476
        %v479 = vadd.f32 %v470, %v477
        %v480 = vadd.f32 %v471, %v477
        %v481 = vld [vmem:[#allocation7] sm:$0xff]
        %v482 = vld [vmem:[#allocation7 + $0x8] sm:$0xff]
        %v483 = vld [vmem:[#allocation7 + $0x10] sm:$0xff]
        %v484 = vld [vmem:[#allocation7 + $0x18] sm:$0xff]
        %v485 = vld [vmem:[%s4] sm:$0x1]
        %v487 = vlaneseq
        %v488 = vshrl.u32 %v487, 7
        %v489 = vsub.s32 0, %v488
        %v490 = vrot.slane %v485, %v489
        %v493 = vsel %vm388, %v479, 0
        %v496 = vsel %vm388, %v480, 0
        %498 = vmatprep.subr.mxu0 0.0
        %499 = vmatpush1.msra.mxu0 %v481
        %500 = vmatprep.subr.mxu0 0.0
        %501 = vmatpush1.msra.mxu0 %v482
        %502 = vmatprep.subr.mxu0 0.0
        %503 = vmatpush1.msra.mxu0 %v483
        %504 = vmatprep.subr.mxu0 0.0
        %505 = vmatpush1.msra.mxu0 %v484
        %506 = vmatprep.subr.mxu0 0.0
        %507 = vmatpush1.msra.mxu0 0.0
        %508 = vmatprep.subr.mxu0 0.0
        %509 = vmatpush1.msra.mxu0 0.0
        %510 = vmatprep.subr.mxu0 0.0
        %511 = vmatpush1.msra.mxu0 0.0
        %512 = vmatprep.subr.mxu0 0.0
        %513 = vmatpush1.msra.mxu0 0.0
        %514 = vmatprep.subr.mxu0 0.0
        %515 = vmatpush1.msra.mxu0 0.0
        %516 = vmatprep.subr.mxu0 0.0
        %517 = vmatpush1.msra.mxu0 0.0
        %518 = vmatprep.subr.mxu0 0.0
        %519 = vmatpush1.msra.mxu0 0.0
        %520 = vmatprep.subr.mxu0 0.0
        %521 = vmatpush1.msra.mxu0 0.0
        %522 = vmatprep.subr.mxu0 0.0
        %523 = vmatpush1.msra.mxu0 0.0
        %524 = vmatprep.subr.mxu0 0.0
        %525 = vmatpush1.msra.mxu0 0.0
        %526 = vmatprep.subr.mxu0 0.0
        %527 = vmatpush1.msra.mxu0 0.0
        %528 = vmatprep.subr.mxu0 0.0
        %529 = vmatpush1.msra.mxu0 0.0
        %530 = vmatprep.subr.mxu0 0.0
        %531 = vmatpush1.msra.mxu0 0.0
        %532 = vmatprep.subr.mxu0 0.0
        %533 = vmatpush1.msra.mxu0 0.0
        %534 = vmatprep.subr.mxu0 0.0
        %535 = vmatpush1.msra.mxu0 0.0
        %536 = vmatprep.subr.mxu0 0.0
        %537 = vmatpush1.msra.mxu0 0.0
        %538 = vmatprep.subr.mxu0 0.0
        %539 = vmatpush1.msra.mxu0 0.0
        %540 = vmatprep.subr.mxu0 0.0
        %541 = vmatpush1.msra.mxu0 0.0
        %542 = vmatprep.subr.mxu0 0.0
        %543 = vmatpush1.msra.mxu0 0.0
        %544 = vmatprep.subr.mxu0 0.0
        %545 = vmatpush1.msra.mxu0 0.0
        %546 = vmatprep.subr.mxu0 0.0
        %547 = vmatpush1.msra.mxu0 0.0
        %548 = vmatprep.subr.mxu0 0.0
        %549 = vmatpush1.msra.mxu0 0.0
        %550 = vmatprep.subr.mxu0 0.0
        %551 = vmatpush1.msra.mxu0 0.0
        %552 = vmatprep.subr.mxu0 0.0
        %553 = vmatpush1.msra.mxu0 0.0
        %554 = vmatprep.subr.mxu0 0.0
        %555 = vmatpush1.msra.mxu0 0.0
        %556 = vmatprep.subr.mxu0 0.0
        %557 = vmatpush1.msra.mxu0 0.0
        %558 = vmatprep.subr.mxu0 0.0
        %559 = vmatpush1.msra.mxu0 0.0
        %560 = vmatprep.subr.mxu0 0.0
        %561 = vmatpush1.msra.mxu0 0.0
        %562 = vmatprep.mubr.f32.mxu0 0.0
        %563 = vmatmul.mubr.f32.gmra.mrb[0].mxu0 %v493
        %v564 = vpop.f32.mrb[0].mxu0
        %v565 = vadd.f32 %v490, %v564
        %v566 = vpop.f32.mrb[0].mxu0
        %567 = vmatprep.mubr.f32.mxu0 0.0
        %568 = vmatmul.mubr.f32.gmra.mrb[0].mxu0 %v496
        %v569 = vpop.f32.mrb[0].mxu0
        %v570 = vadd.f32 %v490, %v569
        %v571 = vpop.f32.mrb[0].mxu0
        %572 = vdwg.mxu0
        %575 = vrot.lane.b32.xlu0 %v565, 96
        %v576 = vpop.permute.xlu0 %575
        %577 = vrot.lane.b32.xlu0 %v570, 96
        %v578 = vpop.permute.xlu0 %577
        %vm579 = vcmask 64512
        %v580 = vsel %vm579, %v565, 0
        %v582 = vsel %vm579, %v570, 0
        %v584 = vsel %vm579, %v576, 0
        %v586 = vsel %vm579, %v578, 0
        %588 = vmatprep.subr.mxu0 0.0
        %589 = vmatpush1.xpose.msra.mxu0 %v584
        %590 = vmatprep.subr.mxu0 0.0
        %591 = vmatpush1.xpose.msra.mxu0 %v586
        %592 = vmatprep.subr.mxu0 0.0
        %593 = vmatpush1.xpose.msra.mxu0 0.0
        %594 = vmatprep.subr.mxu0 0.0
        %595 = vmatpush1.xpose.msra.mxu0 0.0
        %596 = vmatprep.subr.mxu0 0.0
        %597 = vmatpush1.xpose.msra.mxu0 0.0
        %598 = vmatprep.subr.mxu0 0.0
        %599 = vmatpush1.xpose.msra.mxu0 0.0
        %600 = vmatprep.subr.mxu0 0.0
        %601 = vmatpush1.xpose.msra.mxu0 0.0
        %602 = vmatprep.subr.mxu0 0.0
        %603 = vmatpush1.xpose.msra.mxu0 0.0
        %604 = vmatprep.subr.mxu0 0.0
        %605 = vmatpush1.xpose.msra.mxu0 0.0
        %606 = vmatprep.subr.mxu0 0.0
        %607 = vmatpush1.xpose.msra.mxu0 0.0
        %608 = vmatprep.subr.mxu0 0.0
        %609 = vmatpush1.xpose.msra.mxu0 0.0
        %610 = vmatprep.subr.mxu0 0.0
        %611 = vmatpush1.xpose.msra.mxu0 0.0
        %612 = vmatprep.subr.mxu0 0.0
        %613 = vmatpush1.xpose.msra.mxu0 0.0
        %614 = vmatprep.subr.mxu0 0.0
        %615 = vmatpush1.xpose.msra.mxu0 0.0
        %616 = vmatprep.subr.mxu0 0.0
        %617 = vmatpush1.xpose.msra.mxu0 0.0
        %618 = vmatprep.subr.mxu0 0.0
        %619 = vmatpush1.xpose.msra.mxu0 0.0
        %620 = vmatprep.subr.mxu0 0.0
        %621 = vmatpush1.xpose.msra.mxu0 0.0
        %622 = vmatprep.subr.mxu0 0.0
        %623 = vmatpush1.xpose.msra.mxu0 0.0
        %624 = vmatprep.subr.mxu0 0.0
        %625 = vmatpush1.xpose.msra.mxu0 0.0
        %626 = vmatprep.subr.mxu0 0.0
        %627 = vmatpush1.xpose.msra.mxu0 0.0
        %628 = vmatprep.subr.mxu0 0.0
        %629 = vmatpush1.xpose.msra.mxu0 0.0
        %630 = vmatprep.subr.mxu0 0.0
        %631 = vmatpush1.xpose.msra.mxu0 0.0
        %632 = vmatprep.subr.mxu0 0.0
        %633 = vmatpush1.xpose.msra.mxu0 0.0
        %634 = vmatprep.subr.mxu0 0.0
        %635 = vmatpush1.xpose.msra.mxu0 0.0
        %636 = vmatprep.subr.mxu0 0.0
        %637 = vmatpush1.xpose.msra.mxu0 0.0
        %638 = vmatprep.subr.mxu0 0.0
        %639 = vmatpush1.xpose.msra.mxu0 0.0
        %640 = vmatprep.subr.mxu0 0.0
        %641 = vmatpush1.xpose.msra.mxu0 0.0
        %642 = vmatprep.subr.mxu0 0.0
        %643 = vmatpush1.xpose.msra.mxu0 0.0
        %644 = vmatprep.subr.mxu0 0.0
        %645 = vmatpush1.xpose.msra.mxu0 0.0
        %646 = vmatprep.subr.mxu0 0.0
        %647 = vmatpush1.xpose.msra.mxu0 0.0
        %648 = vmatprep.subr.mxu0 0.0
        %649 = vmatpush1.xpose.msra.mxu0 0.0
        %650 = vmatprep.subr.mxu0 0.0
        %651 = vmatpush1.xpose.msra.mxu0 0.0
        %652 = vmatprep.mubr.f32.mxu0 0.0
        %653 = vmatmul.mubr.f32.gmra.mrb[0].mxu0 %v580
        %v654 = vpop.f32.mrb[0].mxu0
        %v655 = vadd.f32 0.0, %v654
        %v656 = vpop.f32.mrb[0].mxu0
        %657 = vmatprep.mubr.f32.mxu0 0.0
        %658 = vmatmul.mubr.f32.gmra.mrb[0].mxu0 %v582
        %v659 = vpop.f32.mrb[0].mxu0
        %v660 = vadd.f32 0.0, %v659
        %v661 = vpop.f32.mrb[0].mxu0
        %662 = vdwg.mxu0
        %v663 = vmul.f32 %v655, 0.35355338
        %v664 = vmul.f32 %v660, 0.35355338
        %vm665 = vcmask 130048
        %v666 = vsel %vm665, %v663, -inf
        %667 = vmax.xlane.f32.xlu0 %v666
        %v668 = vpop.xlane.xlu0 %667
        %v669 = vsel %vm665, %v664, -inf
        %670 = vmax.xlane.f32.xlu0 %v669
        %v671 = vpop.xlane.xlu0 %670
        %v672 = vsub.f32 %v663, %v668
        %v673 = vsub.f32 %v664, %v671
        %v674 = vmul.f32 %v672, 1.442695
        %v675 = vpow.pop %v674
        %v676 = vmul.f32 %v673, 1.442695
        %v677 = vpow.pop %v676
        %v678 = vsel %vm665, %v675, 0.0
        %679 = vadd.xlane.f32.xlu0 %v678
        %v680 = vpop.xlane.xlu0 %679
        %v681 = vsel %vm665, %v677, 0.0
        %682 = vadd.xlane.f32.xlu0 %v681
        %v683 = vpop.xlane.xlu0 %682
        %v684 = vrcp.pop %v680
        %v685 = vrcp.pop %v683
        %v686 = vmul.f32 %v675, %v684
        %v687 = vmul.f32 %v677, %v685
        %688 = vrot.lane.b32.xlu0 %v565, 64
        %v689 = vpop.permute.xlu0 %688
        %690 = vrot.lane.b32.xlu0 %v570, 64
        %v691 = vpop.permute.xlu0 %690
        %v695 = vsel %vm665, %v686, 0
        %v698 = vsel %vm665, %v687, 0
        %700 = vmatprep.subr.mxu0 0.0
        %701 = vmatpush1.msra.mxu0 %v689
        %702 = vmatprep.subr.mxu0 0.0
        %703 = vmatpush1.msra.mxu0 %v691
        %704 = vmatprep.subr.mxu0 0.0
        %705 = vmatpush1.msra.mxu0 0.0
        %706 = vmatprep.subr.mxu0 0.0
        %707 = vmatpush1.msra.mxu0 0.0
        %708 = vmatprep.subr.mxu0 0.0
        %709 = vmatpush1.msra.mxu0 0.0
        %710 = vmatprep.subr.mxu0 0.0
        %711 = vmatpush1.msra.mxu0 0.0
        %712 = vmatprep.subr.mxu0 0.0
        %713 = vmatpush1.msra.mxu0 0.0
        %714 = vmatprep.subr.mxu0 0.0
        %715 = vmatpush1.msra.mxu0 0.0
        %716 = vmatprep.subr.mxu0 0.0
        %717 = vmatpush1.msra.mxu0 0.0
        %718 = vmatprep.subr.mxu0 0.0
        %719 = vmatpush1.msra.mxu0 0.0
        %720 = vmatprep.subr.mxu0 0.0
        %721 = vmatpush1.msra.mxu0 0.0
        %722 = vmatprep.subr.mxu0 0.0
        %723 = vmatpush1.msra.mxu0 0.0
        %724 = vmatprep.subr.mxu0 0.0
        %725 = vmatpush1.msra.mxu0 0.0
        %726 = vmatprep.subr.mxu0 0.0
        %727 = vmatpush1.msra.mxu0 0.0
        %728 = vmatprep.subr.mxu0 0.0
        %729 = vmatpush1.msra.mxu0 0.0
        %730 = vmatprep.subr.mxu0 0.0
        %731 = vmatpush1.msra.mxu0 0.0
        %732 = vmatprep.subr.mxu0 0.0
        %733 = vmatpush1.msra.mxu0 0.0
        %734 = vmatprep.subr.mxu0 0.0
        %735 = vmatpush1.msra.mxu0 0.0
        %736 = vmatprep.subr.mxu0 0.0
        %737 = vmatpush1.msra.mxu0 0.0
        %738 = vmatprep.subr.mxu0 0.0
        %739 = vmatpush1.msra.mxu0 0.0
        %740 = vmatprep.subr.mxu0 0.0
        %741 = vmatpush1.msra.mxu0 0.0
        %742 = vmatprep.subr.mxu0 0.0
        %743 = vmatpush1.msra.mxu0 0.0
        %744 = vmatprep.subr.mxu0 0.0
        %745 = vmatpush1.msra.mxu0 0.0
        %746 = vmatprep.subr.mxu0 0.0
        %747 = vmatpush1.msra.mxu0 0.0
        %748 = vmatprep.subr.mxu0 0.0
        %749 = vmatpush1.msra.mxu0 0.0
        %750 = vmatprep.subr.mxu0 0.0
        %751 = vmatpush1.msra.mxu0 0.0
        %752 = vmatprep.subr.mxu0 0.0
        %753 = vmatpush1.msra.mxu0 0.0
        %754 = vmatprep.subr.mxu0 0.0
        %755 = vmatpush1.msra.mxu0 0.0
        %756 = vmatprep.subr.mxu0 0.0
        %757 = vmatpush1.msra.mxu0 0.0
        %758 = vmatprep.subr.mxu0 0.0
        %759 = vmatpush1.msra.mxu0 0.0
        %760 = vmatprep.subr.mxu0 0.0
        %761 = vmatpush1.msra.mxu0 0.0
        %762 = vmatprep.subr.mxu0 0.0
        %763 = vmatpush1.msra.mxu0 0.0
        %764 = vmatprep.mubr.f32.mxu0 0.0
        %765 = vmatmul.mubr.f32.gmra.mrb[0].mxu0 %v695
        %v766 = vpop.f32.mrb[0].mxu0
        %v767 = vadd.f32 0.0, %v766
        %v768 = vpop.f32.mrb[0].mxu0
        %769 = vmatprep.mubr.f32.mxu0 0.0
        %770 = vmatmul.mubr.f32.gmra.mrb[0].mxu0 %v698
        %v771 = vpop.f32.mrb[0].mxu0
        %v772 = vadd.f32 0.0, %v771
        %v773 = vpop.f32.mrb[0].mxu0
        %774 = vdwg.mxu0
        %775 = vrot.lane.b32.xlu0 %v565, 120
        %v776 = vpop.permute.xlu0 %775
        %777 = vrot.lane.b32.xlu0 %v570, 120
        %v778 = vpop.permute.xlu0 %777
        %779 = vrot.lane.b32.xlu0 %v565, 88
        %v780 = vpop.permute.xlu0 %779
        %781 = vrot.lane.b32.xlu0 %v570, 88
        %v782 = vpop.permute.xlu0 %781
        %v783 = vsel %vm579, %v776, 0
        %v785 = vsel %vm579, %v778, 0
        %v787 = vsel %vm579, %v780, 0
        %v789 = vsel %vm579, %v782, 0
        %791 = vmatprep.subr.mxu0 0.0
        %792 = vmatpush1.xpose.msra.mxu0 %v787
        %793 = vmatprep.subr.mxu0 0.0
        %794 = vmatpush1.xpose.msra.mxu0 %v789
        %795 = vmatprep.subr.mxu0 0.0
        %796 = vmatpush1.xpose.msra.mxu0 0.0
        %797 = vmatprep.subr.mxu0 0.0
        %798 = vmatpush1.xpose.msra.mxu0 0.0
        %799 = vmatprep.subr.mxu0 0.0
        %800 = vmatpush1.xpose.msra.mxu0 0.0
        %801 = vmatprep.subr.mxu0 0.0
        %802 = vmatpush1.xpose.msra.mxu0 0.0
        %803 = vmatprep.subr.mxu0 0.0
        %804 = vmatpush1.xpose.msra.mxu0 0.0
        %805 = vmatprep.subr.mxu0 0.0
        %806 = vmatpush1.xpose.msra.mxu0 0.0
        %807 = vmatprep.subr.mxu0 0.0
        %808 = vmatpush1.xpose.msra.mxu0 0.0
        %809 = vmatprep.subr.mxu0 0.0
        %810 = vmatpush1.xpose.msra.mxu0 0.0
        %811 = vmatprep.subr.mxu0 0.0
        %812 = vmatpush1.xpose.msra.mxu0 0.0
        %813 = vmatprep.subr.mxu0 0.0
        %814 = vmatpush1.xpose.msra.mxu0 0.0
        %815 = vmatprep.subr.mxu0 0.0
        %816 = vmatpush1.xpose.msra.mxu0 0.0
        %817 = vmatprep.subr.mxu0 0.0
        %818 = vmatpush1.xpose.msra.mxu0 0.0
        %819 = vmatprep.subr.mxu0 0.0
        %820 = vmatpush1.xpose.msra.mxu0 0.0
        %821 = vmatprep.subr.mxu0 0.0
        %822 = vmatpush1.xpose.msra.mxu0 0.0
        %823 = vmatprep.subr.mxu0 0.0
        %824 = vmatpush1.xpose.msra.mxu0 0.0
        %825 = vmatprep.subr.mxu0 0.0
        %826 = vmatpush1.xpose.msra.mxu0 0.0
        %827 = vmatprep.subr.mxu0 0.0
        %828 = vmatpush1.xpose.msra.mxu0 0.0
        %829 = vmatprep.subr.mxu0 0.0
        %830 = vmatpush1.xpose.msra.mxu0 0.0
        %831 = vmatprep.subr.mxu0 0.0
        %832 = vmatpush1.xpose.msra.mxu0 0.0
        %833 = vmatprep.subr.mxu0 0.0
        %834 = vmatpush1.xpose.msra.mxu0 0.0
        %835 = vmatprep.subr.mxu0 0.0
        %836 = vmatpush1.xpose.msra.mxu0 0.0
        %837 = vmatprep.subr.mxu0 0.0
        %838 = vmatpush1.xpose.msra.mxu0 0.0
        %839 = vmatprep.subr.mxu0 0.0
        %840 = vmatpush1.xpose.msra.mxu0 0.0
        %841 = vmatprep.subr.mxu0 0.0
        %842 = vmatpush1.xpose.msra.mxu0 0.0
        %843 = vmatprep.subr.mxu0 0.0
        %844 = vmatpush1.xpose.msra.mxu0 0.0
        %845 = vmatprep.subr.mxu0 0.0
        %846 = vmatpush1.xpose.msra.mxu0 0.0
        %847 = vmatprep.subr.mxu0 0.0
        %848 = vmatpush1.xpose.msra.mxu0 0.0
        %849 = vmatprep.subr.mxu0 0.0
        %850 = vmatpush1.xpose.msra.mxu0 0.0
        %851 = vmatprep.subr.mxu0 0.0
        %852 = vmatpush1.xpose.msra.mxu0 0.0
        %853 = vmatprep.subr.mxu0 0.0
        %854 = vmatpush1.xpose.msra.mxu0 0.0
        %855 = vmatprep.mubr.f32.mxu0 0.0
        %856 = vmatmul.mubr.f32.gmra.mrb[0].mxu0 %v783
        %v857 = vpop.f32.mrb[0].mxu0
        %v858 = vadd.f32 0.0, %v857
        %v859 = vpop.f32.mrb[0].mxu0
        %860 = vmatprep.mubr.f32.mxu0 0.0
        %861 = vmatmul.mubr.f32.gmra.mrb[0].mxu0 %v785
        %v862 = vpop.f32.mrb[0].mxu0
        %v863 = vadd.f32 0.0, %v862
        %v864 = vpop.f32.mrb[0].mxu0
        %865 = vdwg.mxu0
        %v866 = vmul.f32 %v858, 0.35355338
        %v867 = vmul.f32 %v863, 0.35355338
        %v868 = vsel %vm665, %v866, -inf
        %869 = vmax.xlane.f32.xlu0 %v868
        %v870 = vpop.xlane.xlu0 %869
        %v871 = vsel %vm665, %v867, -inf
        %872 = vmax.xlane.f32.xlu0 %v871
        %v873 = vpop.xlane.xlu0 %872
        %v874 = vsub.f32 %v866, %v870
        %v875 = vsub.f32 %v867, %v873
        %v876 = vmul.f32 %v874, 1.442695
        %v877 = vpow.pop %v876
        %v878 = vmul.f32 %v875, 1.442695
        %v879 = vpow.pop %v878
        %v880 = vsel %vm665, %v877, 0.0
        %881 = vadd.xlane.f32.xlu0 %v880
        %v882 = vpop.xlane.xlu0 %881
        %v883 = vsel %vm665, %v879, 0.0
        %884 = vadd.xlane.f32.xlu0 %v883
        %v885 = vpop.xlane.xlu0 %884
        %v886 = vrcp.pop %v882
        %v887 = vrcp.pop %v885
        %v888 = vmul.f32 %v877, %v886
        %v889 = vmul.f32 %v879, %v887
        %890 = vrot.lane.b32.xlu0 %v565, 56
        %v891 = vpop.permute.xlu0 %890
        %892 = vrot.lane.b32.xlu0 %v570, 56
        %v893 = vpop.permute.xlu0 %892
        %v897 = vsel %vm665, %v888, 0
        %v900 = vsel %vm665, %v889, 0
        %902 = vmatprep.subr.mxu0 0.0
        %903 = vmatpush1.msra.mxu0 %v891
        %904 = vmatprep.subr.mxu0 0.0
        %905 = vmatpush1.msra.mxu0 %v893
        %906 = vmatprep.subr.mxu0 0.0
        %907 = vmatpush1.msra.mxu0 0.0
        %908 = vmatprep.subr.mxu0 0.0
        %909 = vmatpush1.msra.mxu0 0.0
        %910 = vmatprep.subr.mxu0 0.0
        %911 = vmatpush1.msra.mxu0 0.0
        %912 = vmatprep.subr.mxu0 0.0
        %913 = vmatpush1.msra.mxu0 0.0
        %914 = vmatprep.subr.mxu0 0.0
        %915 = vmatpush1.msra.mxu0 0.0
        %916 = vmatprep.subr.mxu0 0.0
        %917 = vmatpush1.msra.mxu0 0.0
        %918 = vmatprep.subr.mxu0 0.0
        %919 = vmatpush1.msra.mxu0 0.0
        %920 = vmatprep.subr.mxu0 0.0
        %921 = vmatpush1.msra.mxu0 0.0
        %922 = vmatprep.subr.mxu0 0.0
        %923 = vmatpush1.msra.mxu0 0.0
        %924 = vmatprep.subr.mxu0 0.0
        %925 = vmatpush1.msra.mxu0 0.0
        %926 = vmatprep.subr.mxu0 0.0
        %927 = vmatpush1.msra.mxu0 0.0
        %928 = vmatprep.subr.mxu0 0.0
        %929 = vmatpush1.msra.mxu0 0.0
        %930 = vmatprep.subr.mxu0 0.0
        %931 = vmatpush1.msra.mxu0 0.0
        %932 = vmatprep.subr.mxu0 0.0
        %933 = vmatpush1.msra.mxu0 0.0
        %934 = vmatprep.subr.mxu0 0.0
        %935 = vmatpush1.msra.mxu0 0.0
        %936 = vmatprep.subr.mxu0 0.0
        %937 = vmatpush1.msra.mxu0 0.0
        %938 = vmatprep.subr.mxu0 0.0
        %939 = vmatpush1.msra.mxu0 0.0
        %940 = vmatprep.subr.mxu0 0.0
        %941 = vmatpush1.msra.mxu0 0.0
        %942 = vmatprep.subr.mxu0 0.0
        %943 = vmatpush1.msra.mxu0 0.0
        %944 = vmatprep.subr.mxu0 0.0
        %945 = vmatpush1.msra.mxu0 0.0
        %946 = vmatprep.subr.mxu0 0.0
        %947 = vmatpush1.msra.mxu0 0.0
        %948 = vmatprep.subr.mxu0 0.0
        %949 = vmatpush1.msra.mxu0 0.0
        %950 = vmatprep.subr.mxu0 0.0
        %951 = vmatpush1.msra.mxu0 0.0
        %952 = vmatprep.subr.mxu0 0.0
        %953 = vmatpush1.msra.mxu0 0.0
        %954 = vmatprep.subr.mxu0 0.0
        %955 = vmatpush1.msra.mxu0 0.0
        %956 = vmatprep.subr.mxu0 0.0
        %957 = vmatpush1.msra.mxu0 0.0
        %958 = vmatprep.subr.mxu0 0.0
        %959 = vmatpush1.msra.mxu0 0.0
        %960 = vmatprep.subr.mxu0 0.0
        %961 = vmatpush1.msra.mxu0 0.0
        %962 = vmatprep.subr.mxu0 0.0
        %963 = vmatpush1.msra.mxu0 0.0
        %964 = vmatprep.subr.mxu0 0.0
        %965 = vmatpush1.msra.mxu0 0.0
        %966 = vmatprep.mubr.f32.mxu0 0.0
        %967 = vmatmul.mubr.f32.gmra.mrb[0].mxu0 %v897
        %v968 = vpop.f32.mrb[0].mxu0
        %v969 = vadd.f32 0.0, %v968
        %v970 = vpop.f32.mrb[0].mxu0
        %971 = vmatprep.mubr.f32.mxu0 0.0
        %972 = vmatmul.mubr.f32.gmra.mrb[0].mxu0 %v900
        %v973 = vpop.f32.mrb[0].mxu0
        %v974 = vadd.f32 0.0, %v973
        %v975 = vpop.f32.mrb[0].mxu0
        %976 = vdwg.mxu0
        %977 = vrot.lane.b32.xlu0 %v565, 112
        %v978 = vpop.permute.xlu0 %977
        %979 = vrot.lane.b32.xlu0 %v570, 112
        %v980 = vpop.permute.xlu0 %979
        %981 = vrot.lane.b32.xlu0 %v565, 80
        %v982 = vpop.permute.xlu0 %981
        %983 = vrot.lane.b32.xlu0 %v570, 80
        %v984 = vpop.permute.xlu0 %983
        %v985 = vsel %vm579, %v978, 0
        %v987 = vsel %vm579, %v980, 0
        %v989 = vsel %vm579, %v982, 0
        %v991 = vsel %vm579, %v984, 0
        %993 = vmatprep.subr.mxu0 0.0
        %994 = vmatpush1.xpose.msra.mxu0 %v989
        %995 = vmatprep.subr.mxu0 0.0
        %996 = vmatpush1.xpose.msra.mxu0 %v991
        %997 = vmatprep.subr.mxu0 0.0
        %998 = vmatpush1.xpose.msra.mxu0 0.0
        %999 = vmatprep.subr.mxu0 0.0
        %1000 = vmatpush1.xpose.msra.mxu0 0.0
        %1001 = vmatprep.subr.mxu0 0.0
        %1002 = vmatpush1.xpose.msra.mxu0 0.0
        %1003 = vmatprep.subr.mxu0 0.0
        %1004 = vmatpush1.xpose.msra.mxu0 0.0
        %1005 = vmatprep.subr.mxu0 0.0
        %1006 = vmatpush1.xpose.msra.mxu0 0.0
        %1007 = vmatprep.subr.mxu0 0.0
        %1008 = vmatpush1.xpose.msra.mxu0 0.0
        %1009 = vmatprep.subr.mxu0 0.0
        %1010 = vmatpush1.xpose.msra.mxu0 0.0
        %1011 = vmatprep.subr.mxu0 0.0
        %1012 = vmatpush1.xpose.msra.mxu0 0.0
        %1013 = vmatprep.subr.mxu0 0.0
        %1014 = vmatpush1.xpose.msra.mxu0 0.0
        %1015 = vmatprep.subr.mxu0 0.0
        %1016 = vmatpush1.xpose.msra.mxu0 0.0
        %1017 = vmatprep.subr.mxu0 0.0
        %1018 = vmatpush1.xpose.msra.mxu0 0.0
        %1019 = vmatprep.subr.mxu0 0.0
        %1020 = vmatpush1.xpose.msra.mxu0 0.0
        %1021 = vmatprep.subr.mxu0 0.0
        %1022 = vmatpush1.xpose.msra.mxu0 0.0
        %1023 = vmatprep.subr.mxu0 0.0
        %1024 = vmatpush1.xpose.msra.mxu0 0.0
        %1025 = vmatprep.subr.mxu0 0.0
        %1026 = vmatpush1.xpose.msra.mxu0 0.0
        %1027 = vmatprep.subr.mxu0 0.0
        %1028 = vmatpush1.xpose.msra.mxu0 0.0
        %1029 = vmatprep.subr.mxu0 0.0
        %1030 = vmatpush1.xpose.msra.mxu0 0.0
        %1031 = vmatprep.subr.mxu0 0.0
        %1032 = vmatpush1.xpose.msra.mxu0 0.0
        %1033 = vmatprep.subr.mxu0 0.0
        %1034 = vmatpush1.xpose.msra.mxu0 0.0
        %1035 = vmatprep.subr.mxu0 0.0
        %1036 = vmatpush1.xpose.msra.mxu0 0.0
        %1037 = vmatprep.subr.mxu0 0.0
        %1038 = vmatpush1.xpose.msra.mxu0 0.0
        %1039 = vmatprep.subr.mxu0 0.0
        %1040 = vmatpush1.xpose.msra.mxu0 0.0
        %1041 = vmatprep.subr.mxu0 0.0
        %1042 = vmatpush1.xpose.msra.mxu0 0.0
        %1043 = vmatprep.subr.mxu0 0.0
        %1044 = vmatpush1.xpose.msra.mxu0 0.0
        %1045 = vmatprep.subr.mxu0 0.0
        %1046 = vmatpush1.xpose.msra.mxu0 0.0
        %1047 = vmatprep.subr.mxu0 0.0
        %1048 = vmatpush1.xpose.msra.mxu0 0.0
        %1049 = vmatprep.subr.mxu0 0.0
        %1050 = vmatpush1.xpose.msra.mxu0 0.0
        %1051 = vmatprep.subr.mxu0 0.0
        %1052 = vmatpush1.xpose.msra.mxu0 0.0
        %1053 = vmatprep.subr.mxu0 0.0
        %1054 = vmatpush1.xpose.msra.mxu0 0.0
        %1055 = vmatprep.subr.mxu0 0.0
        %1056 = vmatpush1.xpose.msra.mxu0 0.0
        %1057 = vmatprep.mubr.f32.mxu0 0.0
        %1058 = vmatmul.mubr.f32.gmra.mrb[0].mxu0 %v985
        %v1059 = vpop.f32.mrb[0].mxu0
        %v1060 = vadd.f32 0.0, %v1059
        %v1061 = vpop.f32.mrb[0].mxu0
        %1062 = vmatprep.mubr.f32.mxu0 0.0
        %1063 = vmatmul.mubr.f32.gmra.mrb[0].mxu0 %v987
        %v1064 = vpop.f32.mrb[0].mxu0
        %v1065 = vadd.f32 0.0, %v1064
        %v1066 = vpop.f32.mrb[0].mxu0
        %1067 = vdwg.mxu0
        %v1068 = vmul.f32 %v1060, 0.35355338
        %v1069 = vmul.f32 %v1065, 0.35355338
        %v1070 = vsel %vm665, %v1068, -inf
        %1071 = vmax.xlane.f32.xlu0 %v1070
        %v1072 = vpop.xlane.xlu0 %1071
        %v1073 = vsel %vm665, %v1069, -inf
        %1074 = vmax.xlane.f32.xlu0 %v1073
        %v1075 = vpop.xlane.xlu0 %1074
        %v1076 = vsub.f32 %v1068, %v1072
        %v1077 = vsub.f32 %v1069, %v1075
        %v1078 = vmul.f32 %v1076, 1.442695
        %v1079 = vpow.pop %v1078
        %v1080 = vmul.f32 %v1077, 1.442695
        %v1081 = vpow.pop %v1080
        %v1082 = vsel %vm665, %v1079, 0.0
        %1083 = vadd.xlane.f32.xlu0 %v1082
        %v1084 = vpop.xlane.xlu0 %1083
        %v1085 = vsel %vm665, %v1081, 0.0
        %1086 = vadd.xlane.f32.xlu0 %v1085
        %v1087 = vpop.xlane.xlu0 %1086
        %v1088 = vrcp.pop %v1084
        %v1089 = vrcp.pop %v1087
        %v1090 = vmul.f32 %v1079, %v1088
        %v1091 = vmul.f32 %v1081, %v1089
        %1092 = vrot.lane.b32.xlu0 %v565, 48
        %v1093 = vpop.permute.xlu0 %1092
        %1094 = vrot.lane.b32.xlu0 %v570, 48
        %v1095 = vpop.permute.xlu0 %1094
        %v1099 = vsel %vm665, %v1090, 0
        %v1102 = vsel %vm665, %v1091, 0
        %1104 = vmatprep.subr.mxu0 0.0
        %1105 = vmatpush1.msra.mxu0 %v1093
        %1106 = vmatprep.subr.mxu0 0.0
        %1107 = vmatpush1.msra.mxu0 %v1095
        %1108 = vmatprep.subr.mxu0 0.0
        %1109 = vmatpush1.msra.mxu0 0.0
        %1110 = vmatprep.subr.mxu0 0.0
        %1111 = vmatpush1.msra.mxu0 0.0
        %1112 = vmatprep.subr.mxu0 0.0
        %1113 = vmatpush1.msra.mxu0 0.0
        %1114 = vmatprep.subr.mxu0 0.0
        %1115 = vmatpush1.msra.mxu0 0.0
        %1116 = vmatprep.subr.mxu0 0.0
        %1117 = vmatpush1.msra.mxu0 0.0
        %1118 = vmatprep.subr.mxu0 0.0
        %1119 = vmatpush1.msra.mxu0 0.0
        %1120 = vmatprep.subr.mxu0 0.0
        %1121 = vmatpush1.msra.mxu0 0.0
        %1122 = vmatprep.subr.mxu0 0.0
        %1123 = vmatpush1.msra.mxu0 0.0
        %1124 = vmatprep.subr.mxu0 0.0
        %1125 = vmatpush1.msra.mxu0 0.0
        %1126 = vmatprep.subr.mxu0 0.0
        %1127 = vmatpush1.msra.mxu0 0.0
        %1128 = vmatprep.subr.mxu0 0.0
        %1129 = vmatpush1.msra.mxu0 0.0
        %1130 = vmatprep.subr.mxu0 0.0
        %1131 = vmatpush1.msra.mxu0 0.0
        %1132 = vmatprep.subr.mxu0 0.0
        %1133 = vmatpush1.msra.mxu0 0.0
        %1134 = vmatprep.subr.mxu0 0.0
        %1135 = vmatpush1.msra.mxu0 0.0
        %1136 = vmatprep.subr.mxu0 0.0
        %1137 = vmatpush1.msra.mxu0 0.0
        %1138 = vmatprep.subr.mxu0 0.0
        %1139 = vmatpush1.msra.mxu0 0.0
        %1140 = vmatprep.subr.mxu0 0.0
        %1141 = vmatpush1.msra.mxu0 0.0
        %1142 = vmatprep.subr.mxu0 0.0
        %1143 = vmatpush1.msra.mxu0 0.0
        %1144 = vmatprep.subr.mxu0 0.0
        %1145 = vmatpush1.msra.mxu0 0.0
        %1146 = vmatprep.subr.mxu0 0.0
        %1147 = vmatpush1.msra.mxu0 0.0
        %1148 = vmatprep.subr.mxu0 0.0
        %1149 = vmatpush1.msra.mxu0 0.0
        %1150 = vmatprep.subr.mxu0 0.0
        %1151 = vmatpush1.msra.mxu0 0.0
        %1152 = vmatprep.subr.mxu0 0.0
        %1153 = vmatpush1.msra.mxu0 0.0
        %1154 = vmatprep.subr.mxu0 0.0
        %1155 = vmatpush1.msra.mxu0 0.0
        %1156 = vmatprep.subr.mxu0 0.0
        %1157 = vmatpush1.msra.mxu0 0.0
        %1158 = vmatprep.subr.mxu0 0.0
        %1159 = vmatpush1.msra.mxu0 0.0
        %1160 = vmatprep.subr.mxu0 0.0
        %1161 = vmatpush1.msra.mxu0 0.0
        %1162 = vmatprep.subr.mxu0 0.0
        %1163 = vmatpush1.msra.mxu0 0.0
        %1164 = vmatprep.subr.mxu0 0.0
        %1165 = vmatpush1.msra.mxu0 0.0
        %1166 = vmatprep.subr.mxu0 0.0
        %1167 = vmatpush1.msra.mxu0 0.0
        %1168 = vmatprep.mubr.f32.mxu0 0.0
        %1169 = vmatmul.mubr.f32.gmra.mrb[0].mxu0 %v1099
        %v1170 = vpop.f32.mrb[0].mxu0
        %v1171 = vadd.f32 0.0, %v1170
        %v1172 = vpop.f32.mrb[0].mxu0
        %1173 = vmatprep.mubr.f32.mxu0 0.0
        %1174 = vmatmul.mubr.f32.gmra.mrb[0].mxu0 %v1102
        %v1175 = vpop.f32.mrb[0].mxu0
        %v1176 = vadd.f32 0.0, %v1175
        %v1177 = vpop.f32.mrb[0].mxu0
        %1178 = vdwg.mxu0
        %1179 = vrot.lane.b32.xlu0 %v565, 104
        %v1180 = vpop.permute.xlu0 %1179
        %1181 = vrot.lane.b32.xlu0 %v570, 104
        %v1182 = vpop.permute.xlu0 %1181
        %1183 = vrot.lane.b32.xlu0 %v565, 72
        %v1184 = vpop.permute.xlu0 %1183
        %1185 = vrot.lane.b32.xlu0 %v570, 72
        %v1186 = vpop.permute.xlu0 %1185
        %v1187 = vsel %vm579, %v1180, 0
        %v1189 = vsel %vm579, %v1182, 0
        %v1191 = vsel %vm579, %v1184, 0
        %v1193 = vsel %vm579, %v1186, 0
        %1195 = vmatprep.subr.mxu0 0.0
        %1196 = vmatpush1.xpose.msra.mxu0 %v1191
        %1197 = vmatprep.subr.mxu0 0.0
        %1198 = vmatpush1.xpose.msra.mxu0 %v1193
        %1199 = vmatprep.subr.mxu0 0.0
        %1200 = vmatpush1.xpose.msra.mxu0 0.0
        %1201 = vmatprep.subr.mxu0 0.0
        %1202 = vmatpush1.xpose.msra.mxu0 0.0
        %1203 = vmatprep.subr.mxu0 0.0
        %1204 = vmatpush1.xpose.msra.mxu0 0.0
        %1205 = vmatprep.subr.mxu0 0.0
        %1206 = vmatpush1.xpose.msra.mxu0 0.0
        %1207 = vmatprep.subr.mxu0 0.0
        %1208 = vmatpush1.xpose.msra.mxu0 0.0
        %1209 = vmatprep.subr.mxu0 0.0
        %1210 = vmatpush1.xpose.msra.mxu0 0.0
        %1211 = vmatprep.subr.mxu0 0.0
        %1212 = vmatpush1.xpose.msra.mxu0 0.0
        %1213 = vmatprep.subr.mxu0 0.0
        %1214 = vmatpush1.xpose.msra.mxu0 0.0
        %1215 = vmatprep.subr.mxu0 0.0
        %1216 = vmatpush1.xpose.msra.mxu0 0.0
        %1217 = vmatprep.subr.mxu0 0.0
        %1218 = vmatpush1.xpose.msra.mxu0 0.0
        %1219 = vmatprep.subr.mxu0 0.0
        %1220 = vmatpush1.xpose.msra.mxu0 0.0
        %1221 = vmatprep.subr.mxu0 0.0
        %1222 = vmatpush1.xpose.msra.mxu0 0.0
        %1223 = vmatprep.subr.mxu0 0.0
        %1224 = vmatpush1.xpose.msra.mxu0 0.0
        %1225 = vmatprep.subr.mxu0 0.0
        %1226 = vmatpush1.xpose.msra.mxu0 0.0
        %1227 = vmatprep.subr.mxu0 0.0
        %1228 = vmatpush1.xpose.msra.mxu0 0.0
        %1229 = vmatprep.subr.mxu0 0.0
        %1230 = vmatpush1.xpose.msra.mxu0 0.0
        %1231 = vmatprep.subr.mxu0 0.0
        %1232 = vmatpush1.xpose.msra.mxu0 0.0
        %1233 = vmatprep.subr.mxu0 0.0
        %1234 = vmatpush1.xpose.msra.mxu0 0.0
        %1235 = vmatprep.subr.mxu0 0.0
        %1236 = vmatpush1.xpose.msra.mxu0 0.0
        %1237 = vmatprep.subr.mxu0 0.0
        %1238 = vmatpush1.xpose.msra.mxu0 0.0
        %1239 = vmatprep.subr.mxu0 0.0
        %1240 = vmatpush1.xpose.msra.mxu0 0.0
        %1241 = vmatprep.subr.mxu0 0.0
        %1242 = vmatpush1.xpose.msra.mxu0 0.0
        %1243 = vmatprep.subr.mxu0 0.0
        %1244 = vmatpush1.xpose.msra.mxu0 0.0
        %1245 = vmatprep.subr.mxu0 0.0
        %1246 = vmatpush1.xpose.msra.mxu0 0.0
        %1247 = vmatprep.subr.mxu0 0.0
        %1248 = vmatpush1.xpose.msra.mxu0 0.0
        %1249 = vmatprep.subr.mxu0 0.0
        %1250 = vmatpush1.xpose.msra.mxu0 0.0
        %1251 = vmatprep.subr.mxu0 0.0
        %1252 = vmatpush1.xpose.msra.mxu0 0.0
        %1253 = vmatprep.subr.mxu0 0.0
        %1254 = vmatpush1.xpose.msra.mxu0 0.0
        %1255 = vmatprep.subr.mxu0 0.0
        %1256 = vmatpush1.xpose.msra.mxu0 0.0
        %1257 = vmatprep.subr.mxu0 0.0
        %1258 = vmatpush1.xpose.msra.mxu0 0.0
        %1259 = vmatprep.mubr.f32.mxu0 0.0
        %1260 = vmatmul.mubr.f32.gmra.mrb[0].mxu0 %v1187
        %v1261 = vpop.f32.mrb[0].mxu0
        %v1262 = vadd.f32 0.0, %v1261
        %v1263 = vpop.f32.mrb[0].mxu0
        %1264 = vmatprep.mubr.f32.mxu0 0.0
        %1265 = vmatmul.mubr.f32.gmra.mrb[0].mxu0 %v1189
        %v1266 = vpop.f32.mrb[0].mxu0
        %v1267 = vadd.f32 0.0, %v1266
        %v1268 = vpop.f32.mrb[0].mxu0
        %1269 = vdwg.mxu0
        %v1270 = vmul.f32 %v1262, 0.35355338
        %v1271 = vmul.f32 %v1267, 0.35355338
        %v1272 = vsel %vm665, %v1270, -inf
        %1273 = vmax.xlane.f32.xlu0 %v1272
        %v1274 = vpop.xlane.xlu0 %1273
        %v1275 = vsel %vm665, %v1271, -inf
        %1276 = vmax.xlane.f32.xlu0 %v1275
        %v1277 = vpop.xlane.xlu0 %1276
        %v1278 = vsub.f32 %v1270, %v1274
        %v1279 = vsub.f32 %v1271, %v1277
        %v1280 = vmul.f32 %v1278, 1.442695
        %v1281 = vpow.pop %v1280
        %v1282 = vmul.f32 %v1279, 1.442695
        %v1283 = vpow.pop %v1282
        %v1284 = vsel %vm665, %v1281, 0.0
        %1285 = vadd.xlane.f32.xlu0 %v1284
        %v1286 = vpop.xlane.xlu0 %1285
        %v1287 = vsel %vm665, %v1283, 0.0
        %1288 = vadd.xlane.f32.xlu0 %v1287
        %v1289 = vpop.xlane.xlu0 %1288
        %v1290 = vrcp.pop %v1286
        %v1291 = vrcp.pop %v1289
        %v1292 = vmul.f32 %v1281, %v1290
        %v1293 = vmul.f32 %v1283, %v1291
        %1294 = vrot.lane.b32.xlu0 %v565, 40
        %v1295 = vpop.permute.xlu0 %1294
        %1296 = vrot.lane.b32.xlu0 %v570, 40
        %v1297 = vpop.permute.xlu0 %1296
        %v1301 = vsel %vm665, %v1292, 0
        %v1304 = vsel %vm665, %v1293, 0
        %1306 = vmatprep.subr.mxu0 0.0
        %1307 = vmatpush1.msra.mxu0 %v1295
        %1308 = vmatprep.subr.mxu0 0.0
        %1309 = vmatpush1.msra.mxu0 %v1297
        %1310 = vmatprep.subr.mxu0 0.0
        %1311 = vmatpush1.msra.mxu0 0.0
        %1312 = vmatprep.subr.mxu0 0.0
        %1313 = vmatpush1.msra.mxu0 0.0
        %1314 = vmatprep.subr.mxu0 0.0
        %1315 = vmatpush1.msra.mxu0 0.0
        %1316 = vmatprep.subr.mxu0 0.0
        %1317 = vmatpush1.msra.mxu0 0.0
        %1318 = vmatprep.subr.mxu0 0.0
        %1319 = vmatpush1.msra.mxu0 0.0
        %1320 = vmatprep.subr.mxu0 0.0
        %1321 = vmatpush1.msra.mxu0 0.0
        %1322 = vmatprep.subr.mxu0 0.0
        %1323 = vmatpush1.msra.mxu0 0.0
        %1324 = vmatprep.subr.mxu0 0.0
        %1325 = vmatpush1.msra.mxu0 0.0
        %1326 = vmatprep.subr.mxu0 0.0
        %1327 = vmatpush1.msra.mxu0 0.0
        %1328 = vmatprep.subr.mxu0 0.0
        %1329 = vmatpush1.msra.mxu0 0.0
        %1330 = vmatprep.subr.mxu0 0.0
        %1331 = vmatpush1.msra.mxu0 0.0
        %1332 = vmatprep.subr.mxu0 0.0
        %1333 = vmatpush1.msra.mxu0 0.0
        %1334 = vmatprep.subr.mxu0 0.0
        %1335 = vmatpush1.msra.mxu0 0.0
        %1336 = vmatprep.subr.mxu0 0.0
        %1337 = vmatpush1.msra.mxu0 0.0
        %1338 = vmatprep.subr.mxu0 0.0
        %1339 = vmatpush1.msra.mxu0 0.0
        %1340 = vmatprep.subr.mxu0 0.0
        %1341 = vmatpush1.msra.mxu0 0.0
        %1342 = vmatprep.subr.mxu0 0.0
        %1343 = vmatpush1.msra.mxu0 0.0
        %1344 = vmatprep.subr.mxu0 0.0
        %1345 = vmatpush1.msra.mxu0 0.0
        %1346 = vmatprep.subr.mxu0 0.0
        %1347 = vmatpush1.msra.mxu0 0.0
        %1348 = vmatprep.subr.mxu0 0.0
        %1349 = vmatpush1.msra.mxu0 0.0
        %1350 = vmatprep.subr.mxu0 0.0
        %1351 = vmatpush1.msra.mxu0 0.0
        %1352 = vmatprep.subr.mxu0 0.0
        %1353 = vmatpush1.msra.mxu0 0.0
        %1354 = vmatprep.subr.mxu0 0.0
        %1355 = vmatpush1.msra.mxu0 0.0
        %1356 = vmatprep.subr.mxu0 0.0
        %1357 = vmatpush1.msra.mxu0 0.0
        %1358 = vmatprep.subr.mxu0 0.0
        %1359 = vmatpush1.msra.mxu0 0.0
        %1360 = vmatprep.subr.mxu0 0.0
        %1361 = vmatpush1.msra.mxu0 0.0
        %1362 = vmatprep.subr.mxu0 0.0
        %1363 = vmatpush1.msra.mxu0 0.0
        %1364 = vmatprep.subr.mxu0 0.0
        %1365 = vmatpush1.msra.mxu0 0.0
        %1366 = vmatprep.subr.mxu0 0.0
        %1367 = vmatpush1.msra.mxu0 0.0
        %1368 = vmatprep.subr.mxu0 0.0
        %1369 = vmatpush1.msra.mxu0 0.0
        %1370 = vmatprep.mubr.f32.mxu0 0.0
        %1371 = vmatmul.mubr.f32.gmra.mrb[0].mxu0 %v1301
        %v1372 = vpop.f32.mrb[0].mxu0
        %v1373 = vadd.f32 0.0, %v1372
        %v1374 = vpop.f32.mrb[0].mxu0
        %1375 = vmatprep.mubr.f32.mxu0 0.0
        %1376 = vmatmul.mubr.f32.gmra.mrb[0].mxu0 %v1304
        %v1377 = vpop.f32.mrb[0].mxu0
        %v1378 = vadd.f32 0.0, %v1377
        %v1379 = vpop.f32.mrb[0].mxu0
        %1380 = vdwg.mxu0
        %1383 = vrot.lane.b32.xlu0 %v969, 8
        %v1384 = vpop.permute.xlu0 %1383
        %1385 = vrot.lane.b32.xlu0 %v974, 8
        %v1386 = vpop.permute.xlu0 %1385
        %1391 = vrot.lane.b32.xlu0 %v1171, 16
        %v1392 = vpop.permute.xlu0 %1391
        %1393 = vrot.lane.b32.xlu0 %v1176, 16
        %v1394 = vpop.permute.xlu0 %1393
        %1399 = vrot.lane.b32.xlu0 %v1373, 24
        %v1400 = vpop.permute.xlu0 %1399
        %1401 = vrot.lane.b32.xlu0 %v1378, 24
        %v1402 = vpop.permute.xlu0 %1401
        %v1405 = vsel %vm579, %v767, %v1384
        %v1406 = vsel %vm579, %v772, %v1386
        %v1407 = vsel %vm665, %v1405, %v1392
        %v1408 = vsel %vm665, %v1406, %v1394
        %vm1409 = vcmask 195584
        %v1410 = vsel %vm1409, %v1407, %v1400
        %v1411 = vsel %vm1409, %v1408, %v1402
        %v1412 = vld [vmem:[#allocation8] sm:$0xff]
        %v1413 = vld [vmem:[#allocation8 + $0x8] sm:$0xff]
        %v1414 = vld [vmem:[#allocation8 + $0x10] sm:$0xff]
        %v1415 = vld [vmem:[#allocation8 + $0x18] sm:$0xff]
        %v1416 = vld [vmem:[%s6] sm:$0x1]
        %v1418 = vlaneseq
        %v1419 = vshrl.u32 %v1418, 7
        %v1420 = vsub.s32 0, %v1419
        %v1421 = vrot.slane %v1416, %v1420
        %v1424 = vsel %vm388, %v1410, 0
        %v1427 = vsel %vm388, %v1411, 0
        %1429 = vmatprep.subr.mxu0 0.0
        %1430 = vmatpush1.msra.mxu0 %v1412
        %1431 = vmatprep.subr.mxu0 0.0
        %1432 = vmatpush1.msra.mxu0 %v1413
        %1433 = vmatprep.subr.mxu0 0.0
        %1434 = vmatpush1.msra.mxu0 %v1414
        %1435 = vmatprep.subr.mxu0 0.0
        %1436 = vmatpush1.msra.mxu0 %v1415
        %1437 = vmatprep.subr.mxu0 0.0
        %1438 = vmatpush1.msra.mxu0 0.0
        %1439 = vmatprep.subr.mxu0 0.0
        %1440 = vmatpush1.msra.mxu0 0.0
        %1441 = vmatprep.subr.mxu0 0.0
        %1442 = vmatpush1.msra.mxu0 0.0
        %1443 = vmatprep.subr.mxu0 0.0
        %1444 = vmatpush1.msra.mxu0 0.0
        %1445 = vmatprep.subr.mxu0 0.0
        %1446 = vmatpush1.msra.mxu0 0.0
        %1447 = vmatprep.subr.mxu0 0.0
        %1448 = vmatpush1.msra.mxu0 0.0
        %1449 = vmatprep.subr.mxu0 0.0
        %1450 = vmatpush1.msra.mxu0 0.0
        %1451 = vmatprep.subr.mxu0 0.0
        %1452 = vmatpush1.msra.mxu0 0.0
        %1453 = vmatprep.subr.mxu0 0.0
        %1454 = vmatpush1.msra.mxu0 0.0
        %1455 = vmatprep.subr.mxu0 0.0
        %1456 = vmatpush1.msra.mxu0 0.0
        %1457 = vmatprep.subr.mxu0 0.0
        %1458 = vmatpush1.msra.mxu0 0.0
        %1459 = vmatprep.subr.mxu0 0.0
        %1460 = vmatpush1.msra.mxu0 0.0
        %1461 = vmatprep.subr.mxu0 0.0
        %1462 = vmatpush1.msra.mxu0 0.0
        %1463 = vmatprep.subr.mxu0 0.0
        %1464 = vmatpush1.msra.mxu0 0.0
        %1465 = vmatprep.subr.mxu0 0.0
        %1466 = vmatpush1.msra.mxu0 0.0
        %1467 = vmatprep.subr.mxu0 0.0
        %1468 = vmatpush1.msra.mxu0 0.0
        %1469 = vmatprep.subr.mxu0 0.0
        %1470 = vmatpush1.msra.mxu0 0.0
        %1471 = vmatprep.subr.mxu0 0.0
        %1472 = vmatpush1.msra.mxu0 0.0
        %1473 = vmatprep.subr.mxu0 0.0
        %1474 = vmatpush1.msra.mxu0 0.0
        %1475 = vmatprep.subr.mxu0 0.0
        %1476 = vmatpush1.msra.mxu0 0.0
        %1477 = vmatprep.subr.mxu0 0.0
        %1478 = vmatpush1.msra.mxu0 0.0
        %1479 = vmatprep.subr.mxu0 0.0
        %1480 = vmatpush1.msra.mxu0 0.0
        %1481 = vmatprep.subr.mxu0 0.0
        %1482 = vmatpush1.msra.mxu0 0.0
        %1483 = vmatprep.subr.mxu0 0.0
        %1484 = vmatpush1.msra.mxu0 0.0
        %1485 = vmatprep.subr.mxu0 0.0
        %1486 = vmatpush1.msra.mxu0 0.0
        %1487 = vmatprep.subr.mxu0 0.0
        %1488 = vmatpush1.msra.mxu0 0.0
        %1489 = vmatprep.subr.mxu0 0.0
        %1490 = vmatpush1.msra.mxu0 0.0
        %1491 = vmatprep.subr.mxu0 0.0
        %1492 = vmatpush1.msra.mxu0 0.0
        %1493 = vmatprep.mubr.f32.mxu0 0.0
        %1494 = vmatmul.mubr.f32.gmra.mrb[0].mxu0 %v1424
        %v1495 = vpop.f32.mrb[0].mxu0
        %v1496 = vadd.f32 %v1421, %v1495
        %v1497 = vpop.f32.mrb[0].mxu0
        %1498 = vmatprep.mubr.f32.mxu0 0.0
        %1499 = vmatmul.mubr.f32.gmra.mrb[0].mxu0 %v1427
        %v1500 = vpop.f32.mrb[0].mxu0
        %v1501 = vadd.f32 %v1421, %v1500
        %v1502 = vpop.f32.mrb[0].mxu0
        %1503 = vdwg.mxu0
        %v1504 = vadd.f32 %v1496, %v479
        %v1505 = vadd.f32 %v1501, %v480
        %v1506 = vld [vmem:[#allocation10] sm:$0xff]
        %v1507 = vld [vmem:[#allocation10 + $0x8] sm:$0xff]
        %v1508 = vld [vmem:[#allocation10 + $0x10] sm:$0xff]
        %v1509 = vld [vmem:[#allocation10 + $0x18] sm:$0xff]
        %v1511 = vsel %vm388, %v1504, 0
        %v1514 = vsel %vm388, %v1505, 0
        %1516 = vmatprep.subr.mxu0 0.0
        %1517 = vmatpush1.msra.mxu0 %v1506
        %1518 = vmatprep.subr.mxu0 0.0
        %1519 = vmatpush1.msra.mxu0 %v1507
        %1520 = vmatprep.subr.mxu0 0.0
        %1521 = vmatpush1.msra.mxu0 %v1508
        %1522 = vmatprep.subr.mxu0 0.0
        %1523 = vmatpush1.msra.mxu0 %v1509
        %1524 = vmatprep.subr.mxu0 0.0
        %1525 = vmatpush1.msra.mxu0 0.0
        %1526 = vmatprep.subr.mxu0 0.0
        %1527 = vmatpush1.msra.mxu0 0.0
        %1528 = vmatprep.subr.mxu0 0.0
        %1529 = vmatpush1.msra.mxu0 0.0
        %1530 = vmatprep.subr.mxu0 0.0
        %1531 = vmatpush1.msra.mxu0 0.0
        %1532 = vmatprep.subr.mxu0 0.0
        %1533 = vmatpush1.msra.mxu0 0.0
        %1534 = vmatprep.subr.mxu0 0.0
        %1535 = vmatpush1.msra.mxu0 0.0
        %1536 = vmatprep.subr.mxu0 0.0
        %1537 = vmatpush1.msra.mxu0 0.0
        %1538 = vmatprep.subr.mxu0 0.0
        %1539 = vmatpush1.msra.mxu0 0.0
        %1540 = vmatprep.subr.mxu0 0.0
        %1541 = vmatpush1.msra.mxu0 0.0
        %1542 = vmatprep.subr.mxu0 0.0
        %1543 = vmatpush1.msra.mxu0 0.0
        %1544 = vmatprep.subr.mxu0 0.0
        %1545 = vmatpush1.msra.mxu0 0.0
        %1546 = vmatprep.subr.mxu0 0.0
        %1547 = vmatpush1.msra.mxu0 0.0
        %1548 = vmatprep.subr.mxu0 0.0
        %1549 = vmatpush1.msra.mxu0 0.0
        %1550 = vmatprep.subr.mxu0 0.0
        %1551 = vmatpush1.msra.mxu0 0.0
        %1552 = vmatprep.subr.mxu0 0.0
        %1553 = vmatpush1.msra.mxu0 0.0
        %1554 = vmatprep.subr.mxu0 0.0
        %1555 = vmatpush1.msra.mxu0 0.0
        %1556 = vmatprep.subr.mxu0 0.0
        %1557 = vmatpush1.msra.mxu0 0.0
        %1558 = vmatprep.subr.mxu0 0.0
        %1559 = vmatpush1.msra.mxu0 0.0
        %1560 = vmatprep.subr.mxu0 0.0
        %1561 = vmatpush1.msra.mxu0 0.0
        %1562 = vmatprep.subr.mxu0 0.0
        %1563 = vmatpush1.msra.mxu0 0.0
        %1564 = vmatprep.subr.mxu0 0.0
        %1565 = vmatpush1.msra.mxu0 0.0
        %1566 = vmatprep.subr.mxu0 0.0
        %1567 = vmatpush1.msra.mxu0 0.0
        %1568 = vmatprep.subr.mxu0 0.0
        %1569 = vmatpush1.msra.mxu0 0.0
        %1570 = vmatprep.subr.mxu0 0.0
        %1571 = vmatpush1.msra.mxu0 0.0
        %1572 = vmatprep.subr.mxu0 0.0
        %1573 = vmatpush1.msra.mxu0 0.0
        %1574 = vmatprep.subr.mxu0 0.0
        %1575 = vmatpush1.msra.mxu0 0.0
        %1576 = vmatprep.subr.mxu0 0.0
        %1577 = vmatpush1.msra.mxu0 0.0
        %1578 = vmatprep.subr.mxu0 0.0
        %1579 = vmatpush1.msra.mxu0 0.0
        %1580 = vmatprep.mubr.f32.mxu0 0.0
        %1581 = vmatmul.mubr.f32.gmra.mrb[0].mxu0 %v1511
        %v1582 = vpop.f32.mrb[0].mxu0
        %v1583 = vadd.f32 %v1504, %v1582
        %v1584 = vpop.f32.mrb[0].mxu0
        %1585 = vmatprep.mubr.f32.mxu0 0.0
        %1586 = vmatmul.mubr.f32.gmra.mrb[0].mxu0 %v1514
        %v1587 = vpop.f32.mrb[0].mxu0
        %v1588 = vadd.f32 %v1505, %v1587
        %v1589 = vpop.f32.mrb[0].mxu0
        %1590 = vdwg.mxu0
        %s1591 = scalar_lea.vmem [#allocation7], 32
        %v1592 = vld [vmem:[%s1591] sm:$0xff]
        %v1593 = vld [vmem:[%s1591 + $0x8] sm:$0xff]
        %v1594 = vld [vmem:[%s1591 + $0x10] sm:$0xff]
        %v1595 = vld [vmem:[%s1591 + $0x18] sm:$0xff]
        %s1596 = scalar_lea.vmem %s4, 1
        %v1597 = vld [vmem:[%s1596] sm:$0x1]
        %v1599 = vlaneseq
        %v1600 = vshrl.u32 %v1599, 7
        %v1601 = vsub.s32 0, %v1600
        %v1602 = vrot.slane %v1597, %v1601
        %v1605 = vsel %vm388, %v1583, 0
        %v1608 = vsel %vm388, %v1588, 0
        %1610 = vmatprep.subr.mxu0 0.0
        %1611 = vmatpush1.msra.mxu0 %v1592
        %1612 = vmatprep.subr.mxu0 0.0
        %1613 = vmatpush1.msra.mxu0 %v1593
        %1614 = vmatprep.subr.mxu0 0.0
        %1615 = vmatpush1.msra.mxu0 %v1594
        %1616 = vmatprep.subr.mxu0 0.0
        %1617 = vmatpush1.msra.mxu0 %v1595
        %1618 = vmatprep.subr.mxu0 0.0
        %1619 = vmatpush1.msra.mxu0 0.0
        %1620 = vmatprep.subr.mxu0 0.0
        %1621 = vmatpush1.msra.mxu0 0.0
        %1622 = vmatprep.subr.mxu0 0.0
        %1623 = vmatpush1.msra.mxu0 0.0
        %1624 = vmatprep.subr.mxu0 0.0
        %1625 = vmatpush1.msra.mxu0 0.0
        %1626 = vmatprep.subr.mxu0 0.0
        %1627 = vmatpush1.msra.mxu0 0.0
        %1628 = vmatprep.subr.mxu0 0.0
        %1629 = vmatpush1.msra.mxu0 0.0
        %1630 = vmatprep.subr.mxu0 0.0
        %1631 = vmatpush1.msra.mxu0 0.0
        %1632 = vmatprep.subr.mxu0 0.0
        %1633 = vmatpush1.msra.mxu0 0.0
        %1634 = vmatprep.subr.mxu0 0.0
        %1635 = vmatpush1.msra.mxu0 0.0
        %1636 = vmatprep.subr.mxu0 0.0
        %1637 = vmatpush1.msra.mxu0 0.0
        %1638 = vmatprep.subr.mxu0 0.0
        %1639 = vmatpush1.msra.mxu0 0.0
        %1640 = vmatprep.subr.mxu0 0.0
        %1641 = vmatpush1.msra.mxu0 0.0
        %1642 = vmatprep.subr.mxu0 0.0
        %1643 = vmatpush1.msra.mxu0 0.0
        %1644 = vmatprep.subr.mxu0 0.0
        %1645 = vmatpush1.msra.mxu0 0.0
        %1646 = vmatprep.subr.mxu0 0.0
        %1647 = vmatpush1.msra.mxu0 0.0
        %1648 = vmatprep.subr.mxu0 0.0
        %1649 = vmatpush1.msra.mxu0 0.0
        %1650 = vmatprep.subr.mxu0 0.0
        %1651 = vmatpush1.msra.mxu0 0.0
        %1652 = vmatprep.subr.mxu0 0.0
        %1653 = vmatpush1.msra.mxu0 0.0
        %1654 = vmatprep.subr.mxu0 0.0
        %1655 = vmatpush1.msra.mxu0 0.0
        %1656 = vmatprep.subr.mxu0 0.0
        %1657 = vmatpush1.msra.mxu0 0.0
        %1658 = vmatprep.subr.mxu0 0.0
        %1659 = vmatpush1.msra.mxu0 0.0
        %1660 = vmatprep.subr.mxu0 0.0
        %1661 = vmatpush1.msra.mxu0 0.0
        %1662 = vmatprep.subr.mxu0 0.0
        %1663 = vmatpush1.msra.mxu0 0.0
        %1664 = vmatprep.subr.mxu0 0.0
        %1665 = vmatpush1.msra.mxu0 0.0
        %1666 = vmatprep.subr.mxu0 0.0
        %1667 = vmatpush1.msra.mxu0 0.0
        %1668 = vmatprep.subr.mxu0 0.0
        %1669 = vmatpush1.msra.mxu0 0.0
        %1670 = vmatprep.subr.mxu0 0.0
        %1671 = vmatpush1.msra.mxu0 0.0
        %1672 = vmatprep.subr.mxu0 0.0
        %1673 = vmatpush1.msra.mxu0 0.0
        %1674 = vmatprep.mubr.f32.mxu0 0.0
        %1675 = vmatmul.mubr.f32.gmra.mrb[0].mxu0 %v1605
        %v1676 = vpop.f32.mrb[0].mxu0
        %v1677 = vadd.f32 %v1602, %v1676
        %v1678 = vpop.f32.mrb[0].mxu0
        %1679 = vmatprep.mubr.f32.mxu0 0.0
        %1680 = vmatmul.mubr.f32.gmra.mrb[0].mxu0 %v1608
        %v1681 = vpop.f32.mrb[0].mxu0
        %v1682 = vadd.f32 %v1602, %v1681
        %v1683 = vpop.f32.mrb[0].mxu0
        %1684 = vdwg.mxu0
        %1687 = vrot.lane.b32.xlu0 %v1677, 96
        %v1688 = vpop.permute.xlu0 %1687
        %1689 = vrot.lane.b32.xlu0 %v1682, 96
        %v1690 = vpop.permute.xlu0 %1689
        %v1691 = vsel %vm579, %v1677, 0
        %v1693 = vsel %vm579, %v1682, 0
        %v1695 = vsel %vm579, %v1688, 0
        %v1697 = vsel %vm579, %v1690, 0
        %1699 = vmatprep.subr.mxu0 0.0
        %1700 = vmatpush1.xpose.msra.mxu0 %v1695
        %1701 = vmatprep.subr.mxu0 0.0
        %1702 = vmatpush1.xpose.msra.mxu0 %v1697
        %1703 = vmatprep.subr.mxu0 0.0
        %1704 = vmatpush1.xpose.msra.mxu0 0.0
        %1705 = vmatprep.subr.mxu0 0.0
        %1706 = vmatpush1.xpose.msra.mxu0 0.0
        %1707 = vmatprep.subr.mxu0 0.0
        %1708 = vmatpush1.xpose.msra.mxu0 0.0
        %1709 = vmatprep.subr.mxu0 0.0
        %1710 = vmatpush1.xpose.msra.mxu0 0.0
        %1711 = vmatprep.subr.mxu0 0.0
        %1712 = vmatpush1.xpose.msra.mxu0 0.0
        %1713 = vmatprep.subr.mxu0 0.0
        %1714 = vmatpush1.xpose.msra.mxu0 0.0
        %1715 = vmatprep.subr.mxu0 0.0
        %1716 = vmatpush1.xpose.msra.mxu0 0.0
        %1717 = vmatprep.subr.mxu0 0.0
        %1718 = vmatpush1.xpose.msra.mxu0 0.0
        %1719 = vmatprep.subr.mxu0 0.0
        %1720 = vmatpush1.xpose.msra.mxu0 0.0
        %1721 = vmatprep.subr.mxu0 0.0
        %1722 = vmatpush1.xpose.msra.mxu0 0.0
        %1723 = vmatprep.subr.mxu0 0.0
        %1724 = vmatpush1.xpose.msra.mxu0 0.0
        %1725 = vmatprep.subr.mxu0 0.0
        %1726 = vmatpush1.xpose.msra.mxu0 0.0
        %1727 = vmatprep.subr.mxu0 0.0
        %1728 = vmatpush1.xpose.msra.mxu0 0.0
        %1729 = vmatprep.subr.mxu0 0.0
        %1730 = vmatpush1.xpose.msra.mxu0 0.0
        %1731 = vmatprep.subr.mxu0 0.0
        %1732 = vmatpush1.xpose.msra.mxu0 0.0
        %1733 = vmatprep.subr.mxu0 0.0
        %1734 = vmatpush1.xpose.msra.mxu0 0.0
        %1735 = vmatprep.subr.mxu0 0.0
        %1736 = vmatpush1.xpose.msra.mxu0 0.0
        %1737 = vmatprep.subr.mxu0 0.0
        %1738 = vmatpush1.xpose.msra.mxu0 0.0
        %1739 = vmatprep.subr.mxu0 0.0
        %1740 = vmatpush1.xpose.msra.mxu0 0.0
        %1741 = vmatprep.subr.mxu0 0.0
        %1742 = vmatpush1.xpose.msra.mxu0 0.0
        %1743 = vmatprep.subr.mxu0 0.0
        %1744 = vmatpush1.xpose.msra.mxu0 0.0
        %1745 = vmatprep.subr.mxu0 0.0
        %1746 = vmatpush1.xpose.msra.mxu0 0.0
        %1747 = vmatprep.subr.mxu0 0.0
        %1748 = vmatpush1.xpose.msra.mxu0 0.0
        %1749 = vmatprep.subr.mxu0 0.0
        %1750 = vmatpush1.xpose.msra.mxu0 0.0
        %1751 = vmatprep.subr.mxu0 0.0
        %1752 = vmatpush1.xpose.msra.mxu0 0.0
        %1753 = vmatprep.subr.mxu0 0.0
        %1754 = vmatpush1.xpose.msra.mxu0 0.0
        %1755 = vmatprep.subr.mxu0 0.0
        %1756 = vmatpush1.xpose.msra.mxu0 0.0
        %1757 = vmatprep.subr.mxu0 0.0
        %1758 = vmatpush1.xpose.msra.mxu0 0.0
        %1759 = vmatprep.subr.mxu0 0.0
        %1760 = vmatpush1.xpose.msra.mxu0 0.0
        %1761 = vmatprep.subr.mxu0 0.0
        %1762 = vmatpush1.xpose.msra.mxu0 0.0
        %1763 = vmatprep.mubr.f32.mxu0 0.0
        %1764 = vmatmul.mubr.f32.gmra.mrb[0].mxu0 %v1691
        %v1765 = vpop.f32.mrb[0].mxu0
        %v1766 = vadd.f32 0.0, %v1765
        %v1767 = vpop.f32.mrb[0].mxu0
        %1768 = vmatprep.mubr.f32.mxu0 0.0
        %1769 = vmatmul.mubr.f32.gmra.mrb[0].mxu0 %v1693
        %v1770 = vpop.f32.mrb[0].mxu0
        %v1771 = vadd.f32 0.0, %v1770
        %v1772 = vpop.f32.mrb[0].mxu0
        %1773 = vdwg.mxu0
        %v1774 = vmul.f32 %v1766, 0.35355338
        %v1775 = vmul.f32 %v1771, 0.35355338
        %v1776 = vsel %vm665, %v1774, -inf
        %1777 = vmax.xlane.f32.xlu0 %v1776
        %v1778 = vpop.xlane.xlu0 %1777
        %v1779 = vsel %vm665, %v1775, -inf
        %1780 = vmax.xlane.f32.xlu0 %v1779
        %v1781 = vpop.xlane.xlu0 %1780
        %v1782 = vsub.f32 %v1774, %v1778
        %v1783 = vsub.f32 %v1775, %v1781
        %v1784 = vmul.f32 %v1782, 1.442695
        %v1785 = vpow.pop %v1784
        %v1786 = vmul.f32 %v1783, 1.442695
        %v1787 = vpow.pop %v1786
        %v1788 = vsel %vm665, %v1785, 0.0
        %1789 = vadd.xlane.f32.xlu0 %v1788
        %v1790 = vpop.xlane.xlu0 %1789
        %v1791 = vsel %vm665, %v1787, 0.0
        %1792 = vadd.xlane.f32.xlu0 %v1791
        %v1793 = vpop.xlane.xlu0 %1792
        %v1794 = vrcp.pop %v1790
        %v1795 = vrcp.pop %v1793
        %v1796 = vmul.f32 %v1785, %v1794
        %v1797 = vmul.f32 %v1787, %v1795
        %1798 = vrot.lane.b32.xlu0 %v1677, 64
        %v1799 = vpop.permute.xlu0 %1798
        %1800 = vrot.lane.b32.xlu0 %v1682, 64
        %v1801 = vpop.permute.xlu0 %1800
        %v1805 = vsel %vm665, %v1796, 0
        %v1808 = vsel %vm665, %v1797, 0
        %1810 = vmatprep.subr.mxu0 0.0
        %1811 = vmatpush1.msra.mxu0 %v1799
        %1812 = vmatprep.subr.mxu0 0.0
        %1813 = vmatpush1.msra.mxu0 %v1801
        %1814 = vmatprep.subr.mxu0 0.0
        %1815 = vmatpush1.msra.mxu0 0.0
        %1816 = vmatprep.subr.mxu0 0.0
        %1817 = vmatpush1.msra.mxu0 0.0
        %1818 = vmatprep.subr.mxu0 0.0
        %1819 = vmatpush1.msra.mxu0 0.0
        %1820 = vmatprep.subr.mxu0 0.0
        %1821 = vmatpush1.msra.mxu0 0.0
        %1822 = vmatprep.subr.mxu0 0.0
        %1823 = vmatpush1.msra.mxu0 0.0
        %1824 = vmatprep.subr.mxu0 0.0
        %1825 = vmatpush1.msra.mxu0 0.0
        %1826 = vmatprep.subr.mxu0 0.0
        %1827 = vmatpush1.msra.mxu0 0.0
        %1828 = vmatprep.subr.mxu0 0.0
        %1829 = vmatpush1.msra.mxu0 0.0
        %1830 = vmatprep.subr.mxu0 0.0
        %1831 = vmatpush1.msra.mxu0 0.0
        %1832 = vmatprep.subr.mxu0 0.0
        %1833 = vmatpush1.msra.mxu0 0.0
        %1834 = vmatprep.subr.mxu0 0.0
        %1835 = vmatpush1.msra.mxu0 0.0
        %1836 = vmatprep.subr.mxu0 0.0
        %1837 = vmatpush1.msra.mxu0 0.0
        %1838 = vmatprep.subr.mxu0 0.0
        %1839 = vmatpush1.msra.mxu0 0.0
        %1840 = vmatprep.subr.mxu0 0.0
        %1841 = vmatpush1.msra.mxu0 0.0
        %1842 = vmatprep.subr.mxu0 0.0
        %1843 = vmatpush1.msra.mxu0 0.0
        %1844 = vmatprep.subr.mxu0 0.0
        %1845 = vmatpush1.msra.mxu0 0.0
        %1846 = vmatprep.subr.mxu0 0.0
        %1847 = vmatpush1.msra.mxu0 0.0
        %1848 = vmatprep.subr.mxu0 0.0
        %1849 = vmatpush1.msra.mxu0 0.0
        %1850 = vmatprep.subr.mxu0 0.0
        %1851 = vmatpush1.msra.mxu0 0.0
        %1852 = vmatprep.subr.mxu0 0.0
        %1853 = vmatpush1.msra.mxu0 0.0
        %1854 = vmatprep.subr.mxu0 0.0
        %1855 = vmatpush1.msra.mxu0 0.0
        %1856 = vmatprep.subr.mxu0 0.0
        %1857 = vmatpush1.msra.mxu0 0.0
        %1858 = vmatprep.subr.mxu0 0.0
        %1859 = vmatpush1.msra.mxu0 0.0
        %1860 = vmatprep.subr.mxu0 0.0
        %1861 = vmatpush1.msra.mxu0 0.0
        %1862 = vmatprep.subr.mxu0 0.0
        %1863 = vmatpush1.msra.mxu0 0.0
        %1864 = vmatprep.subr.mxu0 0.0
        %1865 = vmatpush1.msra.mxu0 0.0
        %1866 = vmatprep.subr.mxu0 0.0
        %1867 = vmatpush1.msra.mxu0 0.0
        %1868 = vmatprep.subr.mxu0 0.0
        %1869 = vmatpush1.msra.mxu0 0.0
        %1870 = vmatprep.subr.mxu0 0.0
        %1871 = vmatpush1.msra.mxu0 0.0
        %1872 = vmatprep.subr.mxu0 0.0
        %1873 = vmatpush1.msra.mxu0 0.0
        %1874 = vmatprep.mubr.f32.mxu0 0.0
        %1875 = vmatmul.mubr.f32.gmra.mrb[0].mxu0 %v1805
        %v1876 = vpop.f32.mrb[0].mxu0
        %v1877 = vadd.f32 0.0, %v1876
        %v1878 = vpop.f32.mrb[0].mxu0
        %1879 = vmatprep.mubr.f32.mxu0 0.0
        %1880 = vmatmul.mubr.f32.gmra.mrb[0].mxu0 %v1808
        %v1881 = vpop.f32.mrb[0].mxu0
        %v1882 = vadd.f32 0.0, %v1881
        %v1883 = vpop.f32.mrb[0].mxu0
        %1884 = vdwg.mxu0
        %1885 = vrot.lane.b32.xlu0 %v1677, 120
        %v1886 = vpop.permute.xlu0 %1885
        %1887 = vrot.lane.b32.xlu0 %v1682, 120
        %v1888 = vpop.permute.xlu0 %1887
        %1889 = vrot.lane.b32.xlu0 %v1677, 88
        %v1890 = vpop.permute.xlu0 %1889
        %1891 = vrot.lane.b32.xlu0 %v1682, 88
        %v1892 = vpop.permute.xlu0 %1891
        %v1893 = vsel %vm579, %v1886, 0
        %v1895 = vsel %vm579, %v1888, 0
        %v1897 = vsel %vm579, %v1890, 0
        %v1899 = vsel %vm579, %v1892, 0
        %1901 = vmatprep.subr.mxu0 0.0
        %1902 = vmatpush1.xpose.msra.mxu0 %v1897
        %1903 = vmatprep.subr.mxu0 0.0
        %1904 = vmatpush1.xpose.msra.mxu0 %v1899
        %1905 = vmatprep.subr.mxu0 0.0
        %1906 = vmatpush1.xpose.msra.mxu0 0.0
        %1907 = vmatprep.subr.mxu0 0.0
        %1908 = vmatpush1.xpose.msra.mxu0 0.0
        %1909 = vmatprep.subr.mxu0 0.0
        %1910 = vmatpush1.xpose.msra.mxu0 0.0
        %1911 = vmatprep.subr.mxu0 0.0
        %1912 = vmatpush1.xpose.msra.mxu0 0.0
        %1913 = vmatprep.subr.mxu0 0.0
        %1914 = vmatpush1.xpose.msra.mxu0 0.0
        %1915 = vmatprep.subr.mxu0 0.0
        %1916 = vmatpush1.xpose.msra.mxu0 0.0
        %1917 = vmatprep.subr.mxu0 0.0
        %1918 = vmatpush1.xpose.msra.mxu0 0.0
        %1919 = vmatprep.subr.mxu0 0.0
        %1920 = vmatpush1.xpose.msra.mxu0 0.0
        %1921 = vmatprep.subr.mxu0 0.0
        %1922 = vmatpush1.xpose.msra.mxu0 0.0
        %1923 = vmatprep.subr.mxu0 0.0
        %1924 = vmatpush1.xpose.msra.mxu0 0.0
        %1925 = vmatprep.subr.mxu0 0.0
        %1926 = vmatpush1.xpose.msra.mxu0 0.0
        %1927 = vmatprep.subr.mxu0 0.0
        %1928 = vmatpush1.xpose.msra.mxu0 0.0
        %1929 = vmatprep.subr.mxu0 0.0
        %1930 = vmatpush1.xpose.msra.mxu0 0.0
        %1931 = vmatprep.subr.mxu0 0.0
        %1932 = vmatpush1.xpose.msra.mxu0 0.0
        %1933 = vmatprep.subr.mxu0 0.0
        %1934 = vmatpush1.xpose.msra.mxu0 0.0
        %1935 = vmatprep.subr.mxu0 0.0
        %1936 = vmatpush1.xpose.msra.mxu0 0.0
        %1937 = vmatprep.subr.mxu0 0.0
        %1938 = vmatpush1.xpose.msra.mxu0 0.0
        %1939 = vmatprep.subr.mxu0 0.0
        %1940 = vmatpush1.xpose.msra.mxu0 0.0
        %1941 = vmatprep.subr.mxu0 0.0
        %1942 = vmatpush1.xpose.msra.mxu0 0.0
        %1943 = vmatprep.subr.mxu0 0.0
        %1944 = vmatpush1.xpose.msra.mxu0 0.0
        %1945 = vmatprep.subr.mxu0 0.0
        %1946 = vmatpush1.xpose.msra.mxu0 0.0
        %1947 = vmatprep.subr.mxu0 0.0
        %1948 = vmatpush1.xpose.msra.mxu0 0.0
        %1949 = vmatprep.subr.mxu0 0.0
        %1950 = vmatpush1.xpose.msra.mxu0 0.0
        %1951 = vmatprep.subr.mxu0 0.0
        %1952 = vmatpush1.xpose.msra.mxu0 0.0
        %1953 = vmatprep.subr.mxu0 0.0
        %1954 = vmatpush1.xpose.msra.mxu0 0.0
        %1955 = vmatprep.subr.mxu0 0.0
        %1956 = vmatpush1.xpose.msra.mxu0 0.0
        %1957 = vmatprep.subr.mxu0 0.0
        %1958 = vmatpush1.xpose.msra.mxu0 0.0
        %1959 = vmatprep.subr.mxu0 0.0
        %1960 = vmatpush1.xpose.msra.mxu0 0.0
        %1961 = vmatprep.subr.mxu0 0.0
        %1962 = vmatpush1.xpose.msra.mxu0 0.0
        %1963 = vmatprep.subr.mxu0 0.0
        %1964 = vmatpush1.xpose.msra.mxu0 0.0
        %1965 = vmatprep.mubr.f32.mxu0 0.0
        %1966 = vmatmul.mubr.f32.gmra.mrb[0].mxu0 %v1893
        %v1967 = vpop.f32.mrb[0].mxu0
        %v1968 = vadd.f32 0.0, %v1967
        %v1969 = vpop.f32.mrb[0].mxu0
        %1970 = vmatprep.mubr.f32.mxu0 0.0
        %1971 = vmatmul.mubr.f32.gmra.mrb[0].mxu0 %v1895
        %v1972 = vpop.f32.mrb[0].mxu0
        %v1973 = vadd.f32 0.0, %v1972
        %v1974 = vpop.f32.mrb[0].mxu0
        %1975 = vdwg.mxu0
        %v1976 = vmul.f32 %v1968, 0.35355338
        %v1977 = vmul.f32 %v1973, 0.35355338
        %v1978 = vsel %vm665, %v1976, -inf
        %1979 = vmax.xlane.f32.xlu0 %v1978
        %v1980 = vpop.xlane.xlu0 %1979
        %v1981 = vsel %vm665, %v1977, -inf
        %1982 = vmax.xlane.f32.xlu0 %v1981
        %v1983 = vpop.xlane.xlu0 %1982
        %v1984 = vsub.f32 %v1976, %v1980
        %v1985 = vsub.f32 %v1977, %v1983
        %v1986 = vmul.f32 %v1984, 1.442695
        %v1987 = vpow.pop %v1986
        %v1988 = vmul.f32 %v1985, 1.442695
        %v1989 = vpow.pop %v1988
        %v1990 = vsel %vm665, %v1987, 0.0
        %1991 = vadd.xlane.f32.xlu0 %v1990
        %v1992 = vpop.xlane.xlu0 %1991
        %v1993 = vsel %vm665, %v1989, 0.0
        %1994 = vadd.xlane.f32.xlu0 %v1993
        %v1995 = vpop.xlane.xlu0 %1994
        %v1996 = vrcp.pop %v1992
        %v1997 = vrcp.pop %v1995
        %v1998 = vmul.f32 %v1987, %v1996
        %v1999 = vmul.f32 %v1989, %v1997
        %2000 = vrot.lane.b32.xlu0 %v1677, 56
        %v2001 = vpop.permute.xlu0 %2000
        %2002 = vrot.lane.b32.xlu0 %v1682, 56
        %v2003 = vpop.permute.xlu0 %2002
        %v2007 = vsel %vm665, %v1998, 0
        %v2010 = vsel %vm665, %v1999, 0
        %2012 = vmatprep.subr.mxu0 0.0
        %2013 = vmatpush1.msra.mxu0 %v2001
        %2014 = vmatprep.subr.mxu0 0.0
        %2015 = vmatpush1.msra.mxu0 %v2003
        %2016 = vmatprep.subr.mxu0 0.0
        %2017 = vmatpush1.msra.mxu0 0.0
        %2018 = vmatprep.subr.mxu0 0.0
        %2019 = vmatpush1.msra.mxu0 0.0
        %2020 = vmatprep.subr.mxu0 0.0
        %2021 = vmatpush1.msra.mxu0 0.0
        %2022 = vmatprep.subr.mxu0 0.0
        %2023 = vmatpush1.msra.mxu0 0.0
        %2024 = vmatprep.subr.mxu0 0.0
        %2025 = vmatpush1.msra.mxu0 0.0
        %2026 = vmatprep.subr.mxu0 0.0
        %2027 = vmatpush1.msra.mxu0 0.0
        %2028 = vmatprep.subr.mxu0 0.0
        %2029 = vmatpush1.msra.mxu0 0.0
        %2030 = vmatprep.subr.mxu0 0.0
        %2031 = vmatpush1.msra.mxu0 0.0
        %2032 = vmatprep.subr.mxu0 0.0
        %2033 = vmatpush1.msra.mxu0 0.0
        %2034 = vmatprep.subr.mxu0 0.0
        %2035 = vmatpush1.msra.mxu0 0.0
        %2036 = vmatprep.subr.mxu0 0.0
        %2037 = vmatpush1.msra.mxu0 0.0
        %2038 = vmatprep.subr.mxu0 0.0
        %2039 = vmatpush1.msra.mxu0 0.0
        %2040 = vmatprep.subr.mxu0 0.0
        %2041 = vmatpush1.msra.mxu0 0.0
        %2042 = vmatprep.subr.mxu0 0.0
        %2043 = vmatpush1.msra.mxu0 0.0
        %2044 = vmatprep.subr.mxu0 0.0
        %2045 = vmatpush1.msra.mxu0 0.0
        %2046 = vmatprep.subr.mxu0 0.0
        %2047 = vmatpush1.msra.mxu0 0.0
        %2048 = vmatprep.subr.mxu0 0.0
        %2049 = vmatpush1.msra.mxu0 0.0
        %2050 = vmatprep.subr.mxu0 0.0
        %2051 = vmatpush1.msra.mxu0 0.0
        %2052 = vmatprep.subr.mxu0 0.0
        %2053 = vmatpush1.msra.mxu0 0.0
        %2054 = vmatprep.subr.mxu0 0.0
        %2055 = vmatpush1.msra.mxu0 0.0
        %2056 = vmatprep.subr.mxu0 0.0
        %2057 = vmatpush1.msra.mxu0 0.0
        %2058 = vmatprep.subr.mxu0 0.0
        %2059 = vmatpush1.msra.mxu0 0.0
        %2060 = vmatprep.subr.mxu0 0.0
        %2061 = vmatpush1.msra.mxu0 0.0
        %2062 = vmatprep.subr.mxu0 0.0
        %2063 = vmatpush1.msra.mxu0 0.0
        %2064 = vmatprep.subr.mxu0 0.0
        %2065 = vmatpush1.msra.mxu0 0.0
        %2066 = vmatprep.subr.mxu0 0.0
        %2067 = vmatpush1.msra.mxu0 0.0
        %2068 = vmatprep.subr.mxu0 0.0
        %2069 = vmatpush1.msra.mxu0 0.0
        %2070 = vmatprep.subr.mxu0 0.0
        %2071 = vmatpush1.msra.mxu0 0.0
        %2072 = vmatprep.subr.mxu0 0.0
        %2073 = vmatpush1.msra.mxu0 0.0
        %2074 = vmatprep.subr.mxu0 0.0
        %2075 = vmatpush1.msra.mxu0 0.0
        %2076 = vmatprep.mubr.f32.mxu0 0.0
        %2077 = vmatmul.mubr.f32.gmra.mrb[0].mxu0 %v2007
        %v2078 = vpop.f32.mrb[0].mxu0
        %v2079 = vadd.f32 0.0, %v2078
        %v2080 = vpop.f32.mrb[0].mxu0
        %2081 = vmatprep.mubr.f32.mxu0 0.0
        %2082 = vmatmul.mubr.f32.gmra.mrb[0].mxu0 %v2010
        %v2083 = vpop.f32.mrb[0].mxu0
        %v2084 = vadd.f32 0.0, %v2083
        %v2085 = vpop.f32.mrb[0].mxu0
        %2086 = vdwg.mxu0
        %2087 = vrot.lane.b32.xlu0 %v1677, 112
        %v2088 = vpop.permute.xlu0 %2087
        %2089 = vrot.lane.b32.xlu0 %v1682, 112
        %v2090 = vpop.permute.xlu0 %2089
        %2091 = vrot.lane.b32.xlu0 %v1677, 80
        %v2092 = vpop.permute.xlu0 %2091
        %2093 = vrot.lane.b32.xlu0 %v1682, 80
        %v2094 = vpop.permute.xlu0 %2093
        %v2095 = vsel %vm579, %v2088, 0
        %v2097 = vsel %vm579, %v2090, 0
        %v2099 = vsel %vm579, %v2092, 0
        %v2101 = vsel %vm579, %v2094, 0
        %2103 = vmatprep.subr.mxu0 0.0
        %2104 = vmatpush1.xpose.msra.mxu0 %v2099
        %2105 = vmatprep.subr.mxu0 0.0
        %2106 = vmatpush1.xpose.msra.mxu0 %v2101
        %2107 = vmatprep.subr.mxu0 0.0
        %2108 = vmatpush1.xpose.msra.mxu0 0.0
        %2109 = vmatprep.subr.mxu0 0.0
        %2110 = vmatpush1.xpose.msra.mxu0 0.0
        %2111 = vmatprep.subr.mxu0 0.0
        %2112 = vmatpush1.xpose.msra.mxu0 0.0
        %2113 = vmatprep.subr.mxu0 0.0
        %2114 = vmatpush1.xpose.msra.mxu0 0.0
        %2115 = vmatprep.subr.mxu0 0.0
        %2116 = vmatpush1.xpose.msra.mxu0 0.0
        %2117 = vmatprep.subr.mxu0 0.0
        %2118 = vmatpush1.xpose.msra.mxu0 0.0
        %2119 = vmatprep.subr.mxu0 0.0
        %2120 = vmatpush1.xpose.msra.mxu0 0.0
        %2121 = vmatprep.subr.mxu0 0.0
        %2122 = vmatpush1.xpose.msra.mxu0 0.0
        %2123 = vmatprep.subr.mxu0 0.0
        %2124 = vmatpush1.xpose.msra.mxu0 0.0
        %2125 = vmatprep.subr.mxu0 0.0
        %2126 = vmatpush1.xpose.msra.mxu0 0.0
        %2127 = vmatprep.subr.mxu0 0.0
        %2128 = vmatpush1.xpose.msra.mxu0 0.0
        %2129 = vmatprep.subr.mxu0 0.0
        %2130 = vmatpush1.xpose.msra.mxu0 0.0
        %2131 = vmatprep.subr.mxu0 0.0
        %2132 = vmatpush1.xpose.msra.mxu0 0.0
        %2133 = vmatprep.subr.mxu0 0.0
        %2134 = vmatpush1.xpose.msra.mxu0 0.0
        %2135 = vmatprep.subr.mxu0 0.0
        %2136 = vmatpush1.xpose.msra.mxu0 0.0
        %2137 = vmatprep.subr.mxu0 0.0
        %2138 = vmatpush1.xpose.msra.mxu0 0.0
        %2139 = vmatprep.subr.mxu0 0.0
        %2140 = vmatpush1.xpose.msra.mxu0 0.0
        %2141 = vmatprep.subr.mxu0 0.0
        %2142 = vmatpush1.xpose.msra.mxu0 0.0
        %2143 = vmatprep.subr.mxu0 0.0
        %2144 = vmatpush1.xpose.msra.mxu0 0.0
        %2145 = vmatprep.subr.mxu0 0.0
        %2146 = vmatpush1.xpose.msra.mxu0 0.0
        %2147 = vmatprep.subr.mxu0 0.0
        %2148 = vmatpush1.xpose.msra.mxu0 0.0
        %2149 = vmatprep.subr.mxu0 0.0
        %2150 = vmatpush1.xpose.msra.mxu0 0.0
        %2151 = vmatprep.subr.mxu0 0.0
        %2152 = vmatpush1.xpose.msra.mxu0 0.0
        %2153 = vmatprep.subr.mxu0 0.0
        %2154 = vmatpush1.xpose.msra.mxu0 0.0
        %2155 = vmatprep.subr.mxu0 0.0
        %2156 = vmatpush1.xpose.msra.mxu0 0.0
        %2157 = vmatprep.subr.mxu0 0.0
        %2158 = vmatpush1.xpose.msra.mxu0 0.0
        %2159 = vmatprep.subr.mxu0 0.0
        %2160 = vmatpush1.xpose.msra.mxu0 0.0
        %2161 = vmatprep.subr.mxu0 0.0
        %2162 = vmatpush1.xpose.msra.mxu0 0.0
        %2163 = vmatprep.subr.mxu0 0.0
        %2164 = vmatpush1.xpose.msra.mxu0 0.0
        %2165 = vmatprep.subr.mxu0 0.0
        %2166 = vmatpush1.xpose.msra.mxu0 0.0
        %2167 = vmatprep.mubr.f32.mxu0 0.0
        %2168 = vmatmul.mubr.f32.gmra.mrb[0].mxu0 %v2095
        %v2169 = vpop.f32.mrb[0].mxu0
        %v2170 = vadd.f32 0.0, %v2169
        %v2171 = vpop.f32.mrb[0].mxu0
        %2172 = vmatprep.mubr.f32.mxu0 0.0
        %2173 = vmatmul.mubr.f32.gmra.mrb[0].mxu0 %v2097
        %v2174 = vpop.f32.mrb[0].mxu0
        %v2175 = vadd.f32 0.0, %v2174
        %v2176 = vpop.f32.mrb[0].mxu0
        %2177 = vdwg.mxu0
        %v2178 = vmul.f32 %v2170, 0.35355338
        %v2179 = vmul.f32 %v2175, 0.35355338
        %v2180 = vsel %vm665, %v2178, -inf
        %2181 = vmax.xlane.f32.xlu0 %v2180
        %v2182 = vpop.xlane.xlu0 %2181
        %v2183 = vsel %vm665, %v2179, -inf
        %2184 = vmax.xlane.f32.xlu0 %v2183
        %v2185 = vpop.xlane.xlu0 %2184
        %v2186 = vsub.f32 %v2178, %v2182
        %v2187 = vsub.f32 %v2179, %v2185
        %v2188 = vmul.f32 %v2186, 1.442695
        %v2189 = vpow.pop %v2188
        %v2190 = vmul.f32 %v2187, 1.442695
        %v2191 = vpow.pop %v2190
        %v2192 = vsel %vm665, %v2189, 0.0
        %2193 = vadd.xlane.f32.xlu0 %v2192
        %v2194 = vpop.xlane.xlu0 %2193
        %v2195 = vsel %vm665, %v2191, 0.0
        %2196 = vadd.xlane.f32.xlu0 %v2195
        %v2197 = vpop.xlane.xlu0 %2196
        %v2198 = vrcp.pop %v2194
        %v2199 = vrcp.pop %v2197
        %v2200 = vmul.f32 %v2189, %v2198
        %v2201 = vmul.f32 %v2191, %v2199
        %2202 = vrot.lane.b32.xlu0 %v1677, 48
        %v2203 = vpop.permute.xlu0 %2202
        %2204 = vrot.lane.b32.xlu0 %v1682, 48
        %v2205 = vpop.permute.xlu0 %2204
        %v2209 = vsel %vm665, %v2200, 0
        %v2212 = vsel %vm665, %v2201, 0
        %2214 = vmatprep.subr.mxu0 0.0
        %2215 = vmatpush1.msra.mxu0 %v2203
        %2216 = vmatprep.subr.mxu0 0.0
        %2217 = vmatpush1.msra.mxu0 %v2205
        %2218 = vmatprep.subr.mxu0 0.0
        %2219 = vmatpush1.msra.mxu0 0.0
        %2220 = vmatprep.subr.mxu0 0.0
        %2221 = vmatpush1.msra.mxu0 0.0
        %2222 = vmatprep.subr.mxu0 0.0
        %2223 = vmatpush1.msra.mxu0 0.0
        %2224 = vmatprep.subr.mxu0 0.0
        %2225 = vmatpush1.msra.mxu0 0.0
        %2226 = vmatprep.subr.mxu0 0.0
        %2227 = vmatpush1.msra.mxu0 0.0
        %2228 = vmatprep.subr.mxu0 0.0
        %2229 = vmatpush1.msra.mxu0 0.0
        %2230 = vmatprep.subr.mxu0 0.0
        %2231 = vmatpush1.msra.mxu0 0.0
        %2232 = vmatprep.subr.mxu0 0.0
        %2233 = vmatpush1.msra.mxu0 0.0
        %2234 = vmatprep.subr.mxu0 0.0
        %2235 = vmatpush1.msra.mxu0 0.0
        %2236 = vmatprep.subr.mxu0 0.0
        %2237 = vmatpush1.msra.mxu0 0.0
        %2238 = vmatprep.subr.mxu0 0.0
        %2239 = vmatpush1.msra.mxu0 0.0
        %2240 = vmatprep.subr.mxu0 0.0
        %2241 = vmatpush1.msra.mxu0 0.0
        %2242 = vmatprep.subr.mxu0 0.0
        %2243 = vmatpush1.msra.mxu0 0.0
        %2244 = vmatprep.subr.mxu0 0.0
        %2245 = vmatpush1.msra.mxu0 0.0
        %2246 = vmatprep.subr.mxu0 0.0
        %2247 = vmatpush1.msra.mxu0 0.0
        %2248 = vmatprep.subr.mxu0 0.0
        %2249 = vmatpush1.msra.mxu0 0.0
        %2250 = vmatprep.subr.mxu0 0.0
        %2251 = vmatpush1.msra.mxu0 0.0
        %2252 = vmatprep.subr.mxu0 0.0
        %2253 = vmatpush1.msra.mxu0 0.0
        %2254 = vmatprep.subr.mxu0 0.0
        %2255 = vmatpush1.msra.mxu0 0.0
        %2256 = vmatprep.subr.mxu0 0.0
        %2257 = vmatpush1.msra.mxu0 0.0
        %2258 = vmatprep.subr.mxu0 0.0
        %2259 = vmatpush1.msra.mxu0 0.0
        %2260 = vmatprep.subr.mxu0 0.0
        %2261 = vmatpush1.msra.mxu0 0.0
        %2262 = vmatprep.subr.mxu0 0.0
        %2263 = vmatpush1.msra.mxu0 0.0
        %2264 = vmatprep.subr.mxu0 0.0
        %2265 = vmatpush1.msra.mxu0 0.0
        %2266 = vmatprep.subr.mxu0 0.0
        %2267 = vmatpush1.msra.mxu0 0.0
        %2268 = vmatprep.subr.mxu0 0.0
        %2269 = vmatpush1.msra.mxu0 0.0
        %2270 = vmatprep.subr.mxu0 0.0
        %2271 = vmatpush1.msra.mxu0 0.0
        %2272 = vmatprep.subr.mxu0 0.0
        %2273 = vmatpush1.msra.mxu0 0.0
        %2274 = vmatprep.subr.mxu0 0.0
        %2275 = vmatpush1.msra.mxu0 0.0
        %2276 = vmatprep.subr.mxu0 0.0
        %2277 = vmatpush1.msra.mxu0 0.0
        %2278 = vmatprep.mubr.f32.mxu0 0.0
        %2279 = vmatmul.mubr.f32.gmra.mrb[0].mxu0 %v2209
        %v2280 = vpop.f32.mrb[0].mxu0
        %v2281 = vadd.f32 0.0, %v2280
        %v2282 = vpop.f32.mrb[0].mxu0
        %2283 = vmatprep.mubr.f32.mxu0 0.0
        %2284 = vmatmul.mubr.f32.gmra.mrb[0].mxu0 %v2212
        %v2285 = vpop.f32.mrb[0].mxu0
        %v2286 = vadd.f32 0.0, %v2285
        %v2287 = vpop.f32.mrb[0].mxu0
        %2288 = vdwg.mxu0
        %2289 = vrot.lane.b32.xlu0 %v1677, 104
        %v2290 = vpop.permute.xlu0 %2289
        %2291 = vrot.lane.b32.xlu0 %v1682, 104
        %v2292 = vpop.permute.xlu0 %2291
        %2293 = vrot.lane.b32.xlu0 %v1677, 72
        %v2294 = vpop.permute.xlu0 %2293
        %2295 = vrot.lane.b32.xlu0 %v1682, 72
        %v2296 = vpop.permute.xlu0 %2295
        %v2297 = vsel %vm579, %v2290, 0
        %v2299 = vsel %vm579, %v2292, 0
        %v2301 = vsel %vm579, %v2294, 0
        %v2303 = vsel %vm579, %v2296, 0
        %2305 = vmatprep.subr.mxu0 0.0
        %2306 = vmatpush1.xpose.msra.mxu0 %v2301
        %2307 = vmatprep.subr.mxu0 0.0
        %2308 = vmatpush1.xpose.msra.mxu0 %v2303
        %2309 = vmatprep.subr.mxu0 0.0
        %2310 = vmatpush1.xpose.msra.mxu0 0.0
        %2311 = vmatprep.subr.mxu0 0.0
        %2312 = vmatpush1.xpose.msra.mxu0 0.0
        %2313 = vmatprep.subr.mxu0 0.0
        %2314 = vmatpush1.xpose.msra.mxu0 0.0
        %2315 = vmatprep.subr.mxu0 0.0
        %2316 = vmatpush1.xpose.msra.mxu0 0.0
        %2317 = vmatprep.subr.mxu0 0.0
        %2318 = vmatpush1.xpose.msra.mxu0 0.0
        %2319 = vmatprep.subr.mxu0 0.0
        %2320 = vmatpush1.xpose.msra.mxu0 0.0
        %2321 = vmatprep.subr.mxu0 0.0
        %2322 = vmatpush1.xpose.msra.mxu0 0.0
        %2323 = vmatprep.subr.mxu0 0.0
        %2324 = vmatpush1.xpose.msra.mxu0 0.0
        %2325 = vmatprep.subr.mxu0 0.0
        %2326 = vmatpush1.xpose.msra.mxu0 0.0
        %2327 = vmatprep.subr.mxu0 0.0
        %2328 = vmatpush1.xpose.msra.mxu0 0.0
        %2329 = vmatprep.subr.mxu0 0.0
        %2330 = vmatpush1.xpose.msra.mxu0 0.0
        %2331 = vmatprep.subr.mxu0 0.0
        %2332 = vmatpush1.xpose.msra.mxu0 0.0
        %2333 = vmatprep.subr.mxu0 0.0
        %2334 = vmatpush1.xpose.msra.mxu0 0.0
        %2335 = vmatprep.subr.mxu0 0.0
        %2336 = vmatpush1.xpose.msra.mxu0 0.0
        %2337 = vmatprep.subr.mxu0 0.0
        %2338 = vmatpush1.xpose.msra.mxu0 0.0
        %2339 = vmatprep.subr.mxu0 0.0
        %2340 = vmatpush1.xpose.msra.mxu0 0.0
        %2341 = vmatprep.subr.mxu0 0.0
        %2342 = vmatpush1.xpose.msra.mxu0 0.0
        %2343 = vmatprep.subr.mxu0 0.0
        %2344 = vmatpush1.xpose.msra.mxu0 0.0
        %2345 = vmatprep.subr.mxu0 0.0
        %2346 = vmatpush1.xpose.msra.mxu0 0.0
        %2347 = vmatprep.subr.mxu0 0.0
        %2348 = vmatpush1.xpose.msra.mxu0 0.0
        %2349 = vmatprep.subr.mxu0 0.0
        %2350 = vmatpush1.xpose.msra.mxu0 0.0
        %2351 = vmatprep.subr.mxu0 0.0
        %2352 = vmatpush1.xpose.msra.mxu0 0.0
        %2353 = vmatprep.subr.mxu0 0.0
        %2354 = vmatpush1.xpose.msra.mxu0 0.0
        %2355 = vmatprep.subr.mxu0 0.0
        %2356 = vmatpush1.xpose.msra.mxu0 0.0
        %2357 = vmatprep.subr.mxu0 0.0
        %2358 = vmatpush1.xpose.msra.mxu0 0.0
        %2359 = vmatprep.subr.mxu0 0.0
        %2360 = vmatpush1.xpose.msra.mxu0 0.0
        %2361 = vmatprep.subr.mxu0 0.0
        %2362 = vmatpush1.xpose.msra.mxu0 0.0
        %2363 = vmatprep.subr.mxu0 0.0
        %2364 = vmatpush1.xpose.msra.mxu0 0.0
        %2365 = vmatprep.subr.mxu0 0.0
        %2366 = vmatpush1.xpose.msra.mxu0 0.0
        %2367 = vmatprep.subr.mxu0 0.0
        %2368 = vmatpush1.xpose.msra.mxu0 0.0
        %2369 = vmatprep.mubr.f32.mxu0 0.0
        %2370 = vmatmul.mubr.f32.gmra.mrb[0].mxu0 %v2297
        %v2371 = vpop.f32.mrb[0].mxu0
        %v2372 = vadd.f32 0.0, %v2371
        %v2373 = vpop.f32.mrb[0].mxu0
        %2374 = vmatprep.mubr.f32.mxu0 0.0
        %2375 = vmatmul.mubr.f32.gmra.mrb[0].mxu0 %v2299
        %v2376 = vpop.f32.mrb[0].mxu0
        %v2377 = vadd.f32 0.0, %v2376
        %v2378 = vpop.f32.mrb[0].mxu0
        %2379 = vdwg.mxu0
        %v2380 = vmul.f32 %v2372, 0.35355338
        %v2381 = vmul.f32 %v2377, 0.35355338
        %v2382 = vsel %vm665, %v2380, -inf
        %2383 = vmax.xlane.f32.xlu0 %v2382
        %v2384 = vpop.xlane.xlu0 %2383
        %v2385 = vsel %vm665, %v2381, -inf
        %2386 = vmax.xlane.f32.xlu0 %v2385
        %v2387 = vpop.xlane.xlu0 %2386
        %v2388 = vsub.f32 %v2380, %v2384
        %v2389 = vsub.f32 %v2381, %v2387
        %v2390 = vmul.f32 %v2388, 1.442695
        %v2391 = vpow.pop %v2390
        %v2392 = vmul.f32 %v2389, 1.442695
        %v2393 = vpow.pop %v2392
        %v2394 = vsel %vm665, %v2391, 0.0
        %2395 = vadd.xlane.f32.xlu0 %v2394
        %v2396 = vpop.xlane.xlu0 %2395
        %v2397 = vsel %vm665, %v2393, 0.0
        %2398 = vadd.xlane.f32.xlu0 %v2397
        %v2399 = vpop.xlane.xlu0 %2398
        %v2400 = vrcp.pop %v2396
        %v2401 = vrcp.pop %v2399
        %v2402 = vmul.f32 %v2391, %v2400
        %v2403 = vmul.f32 %v2393, %v2401
        %2404 = vrot.lane.b32.xlu0 %v1677, 40
        %v2405 = vpop.permute.xlu0 %2404
        %2406 = vrot.lane.b32.xlu0 %v1682, 40
        %v2407 = vpop.permute.xlu0 %2406
        %v2411 = vsel %vm665, %v2402, 0
        %v2414 = vsel %vm665, %v2403, 0
        %2416 = vmatprep.subr.mxu0 0.0
        %2417 = vmatpush1.msra.mxu0 %v2405
        %2418 = vmatprep.subr.mxu0 0.0
        %2419 = vmatpush1.msra.mxu0 %v2407
        %2420 = vmatprep.subr.mxu0 0.0
        %2421 = vmatpush1.msra.mxu0 0.0
        %2422 = vmatprep.subr.mxu0 0.0
        %2423 = vmatpush1.msra.mxu0 0.0
        %2424 = vmatprep.subr.mxu0 0.0
        %2425 = vmatpush1.msra.mxu0 0.0
        %2426 = vmatprep.subr.mxu0 0.0
        %2427 = vmatpush1.msra.mxu0 0.0
        %2428 = vmatprep.subr.mxu0 0.0
        %2429 = vmatpush1.msra.mxu0 0.0
        %2430 = vmatprep.subr.mxu0 0.0
        %2431 = vmatpush1.msra.mxu0 0.0
        %2432 = vmatprep.subr.mxu0 0.0
        %2433 = vmatpush1.msra.mxu0 0.0
        %2434 = vmatprep.subr.mxu0 0.0
        %2435 = vmatpush1.msra.mxu0 0.0
        %2436 = vmatprep.subr.mxu0 0.0
        %2437 = vmatpush1.msra.mxu0 0.0
        %2438 = vmatprep.subr.mxu0 0.0
        %2439 = vmatpush1.msra.mxu0 0.0
        %2440 = vmatprep.subr.mxu0 0.0
        %2441 = vmatpush1.msra.mxu0 0.0
        %2442 = vmatprep.subr.mxu0 0.0
        %2443 = vmatpush1.msra.mxu0 0.0
        %2444 = vmatprep.subr.mxu0 0.0
        %2445 = vmatpush1.msra.mxu0 0.0
        %2446 = vmatprep.subr.mxu0 0.0
        %2447 = vmatpush1.msra.mxu0 0.0
        %2448 = vmatprep.subr.mxu0 0.0
        %2449 = vmatpush1.msra.mxu0 0.0
        %2450 = vmatprep.subr.mxu0 0.0
        %2451 = vmatpush1.msra.mxu0 0.0
        %2452 = vmatprep.subr.mxu0 0.0
        %2453 = vmatpush1.msra.mxu0 0.0
        %2454 = vmatprep.subr.mxu0 0.0
        %2455 = vmatpush1.msra.mxu0 0.0
        %2456 = vmatprep.subr.mxu0 0.0
        %2457 = vmatpush1.msra.mxu0 0.0
        %2458 = vmatprep.subr.mxu0 0.0
        %2459 = vmatpush1.msra.mxu0 0.0
        %2460 = vmatprep.subr.mxu0 0.0
        %2461 = vmatpush1.msra.mxu0 0.0
        %2462 = vmatprep.subr.mxu0 0.0
        %2463 = vmatpush1.msra.mxu0 0.0
        %2464 = vmatprep.subr.mxu0 0.0
        %2465 = vmatpush1.msra.mxu0 0.0
        %2466 = vmatprep.subr.mxu0 0.0
        %2467 = vmatpush1.msra.mxu0 0.0
        %2468 = vmatprep.subr.mxu0 0.0
        %2469 = vmatpush1.msra.mxu0 0.0
        %2470 = vmatprep.subr.mxu0 0.0
        %2471 = vmatpush1.msra.mxu0 0.0
        %2472 = vmatprep.subr.mxu0 0.0
        %2473 = vmatpush1.msra.mxu0 0.0
        %2474 = vmatprep.subr.mxu0 0.0
        %2475 = vmatpush1.msra.mxu0 0.0
        %2476 = vmatprep.subr.mxu0 0.0
        %2477 = vmatpush1.msra.mxu0 0.0
        %2478 = vmatprep.subr.mxu0 0.0
        %2479 = vmatpush1.msra.mxu0 0.0
        %2480 = vmatprep.mubr.f32.mxu0 0.0
        %2481 = vmatmul.mubr.f32.gmra.mrb[0].mxu0 %v2411
        %v2482 = vpop.f32.mrb[0].mxu0
        %v2483 = vadd.f32 0.0, %v2482
        %v2484 = vpop.f32.mrb[0].mxu0
        %2485 = vmatprep.mubr.f32.mxu0 0.0
        %2486 = vmatmul.mubr.f32.gmra.mrb[0].mxu0 %v2414
        %v2487 = vpop.f32.mrb[0].mxu0
        %v2488 = vadd.f32 0.0, %v2487
        %v2489 = vpop.f32.mrb[0].mxu0
        %2490 = vdwg.mxu0
        %2493 = vrot.lane.b32.xlu0 %v2079, 8
        %v2494 = vpop.permute.xlu0 %2493
        %2495 = vrot.lane.b32.xlu0 %v2084, 8
        %v2496 = vpop.permute.xlu0 %2495
        %2501 = vrot.lane.b32.xlu0 %v2281, 16
        %v2502 = vpop.permute.xlu0 %2501
        %2503 = vrot.lane.b32.xlu0 %v2286, 16
        %v2504 = vpop.permute.xlu0 %2503
        %2509 = vrot.lane.b32.xlu0 %v2483, 24
        %v2510 = vpop.permute.xlu0 %2509
        %2511 = vrot.lane.b32.xlu0 %v2488, 24
        %v2512 = vpop.permute.xlu0 %2511
        %v2515 = vsel %vm579, %v1877, %v2494
        %v2516 = vsel %vm579, %v1882, %v2496
        %v2517 = vsel %vm665, %v2515, %v2502
        %v2518 = vsel %vm665, %v2516, %v2504
        %v2519 = vsel %vm1409, %v2517, %v2510
        %v2520 = vsel %vm1409, %v2518, %v2512
        %s2521 = scalar_lea.vmem [#allocation8], 32
        %v2522 = vld [vmem:[%s2521] sm:$0xff]
        %v2523 = vld [vmem:[%s2521 + $0x8] sm:$0xff]
        %v2524 = vld [vmem:[%s2521 + $0x10] sm:$0xff]
        %v2525 = vld [vmem:[%s2521 + $0x18] sm:$0xff]
        %s2526 = scalar_lea.vmem %s6, 1
        %v2527 = vld [vmem:[%s2526] sm:$0x1]
        %v2529 = vlaneseq
        %v2530 = vshrl.u32 %v2529, 7
        %v2531 = vsub.s32 0, %v2530
        %v2532 = vrot.slane %v2527, %v2531
        %v2535 = vsel %vm388, %v2519, 0
        %v2538 = vsel %vm388, %v2520, 0
        %2540 = vmatprep.subr.mxu0 0.0
        %2541 = vmatpush1.msra.mxu0 %v2522
        %2542 = vmatprep.subr.mxu0 0.0
        %2543 = vmatpush1.msra.mxu0 %v2523
        %2544 = vmatprep.subr.mxu0 0.0
        %2545 = vmatpush1.msra.mxu0 %v2524
        %2546 = vmatprep.subr.mxu0 0.0
        %2547 = vmatpush1.msra.mxu0 %v2525
        %2548 = vmatprep.subr.mxu0 0.0
        %2549 = vmatpush1.msra.mxu0 0.0
        %2550 = vmatprep.subr.mxu0 0.0
        %2551 = vmatpush1.msra.mxu0 0.0
        %2552 = vmatprep.subr.mxu0 0.0
        %2553 = vmatpush1.msra.mxu0 0.0
        %2554 = vmatprep.subr.mxu0 0.0
        %2555 = vmatpush1.msra.mxu0 0.0
        %2556 = vmatprep.subr.mxu0 0.0
        %2557 = vmatpush1.msra.mxu0 0.0
        %2558 = vmatprep.subr.mxu0 0.0
        %2559 = vmatpush1.msra.mxu0 0.0
        %2560 = vmatprep.subr.mxu0 0.0
        %2561 = vmatpush1.msra.mxu0 0.0
        %2562 = vmatprep.subr.mxu0 0.0
        %2563 = vmatpush1.msra.mxu0 0.0
        %2564 = vmatprep.subr.mxu0 0.0
        %2565 = vmatpush1.msra.mxu0 0.0
        %2566 = vmatprep.subr.mxu0 0.0
        %2567 = vmatpush1.msra.mxu0 0.0
        %2568 = vmatprep.subr.mxu0 0.0
        %2569 = vmatpush1.msra.mxu0 0.0
        %2570 = vmatprep.subr.mxu0 0.0
        %2571 = vmatpush1.msra.mxu0 0.0
        %2572 = vmatprep.subr.mxu0 0.0
        %2573 = vmatpush1.msra.mxu0 0.0
        %2574 = vmatprep.subr.mxu0 0.0
        %2575 = vmatpush1.msra.mxu0 0.0
        %2576 = vmatprep.subr.mxu0 0.0
        %2577 = vmatpush1.msra.mxu0 0.0
        %2578 = vmatprep.subr.mxu0 0.0
        %2579 = vmatpush1.msra.mxu0 0.0
        %2580 = vmatprep.subr.mxu0 0.0
        %2581 = vmatpush1.msra.mxu0 0.0
        %2582 = vmatprep.subr.mxu0 0.0
        %2583 = vmatpush1.msra.mxu0 0.0
        %2584 = vmatprep.subr.mxu0 0.0
        %2585 = vmatpush1.msra.mxu0 0.0
        %2586 = vmatprep.subr.mxu0 0.0
        %2587 = vmatpush1.msra.mxu0 0.0
        %2588 = vmatprep.subr.mxu0 0.0
        %2589 = vmatpush1.msra.mxu0 0.0
        %2590 = vmatprep.subr.mxu0 0.0
        %2591 = vmatpush1.msra.mxu0 0.0
        %2592 = vmatprep.subr.mxu0 0.0
        %2593 = vmatpush1.msra.mxu0 0.0
        %2594 = vmatprep.subr.mxu0 0.0
        %2595 = vmatpush1.msra.mxu0 0.0
        %2596 = vmatprep.subr.mxu0 0.0
        %2597 = vmatpush1.msra.mxu0 0.0
        %2598 = vmatprep.subr.mxu0 0.0
        %2599 = vmatpush1.msra.mxu0 0.0
        %2600 = vmatprep.subr.mxu0 0.0
        %2601 = vmatpush1.msra.mxu0 0.0
        %2602 = vmatprep.subr.mxu0 0.0
        %2603 = vmatpush1.msra.mxu0 0.0
        %2604 = vmatprep.mubr.f32.mxu0 0.0
        %2605 = vmatmul.mubr.f32.gmra.mrb[0].mxu0 %v2535
        %v2606 = vpop.f32.mrb[0].mxu0
        %v2607 = vadd.f32 %v2532, %v2606
        %v2608 = vpop.f32.mrb[0].mxu0
        %2609 = vmatprep.mubr.f32.mxu0 0.0
        %2610 = vmatmul.mubr.f32.gmra.mrb[0].mxu0 %v2538
        %v2611 = vpop.f32.mrb[0].mxu0
        %v2612 = vadd.f32 %v2532, %v2611
        %v2613 = vpop.f32.mrb[0].mxu0
        %2614 = vdwg.mxu0
        %v2615 = vadd.f32 %v2607, %v1583
        %v2616 = vadd.f32 %v2612, %v1588
        %s2617 = scalar_lea.vmem [#allocation10], 32
        %v2618 = vld [vmem:[%s2617] sm:$0xff]
        %v2619 = vld [vmem:[%s2617 + $0x8] sm:$0xff]
        %v2620 = vld [vmem:[%s2617 + $0x10] sm:$0xff]
        %v2621 = vld [vmem:[%s2617 + $0x18] sm:$0xff]
        %v2623 = vsel %vm388, %v2615, 0
        %v2626 = vsel %vm388, %v2616, 0
        %2628 = vmatprep.subr.mxu0 0.0
        %2629 = vmatpush1.msra.mxu0 %v2618
        %2630 = vmatprep.subr.mxu0 0.0
        %2631 = vmatpush1.msra.mxu0 %v2619
        %2632 = vmatprep.subr.mxu0 0.0
        %2633 = vmatpush1.msra.mxu0 %v2620
        %2634 = vmatprep.subr.mxu0 0.0
        %2635 = vmatpush1.msra.mxu0 %v2621
        %2636 = vmatprep.subr.mxu0 0.0
        %2637 = vmatpush1.msra.mxu0 0.0
        %2638 = vmatprep.subr.mxu0 0.0
        %2639 = vmatpush1.msra.mxu0 0.0
        %2640 = vmatprep.subr.mxu0 0.0
        %2641 = vmatpush1.msra.mxu0 0.0
        %2642 = vmatprep.subr.mxu0 0.0
        %2643 = vmatpush1.msra.mxu0 0.0
        %2644 = vmatprep.subr.mxu0 0.0
        %2645 = vmatpush1.msra.mxu0 0.0
        %2646 = vmatprep.subr.mxu0 0.0
        %2647 = vmatpush1.msra.mxu0 0.0
        %2648 = vmatprep.subr.mxu0 0.0
        %2649 = vmatpush1.msra.mxu0 0.0
        %2650 = vmatprep.subr.mxu0 0.0
        %2651 = vmatpush1.msra.mxu0 0.0
        %2652 = vmatprep.subr.mxu0 0.0
        %2653 = vmatpush1.msra.mxu0 0.0
        %2654 = vmatprep.subr.mxu0 0.0
        %2655 = vmatpush1.msra.mxu0 0.0
        %2656 = vmatprep.subr.mxu0 0.0
        %2657 = vmatpush1.msra.mxu0 0.0
        %2658 = vmatprep.subr.mxu0 0.0
        %2659 = vmatpush1.msra.mxu0 0.0
        %2660 = vmatprep.subr.mxu0 0.0
        %2661 = vmatpush1.msra.mxu0 0.0
        %2662 = vmatprep.subr.mxu0 0.0
        %2663 = vmatpush1.msra.mxu0 0.0
        %2664 = vmatprep.subr.mxu0 0.0
        %2665 = vmatpush1.msra.mxu0 0.0
        %2666 = vmatprep.subr.mxu0 0.0
        %2667 = vmatpush1.msra.mxu0 0.0
        %2668 = vmatprep.subr.mxu0 0.0
        %2669 = vmatpush1.msra.mxu0 0.0
        %2670 = vmatprep.subr.mxu0 0.0
        %2671 = vmatpush1.msra.mxu0 0.0
        %2672 = vmatprep.subr.mxu0 0.0
        %2673 = vmatpush1.msra.mxu0 0.0
        %2674 = vmatprep.subr.mxu0 0.0
        %2675 = vmatpush1.msra.mxu0 0.0
        %2676 = vmatprep.subr.mxu0 0.0
        %2677 = vmatpush1.msra.mxu0 0.0
        %2678 = vmatprep.subr.mxu0 0.0
        %2679 = vmatpush1.msra.mxu0 0.0
        %2680 = vmatprep.subr.mxu0 0.0
        %2681 = vmatpush1.msra.mxu0 0.0
        %2682 = vmatprep.subr.mxu0 0.0
        %2683 = vmatpush1.msra.mxu0 0.0
        %2684 = vmatprep.subr.mxu0 0.0
        %2685 = vmatpush1.msra.mxu0 0.0
        %2686 = vmatprep.subr.mxu0 0.0
        %2687 = vmatpush1.msra.mxu0 0.0
        %2688 = vmatprep.subr.mxu0 0.0
        %2689 = vmatpush1.msra.mxu0 0.0
        %2690 = vmatprep.subr.mxu0 0.0
        %2691 = vmatpush1.msra.mxu0 0.0
        %2692 = vmatprep.mubr.f32.mxu0 0.0
        %2693 = vmatmul.mubr.f32.gmra.mrb[0].mxu0 %v2623
        %v2694 = vpop.f32.mrb[0].mxu0
        %v2695 = vadd.f32 %v2615, %v2694
        %v2696 = vpop.f32.mrb[0].mxu0
        %2697 = vmatprep.mubr.f32.mxu0 0.0
        %2698 = vmatmul.mubr.f32.gmra.mrb[0].mxu0 %v2626
        %v2699 = vpop.f32.mrb[0].mxu0
        %v2700 = vadd.f32 %v2616, %v2699
        %v2701 = vpop.f32.mrb[0].mxu0
        %2702 = vdwg.mxu0
        %2703 = vst.msk [vmem:[%s381] sm:$0xff] %vm388, %v2695
        %2704 = vst.msk [vmem:[%s381 + $0x8] sm:$0xff] %vm388, %v2700
        %s2705 = sand.u32 %s208, 1
        %s2706 = scalar_lea.sflag [#allocation4], %s2705
        %s2707 = sand.u32 %s208, 1
        %s2708 = smul.addr %s2707, 16
        %s2709 = scalar_lea.vmem [#allocation11], %s2708
        // Predicated region
        $region73: #{tpu_custom_call.1} parent=51 // pred_check
          %p2710 = pneg %p218
        $region74: #{tpu_custom_call.1} parent=51 // pred_check_branch
          %2712 = sbr.rel (%p2710) target = $region76
        $region75: #{tpu_custom_call.1} parent=51 // pred_region
          %s2714 = ssub.s32 256, 256
          %2715 = vsyncadd %s2706, %s2714
          %s2716 = smul.addr %s27, 2
          %s2717 = smul.addr %s2716, 128
          %s2718 = scalar_lea.hbm %s8, %s2717
          %s2719 = sshll.u32 %s2709, 4
          %s2720 = int_to_ptr.vmem [resolvable:$true] %s2719
          %2725 = dma.vmem_to_hbm [thread:$0]  %s2720, 256, %s2718, %s2706, 128, 128, 8
        $region76: #{tpu_custom_call.1} parent=51 // pred_fallthru
          _
      $region52: #{tpu_custom_call.1} parent=5 // pred_fallthru
        _
      %p2726 = scmp.le.s32.totalorder 2, %s22
      // Predicated region
      $region77: #{tpu_custom_call.1} parent=5 // pred_check
        %p2727 = pneg %p2726
      $region78: #{tpu_custom_call.1} parent=5 // pred_check_branch
        %2729 = sbr.rel (%p2727) target = $region80
      $region79: #{tpu_custom_call.1} parent=5 // pred_region
        %s2730 = ssub.s32 %s22, 2
        // Predicated region
        $region81: #{tpu_custom_call.1} parent=79 // pred_check
          %p2731 = pneg %p224
        $region82: #{tpu_custom_call.1} parent=79 // pred_check_branch
          %2733 = sbr.rel (%p2731) target = $region84
        $region83: #{tpu_custom_call.1} parent=79 // pred_region
          %s2734 = sand.u32 %s209, 1
          %s2735 = scalar_lea.sflag [#allocation4], %s2734
          %s2736 = sand.u32 %s209, 1
          %s2737 = smul.addr %s2736, 16
          %s2738 = scalar_lea.vmem [#allocation11], %s2737
          %2739 = dma.done %s2735, 256
        $region84: #{tpu_custom_call.1} parent=79 // pred_fallthru
          _
      $region80: #{tpu_custom_call.1} parent=5 // pred_fallthru
        _
    $region6: #{tpu_custom_call.1} parent=1 // loop_footer
      %s26 = sadd.s32 1, %s22
    $region7: #{tpu_custom_call.1} parent=1 // loop_footer_branch
      %21 = sbr.rel target = $region3
    $region8: #{tpu_custom_call.1} parent=1 // loop_exit
      _
    %2740 = vsyncpa [#allocation3], 1
    %s2741 = scalar_lea.sflag [#allocation3], 1
    %2742 = vsyncpa %s2741, 1
    %2743 = vsyncpa [#allocation6], 1
    %2744 = vsyncpa [#allocation9], 1
    %2745 = vsyncpa [#allocation4], 1
    %s2746 = scalar_lea.sflag [#allocation4], 1
    %2747 = vsyncpa %s2746, 1

</llo_original>
